<compile_context>
chip_gen: v6e
topology: v6e:2x2x1
jax: 0.10.0
libtpu: 0.0.40
codegen_flags: <defaults>
</compile_context>

<pallas_src>
import jax
import jax.numpy as jnp
from jax import lax
from jax.experimental import pallas as pl
from jax.experimental.pallas import tpu as pltpu


def _lstm_kernel(ids_ref, table_ref, whh_ref, wout_ref, bout_ref,
                 h0_ref, c0_ref,
                 y_ref, hn_ref, cn_ref,
                 xw_sc, h_all_sc):
    SB, Op = y_ref.shape           # S*B flattened tokens, padded output dim (128)
    B, Hp = h0_ref.shape           # batch, padded hidden (multiple of 128)
    S = SB // B

    # ---- Prologue: gather precomputed input projections (embedding + x@W_ih^T + b
    #      folded into `table` in the wrapper).  One dynamic-row VMEM load per token,
    #      token ids read as SMEM scalars.  Off the serial recurrence critical path.
    for i in range(SB):
        tok = ids_ref[i]
        xw_sc[pl.ds(i, 1), :] = table_ref[pl.ds(tok, 1), :]

    # ---- Sequential LSTM recurrence; h/c carried as f32 values; fully unrolled. ----
    def step(t, carry):
        h, c = carry
        start = pl.multiple_of(t * B, B)
        gates = xw_sc[pl.ds(start, B), :] + jnp.dot(
            h.astype(jnp.bfloat16), whh_ref[...],
            preferred_element_type=jnp.float32)                  # (B, 4Hp) f32
        # PyTorch gate order i, f, g, o; each slice is a full-128-lane slab.
        i_g = jax.nn.sigmoid(gates[:, 0:Hp])
        f_g = jax.nn.sigmoid(gates[:, Hp:2 * Hp])
        g_g = jnp.tanh(gates[:, 2 * Hp:3 * Hp])
        o_g = jax.nn.sigmoid(gates[:, 3 * Hp:4 * Hp])
        c_new = f_g * c + i_g * g_g
        h_new = o_g * jnp.tanh(c_new)
        # f32 store keeps this a tile-aligned unmasked vst (see header note).
        h_all_sc[pl.ds(start, B), :] = h_new
        return h_new, c_new

    h_fin, c_fin = lax.fori_loop(0, S, step, (h0_ref[...], c0_ref[...]),
                                 unroll=True)

    # ---- Final state written exactly once. ----
    hn_ref[...] = h_fin
    cn_ref[...] = c_fin

    # ---- Output projection + sigmoid for all timesteps in one dense pass.
    #      Op = 128 -> lane-dense unmasked writeback of the whole (S*B, 128) slab. ----
    h_all = h_all_sc[...].astype(jnp.bfloat16)                   # (S*B, Hp)
    y = jax.nn.sigmoid(
        jnp.dot(h_all, wout_ref[...], preferred_element_type=jnp.float32)
        + bout_ref[...])                                         # (S*B, Op) f32
    y_ref[...] = y.astype(y_ref.dtype)


def _round_up(n, m):
    return (n + m - 1) // m * m


@jax.jit
def rnn_forward(x, h0, c0, emb, w_ih, w_hh, b_ih, b_hh, w_out, b_out):
    """Forward pass equivalent to the PyTorch RNN module.

    x:  (S, B) int32 token ids;  h0, c0: (1, B, H) float32.
    Returns (y, (h_n, c_n)) with y: (S, B, O), h_n/c_n: (1, B, H).
    """
    S, B = x.shape
    H = w_hh.shape[1]
    O = w_out.shape[0]
    V = emb.shape[0]
    Hp = _round_up(H, 128)    # lane-align hidden/gate dim
    Op = _round_up(O, 128)    # lane-align output dim (dense writeback)
    Vp = _round_up(V, 8)      # sublane-align the gather table

    def pad_gate_rows(w):     # (4H, X) -> (4Hp, X); zero rows appended per gate block
        return jnp.pad(w.reshape(4, H, -1),
                       ((0, 0), (0, Hp - H), (0, 0))).reshape(4 * Hp, -1)

    def pad_gate_vec(v):      # (4H,) -> (4Hp,)
        return jnp.pad(v.reshape(4, H), ((0, 0), (0, Hp - H))).reshape(4 * Hp)

    # Fused per-token table: embedding lookup + x@W_ih^T + (b_ih+b_hh), f32, (Vp, 4Hp).
    # Padded gate columns are exactly 0 (zero W_ih rows, zero bias) so padded h/c lanes
    # provably stay 0 through the recurrence.
    b = pad_gate_vec(b_ih + b_hh).astype(jnp.float32)
    table = jnp.dot(emb.astype(jnp.float32),
                    pad_gate_rows(w_ih).T.astype(jnp.float32),
                    precision=lax.Precision.HIGHEST) + b                    # (V, 4Hp)
    table = jnp.pad(table, ((0, Vp - V), (0, 0)))

    # Pre-transposed, zero-padded, bf16 weights (MXU-friendly, lane-aligned).
    whh_t = jnp.pad(pad_gate_rows(w_hh),
                    ((0, 0), (0, Hp - H))).T.astype(jnp.bfloat16)           # (Hp, 4Hp)
    wout_t = jnp.pad(w_out, ((0, Op - O), (0, Hp - H))).T.astype(jnp.bfloat16)  # (Hp, Op)
    bo = jnp.pad(b_out, (0, Op - O)).reshape(1, Op).astype(jnp.float32)
    h0_p = jnp.pad(h0.reshape(B, H), ((0, 0), (0, Hp - H))).astype(jnp.float32)
    c0_p = jnp.pad(c0.reshape(B, H), ((0, 0), (0, Hp - H))).astype(jnp.float32)
    ids = x.reshape(S * B).astype(jnp.int32)

    vmem = pl.BlockSpec(memory_space=pltpu.MemorySpace.VMEM)
    smem = pl.BlockSpec(memory_space=pltpu.MemorySpace.SMEM)

    y2d, h_n, c_n = pl.pallas_call(
        _lstm_kernel,
        out_shape=(
            jax.ShapeDtypeStruct((S * B, Op), jnp.float32),   # lane-dense y slab
            jax.ShapeDtypeStruct((B, Hp), jnp.float32),
            jax.ShapeDtypeStruct((B, Hp), jnp.float32),
        ),
        in_specs=[smem, vmem, vmem, vmem, vmem, vmem, vmem],
        out_specs=(vmem, vmem, vmem),
        scratch_shapes=[
            pltpu.VMEM((S * B, 4 * Hp), jnp.float32),   # gathered input projections
            pltpu.VMEM((S * B, Hp), jnp.float32),       # all hidden states
        ],
        compiler_params=pltpu.CompilerParams(vmem_limit_bytes=32 * 1024 * 1024),
    )(ids, table, whh_t, wout_t, bo, h0_p, c0_p)

    y = y2d.reshape(S, B, Op)[:, :, :O]
    return y, (h_n[:, :H].reshape(1, B, H), c_n[:, :H].reshape(1, B, H))


def rnn_forward_ref(x, h0, c0, emb, w_ih, w_hh, b_ih, b_hh, w_out, b_out):
    """Pure-JAX f32 reference (lax.scan) matching PyTorch nn.LSTM semantics."""
    H = w_hh.shape[1]
    x_embed = jnp.take(emb, x, axis=0).astype(jnp.float32)

    def step(carry, x_t):
        h, c = carry
        gates = x_t @ w_ih.T + h @ w_hh.T + (b_ih + b_hh)
        i = jax.nn.sigmoid(gates[:, 0:H])
        f = jax.nn.sigmoid(gates[:, H:2 * H])
        g = jnp.tanh(gates[:, 2 * H:3 * H])
        o = jax.nn.sigmoid(gates[:, 3 * H:4 * H])
        c_new = f * c + i * g
        h_new = o * jnp.tanh(c_new)
        return (h_new, c_new), h_new

    (h_n, c_n), hs = lax.scan(step, (h0[0], c0[0]), x_embed)
    y = jax.nn.sigmoid(hs @ w_out.T + b_out)
    return y, (h_n[None], c_n[None])


if __name__ == "__main__":
    # Small shapes consistent with the module constants.
    input_dim = 50          # vocab size
    embedding_dim = 32
    lstm_dim = 64
    output_dim = 16
    batch = 8
    seq = 8

    key = jax.random.PRNGKey(0)
    ks = jax.random.split(key, 10)
    k_scale = 1.0 / jnp.sqrt(lstm_dim)

    emb = jax.random.normal(ks[0], (input_dim, embedding_dim), jnp.float32)
    w_ih = jax.random.uniform(ks[1], (4 * lstm_dim, embedding_dim), jnp.float32,
                              -k_scale, k_scale)
    w_hh = jax.random.uniform(ks[2], (4 * lstm_dim, lstm_dim), jnp.float32,
                              -k_scale, k_scale)
    b_ih = jax.random.uniform(ks[3], (4 * lstm_dim,), jnp.float32, -k_scale, k_scale)
    b_hh = jax.random.uniform(ks[4], (4 * lstm_dim,), jnp.float32, -k_scale, k_scale)
    w_out = jax.random.uniform(ks[5], (output_dim, lstm_dim), jnp.float32,
                               -k_scale, k_scale)
    b_out = jax.random.uniform(ks[6], (output_dim,), jnp.float32, -k_scale, k_scale)

    x = jax.random.randint(ks[7], (seq, batch), 0, input_dim, jnp.int32)
    h0 = jax.random.normal(ks[8], (1, batch, lstm_dim), jnp.float32) * 0.1
    c0 = jax.random.normal(ks[9], (1, batch, lstm_dim), jnp.float32) * 0.1

    y, (h_n, c_n) = rnn_forward(x, h0, c0, emb, w_ih, w_hh, b_ih, b_hh, w_out, b_out)
    jax.block_until_ready((y, h_n, c_n))

    y_ref, (h_ref, c_ref) = rnn_forward_ref(
        x, h0, c0, emb, w_ih, w_hh, b_ih, b_hh, w_out, b_out)
    assert y.shape == (seq, batch, output_dim)
    assert h_n.shape == (1, batch, lstm_dim) and c_n.shape == (1, batch, lstm_dim)
    # Tolerance accounts for bf16 MXU operands (f32 accumulation) vs the f32 reference.
    assert jnp.allclose(y, y_ref, atol=2e-2, rtol=2e-2)
    assert jnp.allclose(h_n, h_ref, atol=2e-2, rtol=2e-2)
    assert jnp.allclose(c_n, c_ref, atol=2e-2, rtol=2e-2)

    print("KERNEL_OK")
</pallas_src>

<mosaic_0001>
module attributes {stable_mosaic.version = 11 : i64} {
  func.func @_lstm_kernel(%arg0: memref<64xi32, #tpu.memory_space<smem>>, %arg1: memref<56x512xf32, #tpu.memory_space<vmem>>, %arg2: memref<128x512xbf16, #tpu.memory_space<vmem>>, %arg3: memref<128x128xbf16, #tpu.memory_space<vmem>>, %arg4: memref<1x128xf32, #tpu.memory_space<vmem>>, %arg5: memref<8x128xf32, #tpu.memory_space<vmem>>, %arg6: memref<8x128xf32, #tpu.memory_space<vmem>>, %arg7: memref<64x128xf32, #tpu.memory_space<vmem>>, %arg8: memref<8x128xf32, #tpu.memory_space<vmem>>, %arg9: memref<8x128xf32, #tpu.memory_space<vmem>>, %arg10: memref<64x512xf32, #tpu.memory_space<vmem>>, %arg11: memref<64x128xf32, #tpu.memory_space<vmem>>) attributes {dimension_semantics = [], scalar_prefetch = 0 : i64, scratch_operands = 2 : i64, tpu.core_type = #tpu.core_type<tc>} {
    %c0 = arith.constant 0 : index
    %0 = memref.load %arg0[%c0] : memref<64xi32, #tpu.memory_space<smem>>
    %1 = arith.index_cast %0 : i32 to index
    %c0_0 = arith.constant 0 : index
    %2 = vector.load %arg1[%1, %c0_0] : memref<56x512xf32, #tpu.memory_space<vmem>>, vector<1x512xf32>
    %c0_1 = arith.constant 0 : index
    %c0_2 = arith.constant 0 : index
    %3 = vector.load %arg10[%c0_1, %c0_2] : memref<64x512xf32, #tpu.memory_space<vmem>>, vector<1x512xf32>
    tpu.vector_store %arg10[%c0_1, %c0_2], %2 {strides = array<i32>} : memref<64x512xf32, #tpu.memory_space<vmem>>, vector<1x512xf32>,
    %c1 = arith.constant 1 : index
    %4 = memref.load %arg0[%c1] : memref<64xi32, #tpu.memory_space<smem>>
    %5 = arith.index_cast %4 : i32 to index
    %c0_3 = arith.constant 0 : index
    %6 = vector.load %arg1[%5, %c0_3] : memref<56x512xf32, #tpu.memory_space<vmem>>, vector<1x512xf32>
    %c1_4 = arith.constant 1 : index
    %c0_5 = arith.constant 0 : index
    %7 = vector.load %arg10[%c1_4, %c0_5] : memref<64x512xf32, #tpu.memory_space<vmem>>, vector<1x512xf32>
    tpu.vector_store %arg10[%c1_4, %c0_5], %6 {strides = array<i32>} : memref<64x512xf32, #tpu.memory_space<vmem>>, vector<1x512xf32>,
    %c2 = arith.constant 2 : index
    %8 = memref.load %arg0[%c2] : memref<64xi32, #tpu.memory_space<smem>>
    %9 = arith.index_cast %8 : i32 to index
    %c0_6 = arith.constant 0 : index
    %10 = vector.load %arg1[%9, %c0_6] : memref<56x512xf32, #tpu.memory_space<vmem>>, vector<1x512xf32>
    %c2_7 = arith.constant 2 : index
    %c0_8 = arith.constant 0 : index
    %11 = vector.load %arg10[%c2_7, %c0_8] : memref<64x512xf32, #tpu.memory_space<vmem>>, vector<1x512xf32>
    tpu.vector_store %arg10[%c2_7, %c0_8], %10 {strides = array<i32>} : memref<64x512xf32, #tpu.memory_space<vmem>>, vector<1x512xf32>,
    %c3 = arith.constant 3 : index
    %12 = memref.load %arg0[%c3] : memref<64xi32, #tpu.memory_space<smem>>
    %13 = arith.index_cast %12 : i32 to index
    %c0_9 = arith.constant 0 : index
    %14 = vector.load %arg1[%13, %c0_9] : memref<56x512xf32, #tpu.memory_space<vmem>>, vector<1x512xf32>
    %c3_10 = arith.constant 3 : index
    %c0_11 = arith.constant 0 : index
    %15 = vector.load %arg10[%c3_10, %c0_11] : memref<64x512xf32, #tpu.memory_space<vmem>>, vector<1x512xf32>
    tpu.vector_store %arg10[%c3_10, %c0_11], %14 {strides = array<i32>} : memref<64x512xf32, #tpu.memory_space<vmem>>, vector<1x512xf32>,
    %c4 = arith.constant 4 : index
    %16 = memref.load %arg0[%c4] : memref<64xi32, #tpu.memory_space<smem>>
    %17 = arith.index_cast %16 : i32 to index
    %c0_12 = arith.constant 0 : index
    %18 = vector.load %arg1[%17, %c0_12] : memref<56x512xf32, #tpu.memory_space<vmem>>, vector<1x512xf32>
    %c4_13 = arith.constant 4 : index
    %c0_14 = arith.constant 0 : index
    %19 = vector.load %arg10[%c4_13, %c0_14] : memref<64x512xf32, #tpu.memory_space<vmem>>, vector<1x512xf32>
    tpu.vector_store %arg10[%c4_13, %c0_14], %18 {strides = array<i32>} : memref<64x512xf32, #tpu.memory_space<vmem>>, vector<1x512xf32>,
    %c5 = arith.constant 5 : index
    %20 = memref.load %arg0[%c5] : memref<64xi32, #tpu.memory_space<smem>>
    %21 = arith.index_cast %20 : i32 to index
    %c0_15 = arith.constant 0 : index
    %22 = vector.load %arg1[%21, %c0_15] : memref<56x512xf32, #tpu.memory_space<vmem>>, vector<1x512xf32>
    %c5_16 = arith.constant 5 : index
    %c0_17 = arith.constant 0 : index
    %23 = vector.load %arg10[%c5_16, %c0_17] : memref<64x512xf32, #tpu.memory_space<vmem>>, vector<1x512xf32>
    tpu.vector_store %arg10[%c5_16, %c0_17], %22 {strides = array<i32>} : memref<64x512xf32, #tpu.memory_space<vmem>>, vector<1x512xf32>,
    %c6 = arith.constant 6 : index
    %24 = memref.load %arg0[%c6] : memref<64xi32, #tpu.memory_space<smem>>
    %25 = arith.index_cast %24 : i32 to index
    %c0_18 = arith.constant 0 : index
    %26 = vector.load %arg1[%25, %c0_18] : memref<56x512xf32, #tpu.memory_space<vmem>>, vector<1x512xf32>
    %c6_19 = arith.constant 6 : index
    %c0_20 = arith.constant 0 : index
    %27 = vector.load %arg10[%c6_19, %c0_20] : memref<64x512xf32, #tpu.memory_space<vmem>>, vector<1x512xf32>
    tpu.vector_store %arg10[%c6_19, %c0_20], %26 {strides = array<i32>} : memref<64x512xf32, #tpu.memory_space<vmem>>, vector<1x512xf32>,
    %c7 = arith.constant 7 : index
    %28 = memref.load %arg0[%c7] : memref<64xi32, #tpu.memory_space<smem>>
    %29 = arith.index_cast %28 : i32 to index
    %c0_21 = arith.constant 0 : index
    %30 = vector.load %arg1[%29, %c0_21] : memref<56x512xf32, #tpu.memory_space<vmem>>, vector<1x512xf32>
    %c7_22 = arith.constant 7 : index
    %c0_23 = arith.constant 0 : index
    %31 = vector.load %arg10[%c7_22, %c0_23] : memref<64x512xf32, #tpu.memory_space<vmem>>, vector<1x512xf32>
    tpu.vector_store %arg10[%c7_22, %c0_23], %30 {strides = array<i32>} : memref<64x512xf32, #tpu.memory_space<vmem>>, vector<1x512xf32>,
    %c8 = arith.constant 8 : index
    %32 = memref.load %arg0[%c8] : memref<64xi32, #tpu.memory_space<smem>>
    %33 = arith.index_cast %32 : i32 to index
    %c0_24 = arith.constant 0 : index
    %34 = vector.load %arg1[%33, %c0_24] : memref<56x512xf32, #tpu.memory_space<vmem>>, vector<1x512xf32>
    %c8_25 = arith.constant 8 : index
    %c0_26 = arith.constant 0 : index
    %35 = vector.load %arg10[%c8_25, %c0_26] : memref<64x512xf32, #tpu.memory_space<vmem>>, vector<1x512xf32>
    tpu.vector_store %arg10[%c8_25, %c0_26], %34 {strides = array<i32>} : memref<64x512xf32, #tpu.memory_space<vmem>>, vector<1x512xf32>,
    %c9 = arith.constant 9 : index
    %36 = memref.load %arg0[%c9] : memref<64xi32, #tpu.memory_space<smem>>
    %37 = arith.index_cast %36 : i32 to index
    %c0_27 = arith.constant 0 : index
    %38 = vector.load %arg1[%37, %c0_27] : memref<56x512xf32, #tpu.memory_space<vmem>>, vector<1x512xf32>
    %c9_28 = arith.constant 9 : index
    %c0_29 = arith.constant 0 : index
    %39 = vector.load %arg10[%c9_28, %c0_29] : memref<64x512xf32, #tpu.memory_space<vmem>>, vector<1x512xf32>
    tpu.vector_store %arg10[%c9_28, %c0_29], %38 {strides = array<i32>} : memref<64x512xf32, #tpu.memory_space<vmem>>, vector<1x512xf32>,
    %c10 = arith.constant 10 : index
    %40 = memref.load %arg0[%c10] : memref<64xi32, #tpu.memory_space<smem>>
    %41 = arith.index_cast %40 : i32 to index
    %c0_30 = arith.constant 0 : index
    %42 = vector.load %arg1[%41, %c0_30] : memref<56x512xf32, #tpu.memory_space<vmem>>, vector<1x512xf32>
    %c10_31 = arith.constant 10 : index
    %c0_32 = arith.constant 0 : index
    %43 = vector.load %arg10[%c10_31, %c0_32] : memref<64x512xf32, #tpu.memory_space<vmem>>, vector<1x512xf32>
    tpu.vector_store %arg10[%c10_31, %c0_32], %42 {strides = array<i32>} : memref<64x512xf32, #tpu.memory_space<vmem>>, vector<1x512xf32>,
    %c11 = arith.constant 11 : index
    %44 = memref.load %arg0[%c11] : memref<64xi32, #tpu.memory_space<smem>>
    %45 = arith.index_cast %44 : i32 to index
    %c0_33 = arith.constant 0 : index
    %46 = vector.load %arg1[%45, %c0_33] : memref<56x512xf32, #tpu.memory_space<vmem>>, vector<1x512xf32>
    %c11_34 = arith.constant 11 : index
    %c0_35 = arith.constant 0 : index
    %47 = vector.load %arg10[%c11_34, %c0_35] : memref<64x512xf32, #tpu.memory_space<vmem>>, vector<1x512xf32>
    tpu.vector_store %arg10[%c11_34, %c0_35], %46 {strides = array<i32>} : memref<64x512xf32, #tpu.memory_space<vmem>>, vector<1x512xf32>,
    %c12 = arith.constant 12 : index
    %48 = memref.load %arg0[%c12] : memref<64xi32, #tpu.memory_space<smem>>
    %49 = arith.index_cast %48 : i32 to index
    %c0_36 = arith.constant 0 : index
    %50 = vector.load %arg1[%49, %c0_36] : memref<56x512xf32, #tpu.memory_space<vmem>>, vector<1x512xf32>
    %c12_37 = arith.constant 12 : index
    %c0_38 = arith.constant 0 : index
    %51 = vector.load %arg10[%c12_37, %c0_38] : memref<64x512xf32, #tpu.memory_space<vmem>>, vector<1x512xf32>
    tpu.vector_store %arg10[%c12_37, %c0_38], %50 {strides = array<i32>} : memref<64x512xf32, #tpu.memory_space<vmem>>, vector<1x512xf32>,
    %c13 = arith.constant 13 : index
    %52 = memref.load %arg0[%c13] : memref<64xi32, #tpu.memory_space<smem>>
    %53 = arith.index_cast %52 : i32 to index
    %c0_39 = arith.constant 0 : index
    %54 = vector.load %arg1[%53, %c0_39] : memref<56x512xf32, #tpu.memory_space<vmem>>, vector<1x512xf32>
    %c13_40 = arith.constant 13 : index
    %c0_41 = arith.constant 0 : index
    %55 = vector.load %arg10[%c13_40, %c0_41] : memref<64x512xf32, #tpu.memory_space<vmem>>, vector<1x512xf32>
    tpu.vector_store %arg10[%c13_40, %c0_41], %54 {strides = array<i32>} : memref<64x512xf32, #tpu.memory_space<vmem>>, vector<1x512xf32>,
    %c14 = arith.constant 14 : index
    %56 = memref.load %arg0[%c14] : memref<64xi32, #tpu.memory_space<smem>>
    %57 = arith.index_cast %56 : i32 to index
    %c0_42 = arith.constant 0 : index
    %58 = vector.load %arg1[%57, %c0_42] : memref<56x512xf32, #tpu.memory_space<vmem>>, vector<1x512xf32>
    %c14_43 = arith.constant 14 : index
    %c0_44 = arith.constant 0 : index
    %59 = vector.load %arg10[%c14_43, %c0_44] : memref<64x512xf32, #tpu.memory_space<vmem>>, vector<1x512xf32>
    tpu.vector_store %arg10[%c14_43, %c0_44], %58 {strides = array<i32>} : memref<64x512xf32, #tpu.memory_space<vmem>>, vector<1x512xf32>,
    %c15 = arith.constant 15 : index
    %60 = memref.load %arg0[%c15] : memref<64xi32, #tpu.memory_space<smem>>
    %61 = arith.index_cast %60 : i32 to index
    %c0_45 = arith.constant 0 : index
    %62 = vector.load %arg1[%61, %c0_45] : memref<56x512xf32, #tpu.memory_space<vmem>>, vector<1x512xf32>
    %c15_46 = arith.constant 15 : index
    %c0_47 = arith.constant 0 : index
    %63 = vector.load %arg10[%c15_46, %c0_47] : memref<64x512xf32, #tpu.memory_space<vmem>>, vector<1x512xf32>
    tpu.vector_store %arg10[%c15_46, %c0_47], %62 {strides = array<i32>} : memref<64x512xf32, #tpu.memory_space<vmem>>, vector<1x512xf32>,
    %c16 = arith.constant 16 : index
    %64 = memref.load %arg0[%c16] : memref<64xi32, #tpu.memory_space<smem>>
    %65 = arith.index_cast %64 : i32 to index
    %c0_48 = arith.constant 0 : index
    %66 = vector.load %arg1[%65, %c0_48] : memref<56x512xf32, #tpu.memory_space<vmem>>, vector<1x512xf32>
    %c16_49 = arith.constant 16 : index
    %c0_50 = arith.constant 0 : index
    %67 = vector.load %arg10[%c16_49, %c0_50] : memref<64x512xf32, #tpu.memory_space<vmem>>, vector<1x512xf32>
    tpu.vector_store %arg10[%c16_49, %c0_50], %66 {strides = array<i32>} : memref<64x512xf32, #tpu.memory_space<vmem>>, vector<1x512xf32>,
    %c17 = arith.constant 17 : index
    %68 = memref.load %arg0[%c17] : memref<64xi32, #tpu.memory_space<smem>>
    %69 = arith.index_cast %68 : i32 to index
    %c0_51 = arith.constant 0 : index
    %70 = vector.load %arg1[%69, %c0_51] : memref<56x512xf32, #tpu.memory_space<vmem>>, vector<1x512xf32>
    %c17_52 = arith.constant 17 : index
    %c0_53 = arith.constant 0 : index
    %71 = vector.load %arg10[%c17_52, %c0_53] : memref<64x512xf32, #tpu.memory_space<vmem>>, vector<1x512xf32>
    tpu.vector_store %arg10[%c17_52, %c0_53], %70 {strides = array<i32>} : memref<64x512xf32, #tpu.memory_space<vmem>>, vector<1x512xf32>,
    %c18 = arith.constant 18 : index
    %72 = memref.load %arg0[%c18] : memref<64xi32, #tpu.memory_space<smem>>
    %73 = arith.index_cast %72 : i32 to index
    %c0_54 = arith.constant 0 : index
    %74 = vector.load %arg1[%73, %c0_54] : memref<56x512xf32, #tpu.memory_space<vmem>>, vector<1x512xf32>
    %c18_55 = arith.constant 18 : index
    %c0_56 = arith.constant 0 : index
    %75 = vector.load %arg10[%c18_55, %c0_56] : memref<64x512xf32, #tpu.memory_space<vmem>>, vector<1x512xf32>
    tpu.vector_store %arg10[%c18_55, %c0_56], %74 {strides = array<i32>} : memref<64x512xf32, #tpu.memory_space<vmem>>, vector<1x512xf32>,
    %c19 = arith.constant 19 : index
    %76 = memref.load %arg0[%c19] : memref<64xi32, #tpu.memory_space<smem>>
    %77 = arith.index_cast %76 : i32 to index
    %c0_57 = arith.constant 0 : index
    %78 = vector.load %arg1[%77, %c0_57] : memref<56x512xf32, #tpu.memory_space<vmem>>, vector<1x512xf32>
    %c19_58 = arith.constant 19 : index
    %c0_59 = arith.constant 0 : index
    %79 = vector.load %arg10[%c19_58, %c0_59] : memref<64x512xf32, #tpu.memory_space<vmem>>, vector<1x512xf32>
    tpu.vector_store %arg10[%c19_58, %c0_59], %78 {strides = array<i32>} : memref<64x512xf32, #tpu.memory_space<vmem>>, vector<1x512xf32>,
    %c20 = arith.constant 20 : index
    %80 = memref.load %arg0[%c20] : memref<64xi32, #tpu.memory_space<smem>>
    %81 = arith.index_cast %80 : i32 to index
    %c0_60 = arith.constant 0 : index
    %82 = vector.load %arg1[%81, %c0_60] : memref<56x512xf32, #tpu.memory_space<vmem>>, vector<1x512xf32>
    %c20_61 = arith.constant 20 : index
    %c0_62 = arith.constant 0 : index
    %83 = vector.load %arg10[%c20_61, %c0_62] : memref<64x512xf32, #tpu.memory_space<vmem>>, vector<1x512xf32>
    tpu.vector_store %arg10[%c20_61, %c0_62], %82 {strides = array<i32>} : memref<64x512xf32, #tpu.memory_space<vmem>>, vector<1x512xf32>,
    %c21 = arith.constant 21 : index
    %84 = memref.load %arg0[%c21] : memref<64xi32, #tpu.memory_space<smem>>
    %85 = arith.index_cast %84 : i32 to index
    %c0_63 = arith.constant 0 : index
    %86 = vector.load %arg1[%85, %c0_63] : memref<56x512xf32, #tpu.memory_space<vmem>>, vector<1x512xf32>
    %c21_64 = arith.constant 21 : index
    %c0_65 = arith.constant 0 : index
    %87 = vector.load %arg10[%c21_64, %c0_65] : memref<64x512xf32, #tpu.memory_space<vmem>>, vector<1x512xf32>
    tpu.vector_store %arg10[%c21_64, %c0_65], %86 {strides = array<i32>} : memref<64x512xf32, #tpu.memory_space<vmem>>, vector<1x512xf32>,
    %c22 = arith.constant 22 : index
    %88 = memref.load %arg0[%c22] : memref<64xi32, #tpu.memory_space<smem>>
    %89 = arith.index_cast %88 : i32 to index
    %c0_66 = arith.constant 0 : index
    %90 = vector.load %arg1[%89, %c0_66] : memref<56x512xf32, #tpu.memory_space<vmem>>, vector<1x512xf32>
    %c22_67 = arith.constant 22 : index
    %c0_68 = arith.constant 0 : index
    %91 = vector.load %arg10[%c22_67, %c0_68] : memref<64x512xf32, #tpu.memory_space<vmem>>, vector<1x512xf32>
    tpu.vector_store %arg10[%c22_67, %c0_68], %90 {strides = array<i32>} : memref<64x512xf32, #tpu.memory_space<vmem>>, vector<1x512xf32>,
    %c23 = arith.constant 23 : index
    %92 = memref.load %arg0[%c23] : memref<64xi32, #tpu.memory_space<smem>>
    %93 = arith.index_cast %92 : i32 to index
    %c0_69 = arith.constant 0 : index
    %94 = vector.load %arg1[%93, %c0_69] : memref<56x512xf32, #tpu.memory_space<vmem>>, vector<1x512xf32>
    %c23_70 = arith.constant 23 : index
    %c0_71 = arith.constant 0 : index
    %95 = vector.load %arg10[%c23_70, %c0_71] : memref<64x512xf32, #tpu.memory_space<vmem>>, vector<1x512xf32>
    tpu.vector_store %arg10[%c23_70, %c0_71], %94 {strides = array<i32>} : memref<64x512xf32, #tpu.memory_space<vmem>>, vector<1x512xf32>,
    %c24 = arith.constant 24 : index
    %96 = memref.load %arg0[%c24] : memref<64xi32, #tpu.memory_space<smem>>
    %97 = arith.index_cast %96 : i32 to index
    %c0_72 = arith.constant 0 : index
    %98 = vector.load %arg1[%97, %c0_72] : memref<56x512xf32, #tpu.memory_space<vmem>>, vector<1x512xf32>
    %c24_73 = arith.constant 24 : index
    %c0_74 = arith.constant 0 : index
    %99 = vector.load %arg10[%c24_73, %c0_74] : memref<64x512xf32, #tpu.memory_space<vmem>>, vector<1x512xf32>
    tpu.vector_store %arg10[%c24_73, %c0_74], %98 {strides = array<i32>} : memref<64x512xf32, #tpu.memory_space<vmem>>, vector<1x512xf32>,
    %c25 = arith.constant 25 : index
    %100 = memref.load %arg0[%c25] : memref<64xi32, #tpu.memory_space<smem>>
    %101 = arith.index_cast %100 : i32 to index
    %c0_75 = arith.constant 0 : index
    %102 = vector.load %arg1[%101, %c0_75] : memref<56x512xf32, #tpu.memory_space<vmem>>, vector<1x512xf32>
    %c25_76 = arith.constant 25 : index
    %c0_77 = arith.constant 0 : index
    %103 = vector.load %arg10[%c25_76, %c0_77] : memref<64x512xf32, #tpu.memory_space<vmem>>, vector<1x512xf32>
    tpu.vector_store %arg10[%c25_76, %c0_77], %102 {strides = array<i32>} : memref<64x512xf32, #tpu.memory_space<vmem>>, vector<1x512xf32>,
    %c26 = arith.constant 26 : index
    %104 = memref.load %arg0[%c26] : memref<64xi32, #tpu.memory_space<smem>>
    %105 = arith.index_cast %104 : i32 to index
    %c0_78 = arith.constant 0 : index
    %106 = vector.load %arg1[%105, %c0_78] : memref<56x512xf32, #tpu.memory_space<vmem>>, vector<1x512xf32>
    %c26_79 = arith.constant 26 : index
    %c0_80 = arith.constant 0 : index
    %107 = vector.load %arg10[%c26_79, %c0_80] : memref<64x512xf32, #tpu.memory_space<vmem>>, vector<1x512xf32>
    tpu.vector_store %arg10[%c26_79, %c0_80], %106 {strides = array<i32>} : memref<64x512xf32, #tpu.memory_space<vmem>>, vector<1x512xf32>,
    %c27 = arith.constant 27 : index
    %108 = memref.load %arg0[%c27] : memref<64xi32, #tpu.memory_space<smem>>
    %109 = arith.index_cast %108 : i32 to index
    %c0_81 = arith.constant 0 : index
    %110 = vector.load %arg1[%109, %c0_81] : memref<56x512xf32, #tpu.memory_space<vmem>>, vector<1x512xf32>
    %c27_82 = arith.constant 27 : index
    %c0_83 = arith.constant 0 : index
    %111 = vector.load %arg10[%c27_82, %c0_83] : memref<64x512xf32, #tpu.memory_space<vmem>>, vector<1x512xf32>
    tpu.vector_store %arg10[%c27_82, %c0_83], %110 {strides = array<i32>} : memref<64x512xf32, #tpu.memory_space<vmem>>, vector<1x512xf32>,
    %c28 = arith.constant 28 : index
    %112 = memref.load %arg0[%c28] : memref<64xi32, #tpu.memory_space<smem>>
    %113 = arith.index_cast %112 : i32 to index
    %c0_84 = arith.constant 0 : index
    %114 = vector.load %arg1[%113, %c0_84] : memref<56x512xf32, #tpu.memory_space<vmem>>, vector<1x512xf32>
    %c28_85 = arith.constant 28 : index
    %c0_86 = arith.constant 0 : index
    %115 = vector.load %arg10[%c28_85, %c0_86] : memref<64x512xf32, #tpu.memory_space<vmem>>, vector<1x512xf32>
    tpu.vector_store %arg10[%c28_85, %c0_86], %114 {strides = array<i32>} : memref<64x512xf32, #tpu.memory_space<vmem>>, vector<1x512xf32>,
    %c29 = arith.constant 29 : index
    %116 = memref.load %arg0[%c29] : memref<64xi32, #tpu.memory_space<smem>>
    %117 = arith.index_cast %116 : i32 to index
    %c0_87 = arith.constant 0 : index
    %118 = vector.load %arg1[%117, %c0_87] : memref<56x512xf32, #tpu.memory_space<vmem>>, vector<1x512xf32>
    %c29_88 = arith.constant 29 : index
    %c0_89 = arith.constant 0 : index
    %119 = vector.load %arg10[%c29_88, %c0_89] : memref<64x512xf32, #tpu.memory_space<vmem>>, vector<1x512xf32>
    tpu.vector_store %arg10[%c29_88, %c0_89], %118 {strides = array<i32>} : memref<64x512xf32, #tpu.memory_space<vmem>>, vector<1x512xf32>,
    %c30 = arith.constant 30 : index
    %120 = memref.load %arg0[%c30] : memref<64xi32, #tpu.memory_space<smem>>
    %121 = arith.index_cast %120 : i32 to index
    %c0_90 = arith.constant 0 : index
    %122 = vector.load %arg1[%121, %c0_90] : memref<56x512xf32, #tpu.memory_space<vmem>>, vector<1x512xf32>
    %c30_91 = arith.constant 30 : index
    %c0_92 = arith.constant 0 : index
    %123 = vector.load %arg10[%c30_91, %c0_92] : memref<64x512xf32, #tpu.memory_space<vmem>>, vector<1x512xf32>
    tpu.vector_store %arg10[%c30_91, %c0_92], %122 {strides = array<i32>} : memref<64x512xf32, #tpu.memory_space<vmem>>, vector<1x512xf32>,
    %c31 = arith.constant 31 : index
    %124 = memref.load %arg0[%c31] : memref<64xi32, #tpu.memory_space<smem>>
    %125 = arith.index_cast %124 : i32 to index
    %c0_93 = arith.constant 0 : index
    %126 = vector.load %arg1[%125, %c0_93] : memref<56x512xf32, #tpu.memory_space<vmem>>, vector<1x512xf32>
    %c31_94 = arith.constant 31 : index
    %c0_95 = arith.constant 0 : index
    %127 = vector.load %arg10[%c31_94, %c0_95] : memref<64x512xf32, #tpu.memory_space<vmem>>, vector<1x512xf32>
    tpu.vector_store %arg10[%c31_94, %c0_95], %126 {strides = array<i32>} : memref<64x512xf32, #tpu.memory_space<vmem>>, vector<1x512xf32>,
    %c32 = arith.constant 32 : index
    %128 = memref.load %arg0[%c32] : memref<64xi32, #tpu.memory_space<smem>>
    %129 = arith.index_cast %128 : i32 to index
    %c0_96 = arith.constant 0 : index
    %130 = vector.load %arg1[%129, %c0_96] : memref<56x512xf32, #tpu.memory_space<vmem>>, vector<1x512xf32>
    %c32_97 = arith.constant 32 : index
    %c0_98 = arith.constant 0 : index
    %131 = vector.load %arg10[%c32_97, %c0_98] : memref<64x512xf32, #tpu.memory_space<vmem>>, vector<1x512xf32>
    tpu.vector_store %arg10[%c32_97, %c0_98], %130 {strides = array<i32>} : memref<64x512xf32, #tpu.memory_space<vmem>>, vector<1x512xf32>,
    %c33 = arith.constant 33 : index
    %132 = memref.load %arg0[%c33] : memref<64xi32, #tpu.memory_space<smem>>
    %133 = arith.index_cast %132 : i32 to index
    %c0_99 = arith.constant 0 : index
    %134 = vector.load %arg1[%133, %c0_99] : memref<56x512xf32, #tpu.memory_space<vmem>>, vector<1x512xf32>
    %c33_100 = arith.constant 33 : index
    %c0_101 = arith.constant 0 : index
    %135 = vector.load %arg10[%c33_100, %c0_101] : memref<64x512xf32, #tpu.memory_space<vmem>>, vector<1x512xf32>
    tpu.vector_store %arg10[%c33_100, %c0_101], %134 {strides = array<i32>} : memref<64x512xf32, #tpu.memory_space<vmem>>, vector<1x512xf32>,
    %c34 = arith.constant 34 : index
    %136 = memref.load %arg0[%c34] : memref<64xi32, #tpu.memory_space<smem>>
    %137 = arith.index_cast %136 : i32 to index
    %c0_102 = arith.constant 0 : index
    %138 = vector.load %arg1[%137, %c0_102] : memref<56x512xf32, #tpu.memory_space<vmem>>, vector<1x512xf32>
    %c34_103 = arith.constant 34 : index
    %c0_104 = arith.constant 0 : index
    %139 = vector.load %arg10[%c34_103, %c0_104] : memref<64x512xf32, #tpu.memory_space<vmem>>, vector<1x512xf32>
    tpu.vector_store %arg10[%c34_103, %c0_104], %138 {strides = array<i32>} : memref<64x512xf32, #tpu.memory_space<vmem>>, vector<1x512xf32>,
    %c35 = arith.constant 35 : index
    %140 = memref.load %arg0[%c35] : memref<64xi32, #tpu.memory_space<smem>>
    %141 = arith.index_cast %140 : i32 to index
    %c0_105 = arith.constant 0 : index
    %142 = vector.load %arg1[%141, %c0_105] : memref<56x512xf32, #tpu.memory_space<vmem>>, vector<1x512xf32>
    %c35_106 = arith.constant 35 : index
    %c0_107 = arith.constant 0 : index
    %143 = vector.load %arg10[%c35_106, %c0_107] : memref<64x512xf32, #tpu.memory_space<vmem>>, vector<1x512xf32>
    tpu.vector_store %arg10[%c35_106, %c0_107], %142 {strides = array<i32>} : memref<64x512xf32, #tpu.memory_space<vmem>>, vector<1x512xf32>,
    %c36 = arith.constant 36 : index
    %144 = memref.load %arg0[%c36] : memref<64xi32, #tpu.memory_space<smem>>
    %145 = arith.index_cast %144 : i32 to index
    %c0_108 = arith.constant 0 : index
    %146 = vector.load %arg1[%145, %c0_108] : memref<56x512xf32, #tpu.memory_space<vmem>>, vector<1x512xf32>
    %c36_109 = arith.constant 36 : index
    %c0_110 = arith.constant 0 : index
    %147 = vector.load %arg10[%c36_109, %c0_110] : memref<64x512xf32, #tpu.memory_space<vmem>>, vector<1x512xf32>
    tpu.vector_store %arg10[%c36_109, %c0_110], %146 {strides = array<i32>} : memref<64x512xf32, #tpu.memory_space<vmem>>, vector<1x512xf32>,
    %c37 = arith.constant 37 : index
    %148 = memref.load %arg0[%c37] : memref<64xi32, #tpu.memory_space<smem>>
    %149 = arith.index_cast %148 : i32 to index
    %c0_111 = arith.constant 0 : index
    %150 = vector.load %arg1[%149, %c0_111] : memref<56x512xf32, #tpu.memory_space<vmem>>, vector<1x512xf32>
    %c37_112 = arith.constant 37 : index
    %c0_113 = arith.constant 0 : index
    %151 = vector.load %arg10[%c37_112, %c0_113] : memref<64x512xf32, #tpu.memory_space<vmem>>, vector<1x512xf32>
    tpu.vector_store %arg10[%c37_112, %c0_113], %150 {strides = array<i32>} : memref<64x512xf32, #tpu.memory_space<vmem>>, vector<1x512xf32>,
    %c38 = arith.constant 38 : index
    %152 = memref.load %arg0[%c38] : memref<64xi32, #tpu.memory_space<smem>>
    %153 = arith.index_cast %152 : i32 to index
    %c0_114 = arith.constant 0 : index
    %154 = vector.load %arg1[%153, %c0_114] : memref<56x512xf32, #tpu.memory_space<vmem>>, vector<1x512xf32>
    %c38_115 = arith.constant 38 : index
    %c0_116 = arith.constant 0 : index
    %155 = vector.load %arg10[%c38_115, %c0_116] : memref<64x512xf32, #tpu.memory_space<vmem>>, vector<1x512xf32>
    tpu.vector_store %arg10[%c38_115, %c0_116], %154 {strides = array<i32>} : memref<64x512xf32, #tpu.memory_space<vmem>>, vector<1x512xf32>,
    %c39 = arith.constant 39 : index
    %156 = memref.load %arg0[%c39] : memref<64xi32, #tpu.memory_space<smem>>
    %157 = arith.index_cast %156 : i32 to index
    %c0_117 = arith.constant 0 : index
    %158 = vector.load %arg1[%157, %c0_117] : memref<56x512xf32, #tpu.memory_space<vmem>>, vector<1x512xf32>
    %c39_118 = arith.constant 39 : index
    %c0_119 = arith.constant 0 : index
    %159 = vector.load %arg10[%c39_118, %c0_119] : memref<64x512xf32, #tpu.memory_space<vmem>>, vector<1x512xf32>
    tpu.vector_store %arg10[%c39_118, %c0_119], %158 {strides = array<i32>} : memref<64x512xf32, #tpu.memory_space<vmem>>, vector<1x512xf32>,
    %c40 = arith.constant 40 : index
    %160 = memref.load %arg0[%c40] : memref<64xi32, #tpu.memory_space<smem>>
    %161 = arith.index_cast %160 : i32 to index
    %c0_120 = arith.constant 0 : index
    %162 = vector.load %arg1[%161, %c0_120] : memref<56x512xf32, #tpu.memory_space<vmem>>, vector<1x512xf32>
    %c40_121 = arith.constant 40 : index
    %c0_122 = arith.constant 0 : index
    %163 = vector.load %arg10[%c40_121, %c0_122] : memref<64x512xf32, #tpu.memory_space<vmem>>, vector<1x512xf32>
    tpu.vector_store %arg10[%c40_121, %c0_122], %162 {strides = array<i32>} : memref<64x512xf32, #tpu.memory_space<vmem>>, vector<1x512xf32>,
    %c41 = arith.constant 41 : index
    %164 = memref.load %arg0[%c41] : memref<64xi32, #tpu.memory_space<smem>>
    %165 = arith.index_cast %164 : i32 to index
    %c0_123 = arith.constant 0 : index
    %166 = vector.load %arg1[%165, %c0_123] : memref<56x512xf32, #tpu.memory_space<vmem>>, vector<1x512xf32>
    %c41_124 = arith.constant 41 : index
    %c0_125 = arith.constant 0 : index
    %167 = vector.load %arg10[%c41_124, %c0_125] : memref<64x512xf32, #tpu.memory_space<vmem>>, vector<1x512xf32>
    tpu.vector_store %arg10[%c41_124, %c0_125], %166 {strides = array<i32>} : memref<64x512xf32, #tpu.memory_space<vmem>>, vector<1x512xf32>,
    %c42 = arith.constant 42 : index
    %168 = memref.load %arg0[%c42] : memref<64xi32, #tpu.memory_space<smem>>
    %169 = arith.index_cast %168 : i32 to index
    %c0_126 = arith.constant 0 : index
    %170 = vector.load %arg1[%169, %c0_126] : memref<56x512xf32, #tpu.memory_space<vmem>>, vector<1x512xf32>
    %c42_127 = arith.constant 42 : index
    %c0_128 = arith.constant 0 : index
    %171 = vector.load %arg10[%c42_127, %c0_128] : memref<64x512xf32, #tpu.memory_space<vmem>>, vector<1x512xf32>
    tpu.vector_store %arg10[%c42_127, %c0_128], %170 {strides = array<i32>} : memref<64x512xf32, #tpu.memory_space<vmem>>, vector<1x512xf32>,
    %c43 = arith.constant 43 : index
    %172 = memref.load %arg0[%c43] : memref<64xi32, #tpu.memory_space<smem>>
    %173 = arith.index_cast %172 : i32 to index
    %c0_129 = arith.constant 0 : index
    %174 = vector.load %arg1[%173, %c0_129] : memref<56x512xf32, #tpu.memory_space<vmem>>, vector<1x512xf32>
    %c43_130 = arith.constant 43 : index
    %c0_131 = arith.constant 0 : index
    %175 = vector.load %arg10[%c43_130, %c0_131] : memref<64x512xf32, #tpu.memory_space<vmem>>, vector<1x512xf32>
    tpu.vector_store %arg10[%c43_130, %c0_131], %174 {strides = array<i32>} : memref<64x512xf32, #tpu.memory_space<vmem>>, vector<1x512xf32>,
    %c44 = arith.constant 44 : index
    %176 = memref.load %arg0[%c44] : memref<64xi32, #tpu.memory_space<smem>>
    %177 = arith.index_cast %176 : i32 to index
    %c0_132 = arith.constant 0 : index
    %178 = vector.load %arg1[%177, %c0_132] : memref<56x512xf32, #tpu.memory_space<vmem>>, vector<1x512xf32>
    %c44_133 = arith.constant 44 : index
    %c0_134 = arith.constant 0 : index
    %179 = vector.load %arg10[%c44_133, %c0_134] : memref<64x512xf32, #tpu.memory_space<vmem>>, vector<1x512xf32>
    tpu.vector_store %arg10[%c44_133, %c0_134], %178 {strides = array<i32>} : memref<64x512xf32, #tpu.memory_space<vmem>>, vector<1x512xf32>,
    %c45 = arith.constant 45 : index
    %180 = memref.load %arg0[%c45] : memref<64xi32, #tpu.memory_space<smem>>
    %181 = arith.index_cast %180 : i32 to index
    %c0_135 = arith.constant 0 : index
    %182 = vector.load %arg1[%181, %c0_135] : memref<56x512xf32, #tpu.memory_space<vmem>>, vector<1x512xf32>
    %c45_136 = arith.constant 45 : index
    %c0_137 = arith.constant 0 : index
    %183 = vector.load %arg10[%c45_136, %c0_137] : memref<64x512xf32, #tpu.memory_space<vmem>>, vector<1x512xf32>
    tpu.vector_store %arg10[%c45_136, %c0_137], %182 {strides = array<i32>} : memref<64x512xf32, #tpu.memory_space<vmem>>, vector<1x512xf32>,
    %c46 = arith.constant 46 : index
    %184 = memref.load %arg0[%c46] : memref<64xi32, #tpu.memory_space<smem>>
    %185 = arith.index_cast %184 : i32 to index
    %c0_138 = arith.constant 0 : index
    %186 = vector.load %arg1[%185, %c0_138] : memref<56x512xf32, #tpu.memory_space<vmem>>, vector<1x512xf32>
    %c46_139 = arith.constant 46 : index
    %c0_140 = arith.constant 0 : index
    %187 = vector.load %arg10[%c46_139, %c0_140] : memref<64x512xf32, #tpu.memory_space<vmem>>, vector<1x512xf32>
    tpu.vector_store %arg10[%c46_139, %c0_140], %186 {strides = array<i32>} : memref<64x512xf32, #tpu.memory_space<vmem>>, vector<1x512xf32>,
    %c47 = arith.constant 47 : index
    %188 = memref.load %arg0[%c47] : memref<64xi32, #tpu.memory_space<smem>>
    %189 = arith.index_cast %188 : i32 to index
    %c0_141 = arith.constant 0 : index
    %190 = vector.load %arg1[%189, %c0_141] : memref<56x512xf32, #tpu.memory_space<vmem>>, vector<1x512xf32>
    %c47_142 = arith.constant 47 : index
    %c0_143 = arith.constant 0 : index
    %191 = vector.load %arg10[%c47_142, %c0_143] : memref<64x512xf32, #tpu.memory_space<vmem>>, vector<1x512xf32>
    tpu.vector_store %arg10[%c47_142, %c0_143], %190 {strides = array<i32>} : memref<64x512xf32, #tpu.memory_space<vmem>>, vector<1x512xf32>,
    %c48 = arith.constant 48 : index
    %192 = memref.load %arg0[%c48] : memref<64xi32, #tpu.memory_space<smem>>
    %193 = arith.index_cast %192 : i32 to index
    %c0_144 = arith.constant 0 : index
    %194 = vector.load %arg1[%193, %c0_144] : memref<56x512xf32, #tpu.memory_space<vmem>>, vector<1x512xf32>
    %c48_145 = arith.constant 48 : index
    %c0_146 = arith.constant 0 : index
    %195 = vector.load %arg10[%c48_145, %c0_146] : memref<64x512xf32, #tpu.memory_space<vmem>>, vector<1x512xf32>
    tpu.vector_store %arg10[%c48_145, %c0_146], %194 {strides = array<i32>} : memref<64x512xf32, #tpu.memory_space<vmem>>, vector<1x512xf32>,
    %c49 = arith.constant 49 : index
    %196 = memref.load %arg0[%c49] : memref<64xi32, #tpu.memory_space<smem>>
    %197 = arith.index_cast %196 : i32 to index
    %c0_147 = arith.constant 0 : index
    %198 = vector.load %arg1[%197, %c0_147] : memref<56x512xf32, #tpu.memory_space<vmem>>, vector<1x512xf32>
    %c49_148 = arith.constant 49 : index
    %c0_149 = arith.constant 0 : index
    %199 = vector.load %arg10[%c49_148, %c0_149] : memref<64x512xf32, #tpu.memory_space<vmem>>, vector<1x512xf32>
    tpu.vector_store %arg10[%c49_148, %c0_149], %198 {strides = array<i32>} : memref<64x512xf32, #tpu.memory_space<vmem>>, vector<1x512xf32>,
    %c50 = arith.constant 50 : index
    %200 = memref.load %arg0[%c50] : memref<64xi32, #tpu.memory_space<smem>>
    %201 = arith.index_cast %200 : i32 to index
    %c0_150 = arith.constant 0 : index
    %202 = vector.load %arg1[%201, %c0_150] : memref<56x512xf32, #tpu.memory_space<vmem>>, vector<1x512xf32>
    %c50_151 = arith.constant 50 : index
    %c0_152 = arith.constant 0 : index
    %203 = vector.load %arg10[%c50_151, %c0_152] : memref<64x512xf32, #tpu.memory_space<vmem>>, vector<1x512xf32>
    tpu.vector_store %arg10[%c50_151, %c0_152], %202 {strides = array<i32>} : memref<64x512xf32, #tpu.memory_space<vmem>>, vector<1x512xf32>,
    %c51 = arith.constant 51 : index
    %204 = memref.load %arg0[%c51] : memref<64xi32, #tpu.memory_space<smem>>
    %205 = arith.index_cast %204 : i32 to index
    %c0_153 = arith.constant 0 : index
    %206 = vector.load %arg1[%205, %c0_153] : memref<56x512xf32, #tpu.memory_space<vmem>>, vector<1x512xf32>
    %c51_154 = arith.constant 51 : index
    %c0_155 = arith.constant 0 : index
    %207 = vector.load %arg10[%c51_154, %c0_155] : memref<64x512xf32, #tpu.memory_space<vmem>>, vector<1x512xf32>
    tpu.vector_store %arg10[%c51_154, %c0_155], %206 {strides = array<i32>} : memref<64x512xf32, #tpu.memory_space<vmem>>, vector<1x512xf32>,
    %c52 = arith.constant 52 : index
    %208 = memref.load %arg0[%c52] : memref<64xi32, #tpu.memory_space<smem>>
    %209 = arith.index_cast %208 : i32 to index
    %c0_156 = arith.constant 0 : index
    %210 = vector.load %arg1[%209, %c0_156] : memref<56x512xf32, #tpu.memory_space<vmem>>, vector<1x512xf32>
    %c52_157 = arith.constant 52 : index
    %c0_158 = arith.constant 0 : index
    %211 = vector.load %arg10[%c52_157, %c0_158] : memref<64x512xf32, #tpu.memory_space<vmem>>, vector<1x512xf32>
    tpu.vector_store %arg10[%c52_157, %c0_158], %210 {strides = array<i32>} : memref<64x512xf32, #tpu.memory_space<vmem>>, vector<1x512xf32>,
    %c53 = arith.constant 53 : index
    %212 = memref.load %arg0[%c53] : memref<64xi32, #tpu.memory_space<smem>>
    %213 = arith.index_cast %212 : i32 to index
    %c0_159 = arith.constant 0 : index
    %214 = vector.load %arg1[%213, %c0_159] : memref<56x512xf32, #tpu.memory_space<vmem>>, vector<1x512xf32>
    %c53_160 = arith.constant 53 : index
    %c0_161 = arith.constant 0 : index
    %215 = vector.load %arg10[%c53_160, %c0_161] : memref<64x512xf32, #tpu.memory_space<vmem>>, vector<1x512xf32>
    tpu.vector_store %arg10[%c53_160, %c0_161], %214 {strides = array<i32>} : memref<64x512xf32, #tpu.memory_space<vmem>>, vector<1x512xf32>,
    %c54 = arith.constant 54 : index
    %216 = memref.load %arg0[%c54] : memref<64xi32, #tpu.memory_space<smem>>
    %217 = arith.index_cast %216 : i32 to index
    %c0_162 = arith.constant 0 : index
    %218 = vector.load %arg1[%217, %c0_162] : memref<56x512xf32, #tpu.memory_space<vmem>>, vector<1x512xf32>
    %c54_163 = arith.constant 54 : index
    %c0_164 = arith.constant 0 : index
    %219 = vector.load %arg10[%c54_163, %c0_164] : memref<64x512xf32, #tpu.memory_space<vmem>>, vector<1x512xf32>
    tpu.vector_store %arg10[%c54_163, %c0_164], %218 {strides = array<i32>} : memref<64x512xf32, #tpu.memory_space<vmem>>, vector<1x512xf32>,
    %c55 = arith.constant 55 : index
    %220 = memref.load %arg0[%c55] : memref<64xi32, #tpu.memory_space<smem>>
    %221 = arith.index_cast %220 : i32 to index
    %c0_165 = arith.constant 0 : index
    %222 = vector.load %arg1[%221, %c0_165] : memref<56x512xf32, #tpu.memory_space<vmem>>, vector<1x512xf32>
    %c55_166 = arith.constant 55 : index
    %c0_167 = arith.constant 0 : index
    %223 = vector.load %arg10[%c55_166, %c0_167] : memref<64x512xf32, #tpu.memory_space<vmem>>, vector<1x512xf32>
    tpu.vector_store %arg10[%c55_166, %c0_167], %222 {strides = array<i32>} : memref<64x512xf32, #tpu.memory_space<vmem>>, vector<1x512xf32>,
    %c56 = arith.constant 56 : index
    %224 = memref.load %arg0[%c56] : memref<64xi32, #tpu.memory_space<smem>>
    %225 = arith.index_cast %224 : i32 to index
    %c0_168 = arith.constant 0 : index
    %226 = vector.load %arg1[%225, %c0_168] : memref<56x512xf32, #tpu.memory_space<vmem>>, vector<1x512xf32>
    %c56_169 = arith.constant 56 : index
    %c0_170 = arith.constant 0 : index
    %227 = vector.load %arg10[%c56_169, %c0_170] : memref<64x512xf32, #tpu.memory_space<vmem>>, vector<1x512xf32>
    tpu.vector_store %arg10[%c56_169, %c0_170], %226 {strides = array<i32>} : memref<64x512xf32, #tpu.memory_space<vmem>>, vector<1x512xf32>,
    %c57 = arith.constant 57 : index
    %228 = memref.load %arg0[%c57] : memref<64xi32, #tpu.memory_space<smem>>
    %229 = arith.index_cast %228 : i32 to index
    %c0_171 = arith.constant 0 : index
    %230 = vector.load %arg1[%229, %c0_171] : memref<56x512xf32, #tpu.memory_space<vmem>>, vector<1x512xf32>
    %c57_172 = arith.constant 57 : index
    %c0_173 = arith.constant 0 : index
    %231 = vector.load %arg10[%c57_172, %c0_173] : memref<64x512xf32, #tpu.memory_space<vmem>>, vector<1x512xf32>
    tpu.vector_store %arg10[%c57_172, %c0_173], %230 {strides = array<i32>} : memref<64x512xf32, #tpu.memory_space<vmem>>, vector<1x512xf32>,
    %c58 = arith.constant 58 : index
    %232 = memref.load %arg0[%c58] : memref<64xi32, #tpu.memory_space<smem>>
    %233 = arith.index_cast %232 : i32 to index
    %c0_174 = arith.constant 0 : index
    %234 = vector.load %arg1[%233, %c0_174] : memref<56x512xf32, #tpu.memory_space<vmem>>, vector<1x512xf32>
    %c58_175 = arith.constant 58 : index
    %c0_176 = arith.constant 0 : index
    %235 = vector.load %arg10[%c58_175, %c0_176] : memref<64x512xf32, #tpu.memory_space<vmem>>, vector<1x512xf32>
    tpu.vector_store %arg10[%c58_175, %c0_176], %234 {strides = array<i32>} : memref<64x512xf32, #tpu.memory_space<vmem>>, vector<1x512xf32>,
    %c59 = arith.constant 59 : index
    %236 = memref.load %arg0[%c59] : memref<64xi32, #tpu.memory_space<smem>>
    %237 = arith.index_cast %236 : i32 to index
    %c0_177 = arith.constant 0 : index
    %238 = vector.load %arg1[%237, %c0_177] : memref<56x512xf32, #tpu.memory_space<vmem>>, vector<1x512xf32>
    %c59_178 = arith.constant 59 : index
    %c0_179 = arith.constant 0 : index
    %239 = vector.load %arg10[%c59_178, %c0_179] : memref<64x512xf32, #tpu.memory_space<vmem>>, vector<1x512xf32>
    tpu.vector_store %arg10[%c59_178, %c0_179], %238 {strides = array<i32>} : memref<64x512xf32, #tpu.memory_space<vmem>>, vector<1x512xf32>,
    %c60 = arith.constant 60 : index
    %240 = memref.load %arg0[%c60] : memref<64xi32, #tpu.memory_space<smem>>
    %241 = arith.index_cast %240 : i32 to index
    %c0_180 = arith.constant 0 : index
    %242 = vector.load %arg1[%241, %c0_180] : memref<56x512xf32, #tpu.memory_space<vmem>>, vector<1x512xf32>
    %c60_181 = arith.constant 60 : index
    %c0_182 = arith.constant 0 : index
    %243 = vector.load %arg10[%c60_181, %c0_182] : memref<64x512xf32, #tpu.memory_space<vmem>>, vector<1x512xf32>
    tpu.vector_store %arg10[%c60_181, %c0_182], %242 {strides = array<i32>} : memref<64x512xf32, #tpu.memory_space<vmem>>, vector<1x512xf32>,
    %c61 = arith.constant 61 : index
    %244 = memref.load %arg0[%c61] : memref<64xi32, #tpu.memory_space<smem>>
    %245 = arith.index_cast %244 : i32 to index
    %c0_183 = arith.constant 0 : index
    %246 = vector.load %arg1[%245, %c0_183] : memref<56x512xf32, #tpu.memory_space<vmem>>, vector<1x512xf32>
    %c61_184 = arith.constant 61 : index
    %c0_185 = arith.constant 0 : index
    %247 = vector.load %arg10[%c61_184, %c0_185] : memref<64x512xf32, #tpu.memory_space<vmem>>, vector<1x512xf32>
    tpu.vector_store %arg10[%c61_184, %c0_185], %246 {strides = array<i32>} : memref<64x512xf32, #tpu.memory_space<vmem>>, vector<1x512xf32>,
    %c62 = arith.constant 62 : index
    %248 = memref.load %arg0[%c62] : memref<64xi32, #tpu.memory_space<smem>>
    %249 = arith.index_cast %248 : i32 to index
    %c0_186 = arith.constant 0 : index
    %250 = vector.load %arg1[%249, %c0_186] : memref<56x512xf32, #tpu.memory_space<vmem>>, vector<1x512xf32>
    %c62_187 = arith.constant 62 : index
    %c0_188 = arith.constant 0 : index
    %251 = vector.load %arg10[%c62_187, %c0_188] : memref<64x512xf32, #tpu.memory_space<vmem>>, vector<1x512xf32>
    tpu.vector_store %arg10[%c62_187, %c0_188], %250 {strides = array<i32>} : memref<64x512xf32, #tpu.memory_space<vmem>>, vector<1x512xf32>,
    %c63 = arith.constant 63 : index
    %252 = memref.load %arg0[%c63] : memref<64xi32, #tpu.memory_space<smem>>
    %253 = arith.index_cast %252 : i32 to index
    %c0_189 = arith.constant 0 : index
    %254 = vector.load %arg1[%253, %c0_189] : memref<56x512xf32, #tpu.memory_space<vmem>>, vector<1x512xf32>
    %c63_190 = arith.constant 63 : index
    %c0_191 = arith.constant 0 : index
    %255 = vector.load %arg10[%c63_190, %c0_191] : memref<64x512xf32, #tpu.memory_space<vmem>>, vector<1x512xf32>
    tpu.vector_store %arg10[%c63_190, %c0_191], %254 {strides = array<i32>} : memref<64x512xf32, #tpu.memory_space<vmem>>, vector<1x512xf32>,
    %c0_192 = arith.constant 0 : index
    %c0_193 = arith.constant 0 : index
    %256 = vector.load %arg5[%c0_192, %c0_193] : memref<8x128xf32, #tpu.memory_space<vmem>>, vector<8x128xf32>
    %c0_194 = arith.constant 0 : index
    %c0_195 = arith.constant 0 : index
    %257 = vector.load %arg6[%c0_194, %c0_195] : memref<8x128xf32, #tpu.memory_space<vmem>>, vector<8x128xf32>
    %c0_i32 = arith.constant 0 : i32
    %c8_i32 = arith.constant 8 : i32
    %258 = arith.muli %c0_i32, %c8_i32 : i32
    %259 = tpu.assume_multiple %258, 8 : i32
    %260 = arith.index_cast %259 : i32 to index
    %c0_196 = arith.constant 0 : index
    %261 = vector.load %arg10[%260, %c0_196] : memref<64x512xf32, #tpu.memory_space<vmem>>, vector<8x512xf32>
    %262 = arith.truncf %256 : vector<8x128xf32> to vector<8x128xbf16>
    %c0_197 = arith.constant 0 : index
    %c0_198 = arith.constant 0 : index
    %263 = vector.load %arg2[%c0_197, %c0_198] : memref<128x512xbf16, #tpu.memory_space<vmem>>, vector<128x512xbf16>
    %cst = arith.constant dense<0.000000e+00> : vector<8x512xf32>
    %264 = tpu.matmul %262, %263, %cst {dimension_numbers = #tpu.dot_dimension_numbers<[1], [0], [0], [1], [0, 0, 1, 1], [], []>} : vector<8x128xbf16>, vector<128x512xbf16>, vector<8x512xf32> -> vector<8x512xf32>
    %265 = arith.addf %261, %264 : vector<8x512xf32>
    %266 = vector.extract_strided_slice %265 {offsets = [0, 0], sizes = [8, 128], strides = [1, 1]} : vector<8x512xf32> to vector<8x128xf32>
    %267 = arith.negf %266 : vector<8x128xf32>
    %268 = math.exp %267 : vector<8x128xf32>
    %cst_199 = arith.constant 1.000000e+00 : f32
    %269 = vector.broadcast %cst_199 : f32 to vector<8x128xf32>
    %270 = arith.addf %269, %268 : vector<8x128xf32>
    %271 = arith.divf %269, %270 : vector<8x128xf32>
    %272 = vector.extract_strided_slice %265 {offsets = [0, 128], sizes = [8, 128], strides = [1, 1]} : vector<8x512xf32> to vector<8x128xf32>
    %273 = arith.negf %272 : vector<8x128xf32>
    %274 = math.exp %273 : vector<8x128xf32>
    %cst_200 = arith.constant 1.000000e+00 : f32
    %275 = vector.broadcast %cst_200 : f32 to vector<8x128xf32>
    %276 = arith.addf %275, %274 : vector<8x128xf32>
    %277 = arith.divf %275, %276 : vector<8x128xf32>
    %278 = vector.extract_strided_slice %265 {offsets = [0, 256], sizes = [8, 128], strides = [1, 1]} : vector<8x512xf32> to vector<8x128xf32>
    %279 = math.tanh %278 : vector<8x128xf32>
    %280 = vector.extract_strided_slice %265 {offsets = [0, 384], sizes = [8, 128], strides = [1, 1]} : vector<8x512xf32> to vector<8x128xf32>
    %281 = arith.negf %280 : vector<8x128xf32>
    %282 = math.exp %281 : vector<8x128xf32>
    %cst_201 = arith.constant 1.000000e+00 : f32
    %283 = vector.broadcast %cst_201 : f32 to vector<8x128xf32>
    %284 = arith.addf %283, %282 : vector<8x128xf32>
    %285 = arith.divf %283, %284 : vector<8x128xf32>
    %286 = arith.mulf %277, %257 : vector<8x128xf32>
    %287 = arith.mulf %271, %279 : vector<8x128xf32>
    %288 = arith.addf %286, %287 : vector<8x128xf32>
    %289 = math.tanh %288 : vector<8x128xf32>
    %290 = arith.mulf %285, %289 : vector<8x128xf32>
    %291 = arith.index_cast %259 : i32 to index
    %c0_202 = arith.constant 0 : index
    %292 = vector.load %arg11[%291, %c0_202] : memref<64x128xf32, #tpu.memory_space<vmem>>, vector<8x128xf32>
    tpu.vector_store %arg11[%291, %c0_202], %290 {strides = array<i32>} : memref<64x128xf32, #tpu.memory_space<vmem>>, vector<8x128xf32>,
    %c1_i32 = arith.constant 1 : i32
    %c8_i32_203 = arith.constant 8 : i32
    %293 = arith.muli %c1_i32, %c8_i32_203 : i32
    %294 = tpu.assume_multiple %293, 8 : i32
    %295 = arith.index_cast %294 : i32 to index
    %c0_204 = arith.constant 0 : index
    %296 = vector.load %arg10[%295, %c0_204] : memref<64x512xf32, #tpu.memory_space<vmem>>, vector<8x512xf32>
    %297 = arith.truncf %290 : vector<8x128xf32> to vector<8x128xbf16>
    %c0_205 = arith.constant 0 : index
    %c0_206 = arith.constant 0 : index
    %298 = vector.load %arg2[%c0_205, %c0_206] : memref<128x512xbf16, #tpu.memory_space<vmem>>, vector<128x512xbf16>
    %cst_207 = arith.constant dense<0.000000e+00> : vector<8x512xf32>
    %299 = tpu.matmul %297, %298, %cst_207 {dimension_numbers = #tpu.dot_dimension_numbers<[1], [0], [0], [1], [0, 0, 1, 1], [], []>} : vector<8x128xbf16>, vector<128x512xbf16>, vector<8x512xf32> -> vector<8x512xf32>
    %300 = arith.addf %296, %299 : vector<8x512xf32>
    %301 = vector.extract_strided_slice %300 {offsets = [0, 0], sizes = [8, 128], strides = [1, 1]} : vector<8x512xf32> to vector<8x128xf32>
    %302 = arith.negf %301 : vector<8x128xf32>
    %303 = math.exp %302 : vector<8x128xf32>
    %cst_208 = arith.constant 1.000000e+00 : f32
    %304 = vector.broadcast %cst_208 : f32 to vector<8x128xf32>
    %305 = arith.addf %304, %303 : vector<8x128xf32>
    %306 = arith.divf %304, %305 : vector<8x128xf32>
    %307 = vector.extract_strided_slice %300 {offsets = [0, 128], sizes = [8, 128], strides = [1, 1]} : vector<8x512xf32> to vector<8x128xf32>
    %308 = arith.negf %307 : vector<8x128xf32>
    %309 = math.exp %308 : vector<8x128xf32>
    %cst_209 = arith.constant 1.000000e+00 : f32
    %310 = vector.broadcast %cst_209 : f32 to vector<8x128xf32>
    %311 = arith.addf %310, %309 : vector<8x128xf32>
    %312 = arith.divf %310, %311 : vector<8x128xf32>
    %313 = vector.extract_strided_slice %300 {offsets = [0, 256], sizes = [8, 128], strides = [1, 1]} : vector<8x512xf32> to vector<8x128xf32>
    %314 = math.tanh %313 : vector<8x128xf32>
    %315 = vector.extract_strided_slice %300 {offsets = [0, 384], sizes = [8, 128], strides = [1, 1]} : vector<8x512xf32> to vector<8x128xf32>
    %316 = arith.negf %315 : vector<8x128xf32>
    %317 = math.exp %316 : vector<8x128xf32>
    %cst_210 = arith.constant 1.000000e+00 : f32
    %318 = vector.broadcast %cst_210 : f32 to vector<8x128xf32>
    %319 = arith.addf %318, %317 : vector<8x128xf32>
    %320 = arith.divf %318, %319 : vector<8x128xf32>
    %321 = arith.mulf %312, %288 : vector<8x128xf32>
    %322 = arith.mulf %306, %314 : vector<8x128xf32>
    %323 = arith.addf %321, %322 : vector<8x128xf32>
    %324 = math.tanh %323 : vector<8x128xf32>
    %325 = arith.mulf %320, %324 : vector<8x128xf32>
    %326 = arith.index_cast %294 : i32 to index
    %c0_211 = arith.constant 0 : index
    %327 = vector.load %arg11[%326, %c0_211] : memref<64x128xf32, #tpu.memory_space<vmem>>, vector<8x128xf32>
    tpu.vector_store %arg11[%326, %c0_211], %325 {strides = array<i32>} : memref<64x128xf32, #tpu.memory_space<vmem>>, vector<8x128xf32>,
    %c2_i32 = arith.constant 2 : i32
    %c8_i32_212 = arith.constant 8 : i32
    %328 = arith.muli %c2_i32, %c8_i32_212 : i32
    %329 = tpu.assume_multiple %328, 8 : i32
    %330 = arith.index_cast %329 : i32 to index
    %c0_213 = arith.constant 0 : index
    %331 = vector.load %arg10[%330, %c0_213] : memref<64x512xf32, #tpu.memory_space<vmem>>, vector<8x512xf32>
    %332 = arith.truncf %325 : vector<8x128xf32> to vector<8x128xbf16>
    %c0_214 = arith.constant 0 : index
    %c0_215 = arith.constant 0 : index
    %333 = vector.load %arg2[%c0_214, %c0_215] : memref<128x512xbf16, #tpu.memory_space<vmem>>, vector<128x512xbf16>
    %cst_216 = arith.constant dense<0.000000e+00> : vector<8x512xf32>
    %334 = tpu.matmul %332, %333, %cst_216 {dimension_numbers = #tpu.dot_dimension_numbers<[1], [0], [0], [1], [0, 0, 1, 1], [], []>} : vector<8x128xbf16>, vector<128x512xbf16>, vector<8x512xf32> -> vector<8x512xf32>
    %335 = arith.addf %331, %334 : vector<8x512xf32>
    %336 = vector.extract_strided_slice %335 {offsets = [0, 0], sizes = [8, 128], strides = [1, 1]} : vector<8x512xf32> to vector<8x128xf32>
    %337 = arith.negf %336 : vector<8x128xf32>
    %338 = math.exp %337 : vector<8x128xf32>
    %cst_217 = arith.constant 1.000000e+00 : f32
    %339 = vector.broadcast %cst_217 : f32 to vector<8x128xf32>
    %340 = arith.addf %339, %338 : vector<8x128xf32>
    %341 = arith.divf %339, %340 : vector<8x128xf32>
    %342 = vector.extract_strided_slice %335 {offsets = [0, 128], sizes = [8, 128], strides = [1, 1]} : vector<8x512xf32> to vector<8x128xf32>
    %343 = arith.negf %342 : vector<8x128xf32>
    %344 = math.exp %343 : vector<8x128xf32>
    %cst_218 = arith.constant 1.000000e+00 : f32
    %345 = vector.broadcast %cst_218 : f32 to vector<8x128xf32>
    %346 = arith.addf %345, %344 : vector<8x128xf32>
    %347 = arith.divf %345, %346 : vector<8x128xf32>
    %348 = vector.extract_strided_slice %335 {offsets = [0, 256], sizes = [8, 128], strides = [1, 1]} : vector<8x512xf32> to vector<8x128xf32>
    %349 = math.tanh %348 : vector<8x128xf32>
    %350 = vector.extract_strided_slice %335 {offsets = [0, 384], sizes = [8, 128], strides = [1, 1]} : vector<8x512xf32> to vector<8x128xf32>
    %351 = arith.negf %350 : vector<8x128xf32>
    %352 = math.exp %351 : vector<8x128xf32>
    %cst_219 = arith.constant 1.000000e+00 : f32
    %353 = vector.broadcast %cst_219 : f32 to vector<8x128xf32>
    %354 = arith.addf %353, %352 : vector<8x128xf32>
    %355 = arith.divf %353, %354 : vector<8x128xf32>
    %356 = arith.mulf %347, %323 : vector<8x128xf32>
    %357 = arith.mulf %341, %349 : vector<8x128xf32>
    %358 = arith.addf %356, %357 : vector<8x128xf32>
    %359 = math.tanh %358 : vector<8x128xf32>
    %360 = arith.mulf %355, %359 : vector<8x128xf32>
    %361 = arith.index_cast %329 : i32 to index
    %c0_220 = arith.constant 0 : index
    %362 = vector.load %arg11[%361, %c0_220] : memref<64x128xf32, #tpu.memory_space<vmem>>, vector<8x128xf32>
    tpu.vector_store %arg11[%361, %c0_220], %360 {strides = array<i32>} : memref<64x128xf32, #tpu.memory_space<vmem>>, vector<8x128xf32>,
    %c3_i32 = arith.constant 3 : i32
    %c8_i32_221 = arith.constant 8 : i32
    %363 = arith.muli %c3_i32, %c8_i32_221 : i32
    %364 = tpu.assume_multiple %363, 8 : i32
    %365 = arith.index_cast %364 : i32 to index
    %c0_222 = arith.constant 0 : index
    %366 = vector.load %arg10[%365, %c0_222] : memref<64x512xf32, #tpu.memory_space<vmem>>, vector<8x512xf32>
    %367 = arith.truncf %360 : vector<8x128xf32> to vector<8x128xbf16>
    %c0_223 = arith.constant 0 : index
    %c0_224 = arith.constant 0 : index
    %368 = vector.load %arg2[%c0_223, %c0_224] : memref<128x512xbf16, #tpu.memory_space<vmem>>, vector<128x512xbf16>
    %cst_225 = arith.constant dense<0.000000e+00> : vector<8x512xf32>
    %369 = tpu.matmul %367, %368, %cst_225 {dimension_numbers = #tpu.dot_dimension_numbers<[1], [0], [0], [1], [0, 0, 1, 1], [], []>} : vector<8x128xbf16>, vector<128x512xbf16>, vector<8x512xf32> -> vector<8x512xf32>
    %370 = arith.addf %366, %369 : vector<8x512xf32>
    %371 = vector.extract_strided_slice %370 {offsets = [0, 0], sizes = [8, 128], strides = [1, 1]} : vector<8x512xf32> to vector<8x128xf32>
    %372 = arith.negf %371 : vector<8x128xf32>
    %373 = math.exp %372 : vector<8x128xf32>
    %cst_226 = arith.constant 1.000000e+00 : f32
    %374 = vector.broadcast %cst_226 : f32 to vector<8x128xf32>
    %375 = arith.addf %374, %373 : vector<8x128xf32>
    %376 = arith.divf %374, %375 : vector<8x128xf32>
    %377 = vector.extract_strided_slice %370 {offsets = [0, 128], sizes = [8, 128], strides = [1, 1]} : vector<8x512xf32> to vector<8x128xf32>
    %378 = arith.negf %377 : vector<8x128xf32>
    %379 = math.exp %378 : vector<8x128xf32>
    %cst_227 = arith.constant 1.000000e+00 : f32
    %380 = vector.broadcast %cst_227 : f32 to vector<8x128xf32>
    %381 = arith.addf %380, %379 : vector<8x128xf32>
    %382 = arith.divf %380, %381 : vector<8x128xf32>
    %383 = vector.extract_strided_slice %370 {offsets = [0, 256], sizes = [8, 128], strides = [1, 1]} : vector<8x512xf32> to vector<8x128xf32>
    %384 = math.tanh %383 : vector<8x128xf32>
    %385 = vector.extract_strided_slice %370 {offsets = [0, 384], sizes = [8, 128], strides = [1, 1]} : vector<8x512xf32> to vector<8x128xf32>
    %386 = arith.negf %385 : vector<8x128xf32>
    %387 = math.exp %386 : vector<8x128xf32>
    %cst_228 = arith.constant 1.000000e+00 : f32
    %388 = vector.broadcast %cst_228 : f32 to vector<8x128xf32>
    %389 = arith.addf %388, %387 : vector<8x128xf32>
    %390 = arith.divf %388, %389 : vector<8x128xf32>
    %391 = arith.mulf %382, %358 : vector<8x128xf32>
    %392 = arith.mulf %376, %384 : vector<8x128xf32>
    %393 = arith.addf %391, %392 : vector<8x128xf32>
    %394 = math.tanh %393 : vector<8x128xf32>
    %395 = arith.mulf %390, %394 : vector<8x128xf32>
    %396 = arith.index_cast %364 : i32 to index
    %c0_229 = arith.constant 0 : index
    %397 = vector.load %arg11[%396, %c0_229] : memref<64x128xf32, #tpu.memory_space<vmem>>, vector<8x128xf32>
    tpu.vector_store %arg11[%396, %c0_229], %395 {strides = array<i32>} : memref<64x128xf32, #tpu.memory_space<vmem>>, vector<8x128xf32>,
    %c4_i32 = arith.constant 4 : i32
    %c8_i32_230 = arith.constant 8 : i32
    %398 = arith.muli %c4_i32, %c8_i32_230 : i32
    %399 = tpu.assume_multiple %398, 8 : i32
    %400 = arith.index_cast %399 : i32 to index
    %c0_231 = arith.constant 0 : index
    %401 = vector.load %arg10[%400, %c0_231] : memref<64x512xf32, #tpu.memory_space<vmem>>, vector<8x512xf32>
    %402 = arith.truncf %395 : vector<8x128xf32> to vector<8x128xbf16>
    %c0_232 = arith.constant 0 : index
    %c0_233 = arith.constant 0 : index
    %403 = vector.load %arg2[%c0_232, %c0_233] : memref<128x512xbf16, #tpu.memory_space<vmem>>, vector<128x512xbf16>
    %cst_234 = arith.constant dense<0.000000e+00> : vector<8x512xf32>
    %404 = tpu.matmul %402, %403, %cst_234 {dimension_numbers = #tpu.dot_dimension_numbers<[1], [0], [0], [1], [0, 0, 1, 1], [], []>} : vector<8x128xbf16>, vector<128x512xbf16>, vector<8x512xf32> -> vector<8x512xf32>
    %405 = arith.addf %401, %404 : vector<8x512xf32>
    %406 = vector.extract_strided_slice %405 {offsets = [0, 0], sizes = [8, 128], strides = [1, 1]} : vector<8x512xf32> to vector<8x128xf32>
    %407 = arith.negf %406 : vector<8x128xf32>
    %408 = math.exp %407 : vector<8x128xf32>
    %cst_235 = arith.constant 1.000000e+00 : f32
    %409 = vector.broadcast %cst_235 : f32 to vector<8x128xf32>
    %410 = arith.addf %409, %408 : vector<8x128xf32>
    %411 = arith.divf %409, %410 : vector<8x128xf32>
    %412 = vector.extract_strided_slice %405 {offsets = [0, 128], sizes = [8, 128], strides = [1, 1]} : vector<8x512xf32> to vector<8x128xf32>
    %413 = arith.negf %412 : vector<8x128xf32>
    %414 = math.exp %413 : vector<8x128xf32>
    %cst_236 = arith.constant 1.000000e+00 : f32
    %415 = vector.broadcast %cst_236 : f32 to vector<8x128xf32>
    %416 = arith.addf %415, %414 : vector<8x128xf32>
    %417 = arith.divf %415, %416 : vector<8x128xf32>
    %418 = vector.extract_strided_slice %405 {offsets = [0, 256], sizes = [8, 128], strides = [1, 1]} : vector<8x512xf32> to vector<8x128xf32>
    %419 = math.tanh %418 : vector<8x128xf32>
    %420 = vector.extract_strided_slice %405 {offsets = [0, 384], sizes = [8, 128], strides = [1, 1]} : vector<8x512xf32> to vector<8x128xf32>
    %421 = arith.negf %420 : vector<8x128xf32>
    %422 = math.exp %421 : vector<8x128xf32>
    %cst_237 = arith.constant 1.000000e+00 : f32
    %423 = vector.broadcast %cst_237 : f32 to vector<8x128xf32>
    %424 = arith.addf %423, %422 : vector<8x128xf32>
    %425 = arith.divf %423, %424 : vector<8x128xf32>
    %426 = arith.mulf %417, %393 : vector<8x128xf32>
    %427 = arith.mulf %411, %419 : vector<8x128xf32>
    %428 = arith.addf %426, %427 : vector<8x128xf32>
    %429 = math.tanh %428 : vector<8x128xf32>
    %430 = arith.mulf %425, %429 : vector<8x128xf32>
    %431 = arith.index_cast %399 : i32 to index
    %c0_238 = arith.constant 0 : index
    %432 = vector.load %arg11[%431, %c0_238] : memref<64x128xf32, #tpu.memory_space<vmem>>, vector<8x128xf32>
    tpu.vector_store %arg11[%431, %c0_238], %430 {strides = array<i32>} : memref<64x128xf32, #tpu.memory_space<vmem>>, vector<8x128xf32>,
    %c5_i32 = arith.constant 5 : i32
    %c8_i32_239 = arith.constant 8 : i32
    %433 = arith.muli %c5_i32, %c8_i32_239 : i32
    %434 = tpu.assume_multiple %433, 8 : i32
    %435 = arith.index_cast %434 : i32 to index
    %c0_240 = arith.constant 0 : index
    %436 = vector.load %arg10[%435, %c0_240] : memref<64x512xf32, #tpu.memory_space<vmem>>, vector<8x512xf32>
    %437 = arith.truncf %430 : vector<8x128xf32> to vector<8x128xbf16>
    %c0_241 = arith.constant 0 : index
    %c0_242 = arith.constant 0 : index
    %438 = vector.load %arg2[%c0_241, %c0_242] : memref<128x512xbf16, #tpu.memory_space<vmem>>, vector<128x512xbf16>
    %cst_243 = arith.constant dense<0.000000e+00> : vector<8x512xf32>
    %439 = tpu.matmul %437, %438, %cst_243 {dimension_numbers = #tpu.dot_dimension_numbers<[1], [0], [0], [1], [0, 0, 1, 1], [], []>} : vector<8x128xbf16>, vector<128x512xbf16>, vector<8x512xf32> -> vector<8x512xf32>
    %440 = arith.addf %436, %439 : vector<8x512xf32>
    %441 = vector.extract_strided_slice %440 {offsets = [0, 0], sizes = [8, 128], strides = [1, 1]} : vector<8x512xf32> to vector<8x128xf32>
    %442 = arith.negf %441 : vector<8x128xf32>
    %443 = math.exp %442 : vector<8x128xf32>
    %cst_244 = arith.constant 1.000000e+00 : f32
    %444 = vector.broadcast %cst_244 : f32 to vector<8x128xf32>
    %445 = arith.addf %444, %443 : vector<8x128xf32>
    %446 = arith.divf %444, %445 : vector<8x128xf32>
    %447 = vector.extract_strided_slice %440 {offsets = [0, 128], sizes = [8, 128], strides = [1, 1]} : vector<8x512xf32> to vector<8x128xf32>
    %448 = arith.negf %447 : vector<8x128xf32>
    %449 = math.exp %448 : vector<8x128xf32>
    %cst_245 = arith.constant 1.000000e+00 : f32
    %450 = vector.broadcast %cst_245 : f32 to vector<8x128xf32>
    %451 = arith.addf %450, %449 : vector<8x128xf32>
    %452 = arith.divf %450, %451 : vector<8x128xf32>
    %453 = vector.extract_strided_slice %440 {offsets = [0, 256], sizes = [8, 128], strides = [1, 1]} : vector<8x512xf32> to vector<8x128xf32>
    %454 = math.tanh %453 : vector<8x128xf32>
    %455 = vector.extract_strided_slice %440 {offsets = [0, 384], sizes = [8, 128], strides = [1, 1]} : vector<8x512xf32> to vector<8x128xf32>
    %456 = arith.negf %455 : vector<8x128xf32>
    %457 = math.exp %456 : vector<8x128xf32>
    %cst_246 = arith.constant 1.000000e+00 : f32
    %458 = vector.broadcast %cst_246 : f32 to vector<8x128xf32>
    %459 = arith.addf %458, %457 : vector<8x128xf32>
    %460 = arith.divf %458, %459 : vector<8x128xf32>
    %461 = arith.mulf %452, %428 : vector<8x128xf32>
    %462 = arith.mulf %446, %454 : vector<8x128xf32>
    %463 = arith.addf %461, %462 : vector<8x128xf32>
    %464 = math.tanh %463 : vector<8x128xf32>
    %465 = arith.mulf %460, %464 : vector<8x128xf32>
    %466 = arith.index_cast %434 : i32 to index
    %c0_247 = arith.constant 0 : index
    %467 = vector.load %arg11[%466, %c0_247] : memref<64x128xf32, #tpu.memory_space<vmem>>, vector<8x128xf32>
    tpu.vector_store %arg11[%466, %c0_247], %465 {strides = array<i32>} : memref<64x128xf32, #tpu.memory_space<vmem>>, vector<8x128xf32>,
    %c6_i32 = arith.constant 6 : i32
    %c8_i32_248 = arith.constant 8 : i32
    %468 = arith.muli %c6_i32, %c8_i32_248 : i32
    %469 = tpu.assume_multiple %468, 8 : i32
    %470 = arith.index_cast %469 : i32 to index
    %c0_249 = arith.constant 0 : index
    %471 = vector.load %arg10[%470, %c0_249] : memref<64x512xf32, #tpu.memory_space<vmem>>, vector<8x512xf32>
    %472 = arith.truncf %465 : vector<8x128xf32> to vector<8x128xbf16>
    %c0_250 = arith.constant 0 : index
    %c0_251 = arith.constant 0 : index
    %473 = vector.load %arg2[%c0_250, %c0_251] : memref<128x512xbf16, #tpu.memory_space<vmem>>, vector<128x512xbf16>
    %cst_252 = arith.constant dense<0.000000e+00> : vector<8x512xf32>
    %474 = tpu.matmul %472, %473, %cst_252 {dimension_numbers = #tpu.dot_dimension_numbers<[1], [0], [0], [1], [0, 0, 1, 1], [], []>} : vector<8x128xbf16>, vector<128x512xbf16>, vector<8x512xf32> -> vector<8x512xf32>
    %475 = arith.addf %471, %474 : vector<8x512xf32>
    %476 = vector.extract_strided_slice %475 {offsets = [0, 0], sizes = [8, 128], strides = [1, 1]} : vector<8x512xf32> to vector<8x128xf32>
    %477 = arith.negf %476 : vector<8x128xf32>
    %478 = math.exp %477 : vector<8x128xf32>
    %cst_253 = arith.constant 1.000000e+00 : f32
    %479 = vector.broadcast %cst_253 : f32 to vector<8x128xf32>
    %480 = arith.addf %479, %478 : vector<8x128xf32>
    %481 = arith.divf %479, %480 : vector<8x128xf32>
    %482 = vector.extract_strided_slice %475 {offsets = [0, 128], sizes = [8, 128], strides = [1, 1]} : vector<8x512xf32> to vector<8x128xf32>
    %483 = arith.negf %482 : vector<8x128xf32>
    %484 = math.exp %483 : vector<8x128xf32>
    %cst_254 = arith.constant 1.000000e+00 : f32
    %485 = vector.broadcast %cst_254 : f32 to vector<8x128xf32>
    %486 = arith.addf %485, %484 : vector<8x128xf32>
    %487 = arith.divf %485, %486 : vector<8x128xf32>
    %488 = vector.extract_strided_slice %475 {offsets = [0, 256], sizes = [8, 128], strides = [1, 1]} : vector<8x512xf32> to vector<8x128xf32>
    %489 = math.tanh %488 : vector<8x128xf32>
    %490 = vector.extract_strided_slice %475 {offsets = [0, 384], sizes = [8, 128], strides = [1, 1]} : vector<8x512xf32> to vector<8x128xf32>
    %491 = arith.negf %490 : vector<8x128xf32>
    %492 = math.exp %491 : vector<8x128xf32>
    %cst_255 = arith.constant 1.000000e+00 : f32
    %493 = vector.broadcast %cst_255 : f32 to vector<8x128xf32>
    %494 = arith.addf %493, %492 : vector<8x128xf32>
    %495 = arith.divf %493, %494 : vector<8x128xf32>
    %496 = arith.mulf %487, %463 : vector<8x128xf32>
    %497 = arith.mulf %481, %489 : vector<8x128xf32>
    %498 = arith.addf %496, %497 : vector<8x128xf32>
    %499 = math.tanh %498 : vector<8x128xf32>
    %500 = arith.mulf %495, %499 : vector<8x128xf32>
    %501 = arith.index_cast %469 : i32 to index
    %c0_256 = arith.constant 0 : index
    %502 = vector.load %arg11[%501, %c0_256] : memref<64x128xf32, #tpu.memory_space<vmem>>, vector<8x128xf32>
    tpu.vector_store %arg11[%501, %c0_256], %500 {strides = array<i32>} : memref<64x128xf32, #tpu.memory_space<vmem>>, vector<8x128xf32>,
    %c7_i32 = arith.constant 7 : i32
    %c8_i32_257 = arith.constant 8 : i32
    %503 = arith.muli %c7_i32, %c8_i32_257 : i32
    %504 = tpu.assume_multiple %503, 8 : i32
    %505 = arith.index_cast %504 : i32 to index
    %c0_258 = arith.constant 0 : index
    %506 = vector.load %arg10[%505, %c0_258] : memref<64x512xf32, #tpu.memory_space<vmem>>, vector<8x512xf32>
    %507 = arith.truncf %500 : vector<8x128xf32> to vector<8x128xbf16>
    %c0_259 = arith.constant 0 : index
    %c0_260 = arith.constant 0 : index
    %508 = vector.load %arg2[%c0_259, %c0_260] : memref<128x512xbf16, #tpu.memory_space<vmem>>, vector<128x512xbf16>
    %cst_261 = arith.constant dense<0.000000e+00> : vector<8x512xf32>
    %509 = tpu.matmul %507, %508, %cst_261 {dimension_numbers = #tpu.dot_dimension_numbers<[1], [0], [0], [1], [0, 0, 1, 1], [], []>} : vector<8x128xbf16>, vector<128x512xbf16>, vector<8x512xf32> -> vector<8x512xf32>
    %510 = arith.addf %506, %509 : vector<8x512xf32>
    %511 = vector.extract_strided_slice %510 {offsets = [0, 0], sizes = [8, 128], strides = [1, 1]} : vector<8x512xf32> to vector<8x128xf32>
    %512 = arith.negf %511 : vector<8x128xf32>
    %513 = math.exp %512 : vector<8x128xf32>
    %cst_262 = arith.constant 1.000000e+00 : f32
    %514 = vector.broadcast %cst_262 : f32 to vector<8x128xf32>
    %515 = arith.addf %514, %513 : vector<8x128xf32>
    %516 = arith.divf %514, %515 : vector<8x128xf32>
    %517 = vector.extract_strided_slice %510 {offsets = [0, 128], sizes = [8, 128], strides = [1, 1]} : vector<8x512xf32> to vector<8x128xf32>
    %518 = arith.negf %517 : vector<8x128xf32>
    %519 = math.exp %518 : vector<8x128xf32>
    %cst_263 = arith.constant 1.000000e+00 : f32
    %520 = vector.broadcast %cst_263 : f32 to vector<8x128xf32>
    %521 = arith.addf %520, %519 : vector<8x128xf32>
    %522 = arith.divf %520, %521 : vector<8x128xf32>
    %523 = vector.extract_strided_slice %510 {offsets = [0, 256], sizes = [8, 128], strides = [1, 1]} : vector<8x512xf32> to vector<8x128xf32>
    %524 = math.tanh %523 : vector<8x128xf32>
    %525 = vector.extract_strided_slice %510 {offsets = [0, 384], sizes = [8, 128], strides = [1, 1]} : vector<8x512xf32> to vector<8x128xf32>
    %526 = arith.negf %525 : vector<8x128xf32>
    %527 = math.exp %526 : vector<8x128xf32>
    %cst_264 = arith.constant 1.000000e+00 : f32
    %528 = vector.broadcast %cst_264 : f32 to vector<8x128xf32>
    %529 = arith.addf %528, %527 : vector<8x128xf32>
    %530 = arith.divf %528, %529 : vector<8x128xf32>
    %531 = arith.mulf %522, %498 : vector<8x128xf32>
    %532 = arith.mulf %516, %524 : vector<8x128xf32>
    %533 = arith.addf %531, %532 : vector<8x128xf32>
    %534 = math.tanh %533 : vector<8x128xf32>
    %535 = arith.mulf %530, %534 : vector<8x128xf32>
    %536 = arith.index_cast %504 : i32 to index
    %c0_265 = arith.constant 0 : index
    %537 = vector.load %arg11[%536, %c0_265] : memref<64x128xf32, #tpu.memory_space<vmem>>, vector<8x128xf32>
    tpu.vector_store %arg11[%536, %c0_265], %535 {strides = array<i32>} : memref<64x128xf32, #tpu.memory_space<vmem>>, vector<8x128xf32>,
    %c8_i32_266 = arith.constant 8 : i32
    %c0_267 = arith.constant 0 : index
    %c0_268 = arith.constant 0 : index
    %538 = vector.load %arg8[%c0_267, %c0_268] : memref<8x128xf32, #tpu.memory_space<vmem>>, vector<8x128xf32>
    tpu.vector_store %arg8[%c0_267, %c0_268], %535 {strides = array<i32>} : memref<8x128xf32, #tpu.memory_space<vmem>>, vector<8x128xf32>,
    %c0_269 = arith.constant 0 : index
    %c0_270 = arith.constant 0 : index
    %539 = vector.load %arg9[%c0_269, %c0_270] : memref<8x128xf32, #tpu.memory_space<vmem>>, vector<8x128xf32>
    tpu.vector_store %arg9[%c0_269, %c0_270], %533 {strides = array<i32>} : memref<8x128xf32, #tpu.memory_space<vmem>>, vector<8x128xf32>,
    %c0_271 = arith.constant 0 : index
    %c0_272 = arith.constant 0 : index
    %540 = vector.load %arg11[%c0_271, %c0_272] : memref<64x128xf32, #tpu.memory_space<vmem>>, vector<64x128xf32>
    %541 = arith.truncf %540 : vector<64x128xf32> to vector<64x128xbf16>
    %c0_273 = arith.constant 0 : index
    %c0_274 = arith.constant 0 : index
    %542 = vector.load %arg3[%c0_273, %c0_274] : memref<128x128xbf16, #tpu.memory_space<vmem>>, vector<128x128xbf16>
    %cst_275 = arith.constant dense<0.000000e+00> : vector<64x128xf32>
    %543 = tpu.matmul %541, %542, %cst_275 {dimension_numbers = #tpu.dot_dimension_numbers<[1], [0], [0], [1], [0, 0, 1, 1], [], []>} : vector<64x128xbf16>, vector<128x128xbf16>, vector<64x128xf32> -> vector<64x128xf32>
    %c0_276 = arith.constant 0 : index
    %c0_277 = arith.constant 0 : index
    %544 = vector.load %arg4[%c0_276, %c0_277] : memref<1x128xf32, #tpu.memory_space<vmem>>, vector<1x128xf32>
    %545 = vector.broadcast %544 : vector<1x128xf32> to vector<64x128xf32>
    %546 = arith.addf %543, %545 : vector<64x128xf32>
    %547 = arith.negf %546 : vector<64x128xf32>
    %548 = math.exp %547 : vector<64x128xf32>
    %cst_278 = arith.constant 1.000000e+00 : f32
    %549 = vector.broadcast %cst_278 : f32 to vector<64x128xf32>
    %550 = arith.addf %549, %548 : vector<64x128xf32>
    %551 = arith.divf %549, %550 : vector<64x128xf32>
    %c0_279 = arith.constant 0 : index
    %c0_280 = arith.constant 0 : index
    %552 = vector.load %arg7[%c0_279, %c0_280] : memref<64x128xf32, #tpu.memory_space<vmem>>, vector<64x128xf32>
    tpu.vector_store %arg7[%c0_279, %c0_280], %551 {strides = array<i32>} : memref<64x128xf32, #tpu.memory_space<vmem>>, vector<64x128xf32>,
    return
  }
}

</mosaic_0001>

<llo_original>
// kernel: rnn_forward.1
$region0: #{rnn_forward.1}
  #allocation0 [shape = 'u32[]', space=smem, size = 0x4, offset = 0x4, fixed_abs, tag = 'smem constant byte address 0x4 - core index']
  #allocation1 [shape = 'u32[144,128]{1,0:T(1,128)}', space=vmem, size = 0x12000, scoped, tag = 'internal scratch']
  #allocation2 [shape = 'f32[64,512]{1,0:T(8,128)}', space=vmem, size = 0x20000, scoped, tag = 'scratch operand']
  #allocation3 [shape = 'f32[64,128]{1,0:T(8,128)}', space=vmem, size = 0x8000, scoped, tag = 'scratch operand']
  %s0 = inlined_call_operand.vmem [shape: s32[64], index: 0, kind: input, shape index: {}]
  %s1 = inlined_call_operand.vmem [shape: f32[56,512], index: 1, kind: input, shape index: {}]
  %s2 = inlined_call_operand.vmem [shape: bf16[128,512], index: 2, kind: input, shape index: {}]
  %s3 = inlined_call_operand.vmem [shape: bf16[128,128], index: 3, kind: input, shape index: {}]
  %s4 = inlined_call_operand.vmem [shape: f32[1,128], index: 4, kind: input, shape index: {}]
  %s5 = inlined_call_operand.vmem [shape: f32[8,128], index: 5, kind: input, shape index: {}]
  %s6 = inlined_call_operand.vmem [shape: f32[8,128], index: 6, kind: input, shape index: {}]
  %s7 = inlined_call_operand.hbm [shape: f32[64,128], index: 7, kind: output, shape index: {0}]
  %s8 = inlined_call_operand.vmem [shape: f32[8,128], index: 8, kind: output, shape index: {1}]
  %s9 = inlined_call_operand.vmem [shape: f32[8,128], index: 9, kind: output, shape index: {2}]
  %10 = xla_tuple %s7, %s8, %s9
  %s11 = sld [smem:[#allocation0]]
  $region58: #{rnn_forward.1} parent=0
    _
  %s13 = ssub.s32 1, %s11
  %s14 = scalar_select 0, %s13, %s11
  $region1: #{rnn_forward.1} parent=0
    #allocation4 [shape = 'u8[512]{0}', space=smem, size = 0x200, scoped, tag = 'input window, operand 0, single buffered']
    #allocation5 [shape = 's32[1]{0}', space=sflag, size = 0x4, scoped, tag = 'scoped memory for rnn_forward.1']
    #allocation6 [shape = 's32[1]{0}', space=sflag, size = 0x4, scoped, tag = 'scoped memory for rnn_forward.1']
    #allocation7 [shape = 'u8[32768]{0}', space=vmem, size = 0x8000, scoped, tag = 'output window, operand 0, single buffered']
    %15 = vsyncpa [#allocation6], 0
    %16 = vsyncpa [#allocation5], 0
    // Predicated region
    $region2: #{rnn_forward.1} parent=1 // pred_check
      _
    $region3: #{rnn_forward.1} parent=1 // pred_check_branch
      %18 = sbr.rel (0) target = $region5
    $region4: #{rnn_forward.1} parent=1 // pred_region
      %s20 = ssub.s32 16, 16
      %21 = vsyncadd [#allocation6], %s20
      %s23 = sshll.u32 %s0, 4
      %s24 = int_to_ptr.vmem [resolvable:$true] %s23
      %26 = dma.vmem_to_smem %s24, 16, [#allocation4], [#allocation6]
    $region5: #{rnn_forward.1} parent=1 // pred_fallthru
      _
    // Predicated region
    $region6: #{rnn_forward.1} parent=1 // pred_check
      _
    $region7: #{rnn_forward.1} parent=1 // pred_check_branch
      %28 = sbr.rel (0) target = $region9
    $region8: #{rnn_forward.1} parent=1 // pred_region
      _
    $region9: #{rnn_forward.1} parent=1 // pred_fallthru
      _
    // Predicated region
    $region10: #{rnn_forward.1} parent=1 // pred_check
      _
    $region11: #{rnn_forward.1} parent=1 // pred_check_branch
      %30 = sbr.rel (0) target = $region13
    $region12: #{rnn_forward.1} parent=1 // pred_region
      _
    $region13: #{rnn_forward.1} parent=1 // pred_fallthru
      _
    // Predicated region
    $region14: #{rnn_forward.1} parent=1 // pred_check
      _
    $region15: #{rnn_forward.1} parent=1 // pred_check_branch
      %32 = sbr.rel (0) target = $region17
    $region16: #{rnn_forward.1} parent=1 // pred_region
      _
    $region17: #{rnn_forward.1} parent=1 // pred_fallthru
      _
    // Predicated region
    $region18: #{rnn_forward.1} parent=1 // pred_check
      _
    $region19: #{rnn_forward.1} parent=1 // pred_check_branch
      %34 = sbr.rel (0) target = $region21
    $region20: #{rnn_forward.1} parent=1 // pred_region
      _
    $region21: #{rnn_forward.1} parent=1 // pred_fallthru
      _
    // Predicated region
    $region22: #{rnn_forward.1} parent=1 // pred_check
      _
    $region23: #{rnn_forward.1} parent=1 // pred_check_branch
      %36 = sbr.rel (0) target = $region25
    $region24: #{rnn_forward.1} parent=1 // pred_region
      _
    $region25: #{rnn_forward.1} parent=1 // pred_fallthru
      _
    // Predicated region
    $region26: #{rnn_forward.1} parent=1 // pred_check
      _
    $region27: #{rnn_forward.1} parent=1 // pred_check_branch
      %38 = sbr.rel (0) target = $region29
    $region28: #{rnn_forward.1} parent=1 // pred_region
      _
    $region29: #{rnn_forward.1} parent=1 // pred_fallthru
      _
    // Predicated region
    $region30: #{rnn_forward.1} parent=1 // pred_check
      _
    $region31: #{rnn_forward.1} parent=1 // pred_check_branch
      %40 = sbr.rel (0) target = $region33
    $region32: #{rnn_forward.1} parent=1 // pred_region
      %41 = dma.done [#allocation6], 16
    $region33: #{rnn_forward.1} parent=1 // pred_fallthru
      _
    %42 = sfence
    %s44 = sld [smem:[#allocation4]]
    %s45 = sshra.s32 %s44, 3
    %s46 = sand.u32 %s44, 7
    %s47 = sshra.s32 %s44, 3
    %s48 = sand.u32 %s44, 7
    %s49 = smul.u32 %s45, 4
    %s50 = smul.u32 %s49, 8
    %s51 = sadd.s32 %s50, %s48
    %s52 = scalar_lea.vmem %s1, %s51
    %v53 = vld [vmem:[%s52] ss:$8 sm:$0xf]
    %v54 = vlaneseq
    %vm55 = vcmp.ge.s32.totalorder %v54, 0
    %vm56 = vcmp.lt.s32.totalorder %v54, 512
    %vm57 = vmand %vm55, %vm56
    %58 = vst.msk [vmem:[#allocation2] ss:$8 sm:$0xf] %vm57, %v53
    %59 = vst.msk [vmem:[#allocation2] ss:$8 sm:$0x0] %vm57, %v53
    %s60 = sld [smem:[#allocation4 + $0x1]]
    %s61 = sshra.s32 %s60, 3
    %s62 = sand.u32 %s60, 7
    %s63 = sshra.s32 %s60, 3
    %s64 = sand.u32 %s60, 7
    %s65 = smul.u32 %s61, 4
    %s66 = smul.u32 %s65, 8
    %s67 = sadd.s32 %s66, %s64
    %s68 = scalar_lea.vmem %s1, %s67
    %v69 = vld [vmem:[%s68] ss:$8 sm:$0xf]
    %s70 = scalar_lea.vmem [#allocation2], 1
    %71 = vst.msk [vmem:[%s70] ss:$8 sm:$0xf] %vm57, %v69
    %72 = vst.msk [vmem:[%s70] ss:$8 sm:$0x0] %vm57, %v69
    %s73 = sld [smem:[#allocation4 + $0x2]]
    %s74 = sshra.s32 %s73, 3
    %s75 = sand.u32 %s73, 7
    %s76 = sshra.s32 %s73, 3
    %s77 = sand.u32 %s73, 7
    %s78 = smul.u32 %s74, 4
    %s79 = smul.u32 %s78, 8
    %s80 = sadd.s32 %s79, %s77
    %s81 = scalar_lea.vmem %s1, %s80
    %v82 = vld [vmem:[%s81] ss:$8 sm:$0xf]
    %s83 = scalar_lea.vmem [#allocation2], 2
    %84 = vst.msk [vmem:[%s83] ss:$8 sm:$0xf] %vm57, %v82
    %85 = vst.msk [vmem:[%s83] ss:$8 sm:$0x0] %vm57, %v82
    %s86 = sld [smem:[#allocation4 + $0x3]]
    %s87 = sshra.s32 %s86, 3
    %s88 = sand.u32 %s86, 7
    %s89 = sshra.s32 %s86, 3
    %s90 = sand.u32 %s86, 7
    %s91 = smul.u32 %s87, 4
    %s92 = smul.u32 %s91, 8
    %s93 = sadd.s32 %s92, %s90
    %s94 = scalar_lea.vmem %s1, %s93
    %v95 = vld [vmem:[%s94] ss:$8 sm:$0xf]
    %s96 = scalar_lea.vmem [#allocation2], 3
    %97 = vst.msk [vmem:[%s96] ss:$8 sm:$0xf] %vm57, %v95
    %98 = vst.msk [vmem:[%s96] ss:$8 sm:$0x0] %vm57, %v95
    %s99 = sld [smem:[#allocation4 + $0x4]]
    %s100 = sshra.s32 %s99, 3
    %s101 = sand.u32 %s99, 7
    %s102 = sshra.s32 %s99, 3
    %s103 = sand.u32 %s99, 7
    %s104 = smul.u32 %s100, 4
    %s105 = smul.u32 %s104, 8
    %s106 = sadd.s32 %s105, %s103
    %s107 = scalar_lea.vmem %s1, %s106
    %v108 = vld [vmem:[%s107] ss:$8 sm:$0xf]
    %s109 = scalar_lea.vmem [#allocation2], 4
    %110 = vst.msk [vmem:[%s109] ss:$8 sm:$0xf] %vm57, %v108
    %111 = vst.msk [vmem:[%s109] ss:$8 sm:$0x0] %vm57, %v108
    %s112 = sld [smem:[#allocation4 + $0x5]]
    %s113 = sshra.s32 %s112, 3
    %s114 = sand.u32 %s112, 7
    %s115 = sshra.s32 %s112, 3
    %s116 = sand.u32 %s112, 7
    %s117 = smul.u32 %s113, 4
    %s118 = smul.u32 %s117, 8
    %s119 = sadd.s32 %s118, %s116
    %s120 = scalar_lea.vmem %s1, %s119
    %v121 = vld [vmem:[%s120] ss:$8 sm:$0xf]
    %s122 = scalar_lea.vmem [#allocation2], 5
    %123 = vst.msk [vmem:[%s122] ss:$8 sm:$0xf] %vm57, %v121
    %124 = vst.msk [vmem:[%s122] ss:$8 sm:$0x0] %vm57, %v121
    %s125 = sld [smem:[#allocation4 + $0x6]]
    %s126 = sshra.s32 %s125, 3
    %s127 = sand.u32 %s125, 7
    %s128 = sshra.s32 %s125, 3
    %s129 = sand.u32 %s125, 7
    %s130 = smul.u32 %s126, 4
    %s131 = smul.u32 %s130, 8
    %s132 = sadd.s32 %s131, %s129
    %s133 = scalar_lea.vmem %s1, %s132
    %v134 = vld [vmem:[%s133] ss:$8 sm:$0xf]
    %s135 = scalar_lea.vmem [#allocation2], 6
    %136 = vst.msk [vmem:[%s135] ss:$8 sm:$0xf] %vm57, %v134
    %137 = vst.msk [vmem:[%s135] ss:$8 sm:$0x0] %vm57, %v134
    %s138 = sld [smem:[#allocation4 + $0x7]]
    %s139 = sshra.s32 %s138, 3
    %s140 = sand.u32 %s138, 7
    %s141 = sshra.s32 %s138, 3
    %s142 = sand.u32 %s138, 7
    %s143 = smul.u32 %s139, 4
    %s144 = smul.u32 %s143, 8
    %s145 = sadd.s32 %s144, %s142
    %s146 = scalar_lea.vmem %s1, %s145
    %v147 = vld [vmem:[%s146] ss:$8 sm:$0xf]
    %s148 = scalar_lea.vmem [#allocation2], 7
    %149 = vst.msk [vmem:[%s148] ss:$8 sm:$0xf] %vm57, %v147
    %150 = vst.msk [vmem:[%s148] ss:$8 sm:$0x0] %vm57, %v147
    %s151 = sld [smem:[#allocation4 + $0x8]]
    %s152 = sshra.s32 %s151, 3
    %s153 = sand.u32 %s151, 7
    %s154 = sshra.s32 %s151, 3
    %s155 = sand.u32 %s151, 7
    %s156 = smul.u32 %s152, 4
    %s157 = smul.u32 %s156, 8
    %s158 = sadd.s32 %s157, %s155
    %s159 = scalar_lea.vmem %s1, %s158
    %v160 = vld [vmem:[%s159] ss:$8 sm:$0xf]
    %s161 = scalar_lea.vmem [#allocation2], 32
    %162 = vst.msk [vmem:[%s161] ss:$8 sm:$0xf] %vm57, %v160
    %163 = vst.msk [vmem:[%s161] ss:$8 sm:$0x0] %vm57, %v160
    %s164 = sld [smem:[#allocation4 + $0x9]]
    %s165 = sshra.s32 %s164, 3
    %s166 = sand.u32 %s164, 7
    %s167 = sshra.s32 %s164, 3
    %s168 = sand.u32 %s164, 7
    %s169 = smul.u32 %s165, 4
    %s170 = smul.u32 %s169, 8
    %s171 = sadd.s32 %s170, %s168
    %s172 = scalar_lea.vmem %s1, %s171
    %v173 = vld [vmem:[%s172] ss:$8 sm:$0xf]
    %s174 = scalar_lea.vmem [#allocation2], 33
    %175 = vst.msk [vmem:[%s174] ss:$8 sm:$0xf] %vm57, %v173
    %176 = vst.msk [vmem:[%s174] ss:$8 sm:$0x0] %vm57, %v173
    %s177 = sld [smem:[#allocation4 + $0xa]]
    %s178 = sshra.s32 %s177, 3
    %s179 = sand.u32 %s177, 7
    %s180 = sshra.s32 %s177, 3
    %s181 = sand.u32 %s177, 7
    %s182 = smul.u32 %s178, 4
    %s183 = smul.u32 %s182, 8
    %s184 = sadd.s32 %s183, %s181
    %s185 = scalar_lea.vmem %s1, %s184
    %v186 = vld [vmem:[%s185] ss:$8 sm:$0xf]
    %s187 = scalar_lea.vmem [#allocation2], 34
    %188 = vst.msk [vmem:[%s187] ss:$8 sm:$0xf] %vm57, %v186
    %189 = vst.msk [vmem:[%s187] ss:$8 sm:$0x0] %vm57, %v186
    %s190 = sld [smem:[#allocation4 + $0xb]]
    %s191 = sshra.s32 %s190, 3
    %s192 = sand.u32 %s190, 7
    %s193 = sshra.s32 %s190, 3
    %s194 = sand.u32 %s190, 7
    %s195 = smul.u32 %s191, 4
    %s196 = smul.u32 %s195, 8
    %s197 = sadd.s32 %s196, %s194
    %s198 = scalar_lea.vmem %s1, %s197
    %v199 = vld [vmem:[%s198] ss:$8 sm:$0xf]
    %s200 = scalar_lea.vmem [#allocation2], 35
    %201 = vst.msk [vmem:[%s200] ss:$8 sm:$0xf] %vm57, %v199
    %202 = vst.msk [vmem:[%s200] ss:$8 sm:$0x0] %vm57, %v199
    %s203 = sld [smem:[#allocation4 + $0xc]]
    %s204 = sshra.s32 %s203, 3
    %s205 = sand.u32 %s203, 7
    %s206 = sshra.s32 %s203, 3
    %s207 = sand.u32 %s203, 7
    %s208 = smul.u32 %s204, 4
    %s209 = smul.u32 %s208, 8
    %s210 = sadd.s32 %s209, %s207
    %s211 = scalar_lea.vmem %s1, %s210
    %v212 = vld [vmem:[%s211] ss:$8 sm:$0xf]
    %s213 = scalar_lea.vmem [#allocation2], 36
    %214 = vst.msk [vmem:[%s213] ss:$8 sm:$0xf] %vm57, %v212
    %215 = vst.msk [vmem:[%s213] ss:$8 sm:$0x0] %vm57, %v212
    %s216 = sld [smem:[#allocation4 + $0xd]]
    %s217 = sshra.s32 %s216, 3
    %s218 = sand.u32 %s216, 7
    %s219 = sshra.s32 %s216, 3
    %s220 = sand.u32 %s216, 7
    %s221 = smul.u32 %s217, 4
    %s222 = smul.u32 %s221, 8
    %s223 = sadd.s32 %s222, %s220
    %s224 = scalar_lea.vmem %s1, %s223
    %v225 = vld [vmem:[%s224] ss:$8 sm:$0xf]
    %s226 = scalar_lea.vmem [#allocation2], 37
    %227 = vst.msk [vmem:[%s226] ss:$8 sm:$0xf] %vm57, %v225
    %228 = vst.msk [vmem:[%s226] ss:$8 sm:$0x0] %vm57, %v225
    %s229 = sld [smem:[#allocation4 + $0xe]]
    %s230 = sshra.s32 %s229, 3
    %s231 = sand.u32 %s229, 7
    %s232 = sshra.s32 %s229, 3
    %s233 = sand.u32 %s229, 7
    %s234 = smul.u32 %s230, 4
    %s235 = smul.u32 %s234, 8
    %s236 = sadd.s32 %s235, %s233
    %s237 = scalar_lea.vmem %s1, %s236
    %v238 = vld [vmem:[%s237] ss:$8 sm:$0xf]
    %s239 = scalar_lea.vmem [#allocation2], 38
    %240 = vst.msk [vmem:[%s239] ss:$8 sm:$0xf] %vm57, %v238
    %241 = vst.msk [vmem:[%s239] ss:$8 sm:$0x0] %vm57, %v238
    %s242 = sld [smem:[#allocation4 + $0xf]]
    %s243 = sshra.s32 %s242, 3
    %s244 = sand.u32 %s242, 7
    %s245 = sshra.s32 %s242, 3
    %s246 = sand.u32 %s242, 7
    %s247 = smul.u32 %s243, 4
    %s248 = smul.u32 %s247, 8
    %s249 = sadd.s32 %s248, %s246
    %s250 = scalar_lea.vmem %s1, %s249
    %v251 = vld [vmem:[%s250] ss:$8 sm:$0xf]
    %s252 = scalar_lea.vmem [#allocation2], 39
    %253 = vst.msk [vmem:[%s252] ss:$8 sm:$0xf] %vm57, %v251
    %254 = vst.msk [vmem:[%s252] ss:$8 sm:$0x0] %vm57, %v251
    %s255 = sld [smem:[#allocation4 + $0x10]]
    %s256 = sshra.s32 %s255, 3
    %s257 = sand.u32 %s255, 7
    %s258 = sshra.s32 %s255, 3
    %s259 = sand.u32 %s255, 7
    %s260 = smul.u32 %s256, 4
    %s261 = smul.u32 %s260, 8
    %s262 = sadd.s32 %s261, %s259
    %s263 = scalar_lea.vmem %s1, %s262
    %v264 = vld [vmem:[%s263] ss:$8 sm:$0xf]
    %s265 = scalar_lea.vmem [#allocation2], 64
    %266 = vst.msk [vmem:[%s265] ss:$8 sm:$0xf] %vm57, %v264
    %267 = vst.msk [vmem:[%s265] ss:$8 sm:$0x0] %vm57, %v264
    %s268 = sld [smem:[#allocation4 + $0x11]]
    %s269 = sshra.s32 %s268, 3
    %s270 = sand.u32 %s268, 7
    %s271 = sshra.s32 %s268, 3
    %s272 = sand.u32 %s268, 7
    %s273 = smul.u32 %s269, 4
    %s274 = smul.u32 %s273, 8
    %s275 = sadd.s32 %s274, %s272
    %s276 = scalar_lea.vmem %s1, %s275
    %v277 = vld [vmem:[%s276] ss:$8 sm:$0xf]
    %s278 = scalar_lea.vmem [#allocation2], 65
    %279 = vst.msk [vmem:[%s278] ss:$8 sm:$0xf] %vm57, %v277
    %280 = vst.msk [vmem:[%s278] ss:$8 sm:$0x0] %vm57, %v277
    %s281 = sld [smem:[#allocation4 + $0x12]]
    %s282 = sshra.s32 %s281, 3
    %s283 = sand.u32 %s281, 7
    %s284 = sshra.s32 %s281, 3
    %s285 = sand.u32 %s281, 7
    %s286 = smul.u32 %s282, 4
    %s287 = smul.u32 %s286, 8
    %s288 = sadd.s32 %s287, %s285
    %s289 = scalar_lea.vmem %s1, %s288
    %v290 = vld [vmem:[%s289] ss:$8 sm:$0xf]
    %s291 = scalar_lea.vmem [#allocation2], 66
    %292 = vst.msk [vmem:[%s291] ss:$8 sm:$0xf] %vm57, %v290
    %293 = vst.msk [vmem:[%s291] ss:$8 sm:$0x0] %vm57, %v290
    %s294 = sld [smem:[#allocation4 + $0x13]]
    %s295 = sshra.s32 %s294, 3
    %s296 = sand.u32 %s294, 7
    %s297 = sshra.s32 %s294, 3
    %s298 = sand.u32 %s294, 7
    %s299 = smul.u32 %s295, 4
    %s300 = smul.u32 %s299, 8
    %s301 = sadd.s32 %s300, %s298
    %s302 = scalar_lea.vmem %s1, %s301
    %v303 = vld [vmem:[%s302] ss:$8 sm:$0xf]
    %s304 = scalar_lea.vmem [#allocation2], 67
    %305 = vst.msk [vmem:[%s304] ss:$8 sm:$0xf] %vm57, %v303
    %306 = vst.msk [vmem:[%s304] ss:$8 sm:$0x0] %vm57, %v303
    %s307 = sld [smem:[#allocation4 + $0x14]]
    %s308 = sshra.s32 %s307, 3
    %s309 = sand.u32 %s307, 7
    %s310 = sshra.s32 %s307, 3
    %s311 = sand.u32 %s307, 7
    %s312 = smul.u32 %s308, 4
    %s313 = smul.u32 %s312, 8
    %s314 = sadd.s32 %s313, %s311
    %s315 = scalar_lea.vmem %s1, %s314
    %v316 = vld [vmem:[%s315] ss:$8 sm:$0xf]
    %s317 = scalar_lea.vmem [#allocation2], 68
    %318 = vst.msk [vmem:[%s317] ss:$8 sm:$0xf] %vm57, %v316
    %319 = vst.msk [vmem:[%s317] ss:$8 sm:$0x0] %vm57, %v316
    %s320 = sld [smem:[#allocation4 + $0x15]]
    %s321 = sshra.s32 %s320, 3
    %s322 = sand.u32 %s320, 7
    %s323 = sshra.s32 %s320, 3
    %s324 = sand.u32 %s320, 7
    %s325 = smul.u32 %s321, 4
    %s326 = smul.u32 %s325, 8
    %s327 = sadd.s32 %s326, %s324
    %s328 = scalar_lea.vmem %s1, %s327
    %v329 = vld [vmem:[%s328] ss:$8 sm:$0xf]
    %s330 = scalar_lea.vmem [#allocation2], 69
    %331 = vst.msk [vmem:[%s330] ss:$8 sm:$0xf] %vm57, %v329
    %332 = vst.msk [vmem:[%s330] ss:$8 sm:$0x0] %vm57, %v329
    %s333 = sld [smem:[#allocation4 + $0x16]]
    %s334 = sshra.s32 %s333, 3
    %s335 = sand.u32 %s333, 7
    %s336 = sshra.s32 %s333, 3
    %s337 = sand.u32 %s333, 7
    %s338 = smul.u32 %s334, 4
    %s339 = smul.u32 %s338, 8
    %s340 = sadd.s32 %s339, %s337
    %s341 = scalar_lea.vmem %s1, %s340
    %v342 = vld [vmem:[%s341] ss:$8 sm:$0xf]
    %s343 = scalar_lea.vmem [#allocation2], 70
    %344 = vst.msk [vmem:[%s343] ss:$8 sm:$0xf] %vm57, %v342
    %345 = vst.msk [vmem:[%s343] ss:$8 sm:$0x0] %vm57, %v342
    %s346 = sld [smem:[#allocation4 + $0x17]]
    %s347 = sshra.s32 %s346, 3
    %s348 = sand.u32 %s346, 7
    %s349 = sshra.s32 %s346, 3
    %s350 = sand.u32 %s346, 7
    %s351 = smul.u32 %s347, 4
    %s352 = smul.u32 %s351, 8
    %s353 = sadd.s32 %s352, %s350
    %s354 = scalar_lea.vmem %s1, %s353
    %v355 = vld [vmem:[%s354] ss:$8 sm:$0xf]
    %s356 = scalar_lea.vmem [#allocation2], 71
    %357 = vst.msk [vmem:[%s356] ss:$8 sm:$0xf] %vm57, %v355
    %358 = vst.msk [vmem:[%s356] ss:$8 sm:$0x0] %vm57, %v355
    %s359 = sld [smem:[#allocation4 + $0x18]]
    %s360 = sshra.s32 %s359, 3
    %s361 = sand.u32 %s359, 7
    %s362 = sshra.s32 %s359, 3
    %s363 = sand.u32 %s359, 7
    %s364 = smul.u32 %s360, 4
    %s365 = smul.u32 %s364, 8
    %s366 = sadd.s32 %s365, %s363
    %s367 = scalar_lea.vmem %s1, %s366
    %v368 = vld [vmem:[%s367] ss:$8 sm:$0xf]
    %s369 = scalar_lea.vmem [#allocation2], 96
    %370 = vst.msk [vmem:[%s369] ss:$8 sm:$0xf] %vm57, %v368
    %371 = vst.msk [vmem:[%s369] ss:$8 sm:$0x0] %vm57, %v368
    %s372 = sld [smem:[#allocation4 + $0x19]]
    %s373 = sshra.s32 %s372, 3
    %s374 = sand.u32 %s372, 7
    %s375 = sshra.s32 %s372, 3
    %s376 = sand.u32 %s372, 7
    %s377 = smul.u32 %s373, 4
    %s378 = smul.u32 %s377, 8
    %s379 = sadd.s32 %s378, %s376
    %s380 = scalar_lea.vmem %s1, %s379
    %v381 = vld [vmem:[%s380] ss:$8 sm:$0xf]
    %s382 = scalar_lea.vmem [#allocation2], 97
    %383 = vst.msk [vmem:[%s382] ss:$8 sm:$0xf] %vm57, %v381
    %384 = vst.msk [vmem:[%s382] ss:$8 sm:$0x0] %vm57, %v381
    %s385 = sld [smem:[#allocation4 + $0x1a]]
    %s386 = sshra.s32 %s385, 3
    %s387 = sand.u32 %s385, 7
    %s388 = sshra.s32 %s385, 3
    %s389 = sand.u32 %s385, 7
    %s390 = smul.u32 %s386, 4
    %s391 = smul.u32 %s390, 8
    %s392 = sadd.s32 %s391, %s389
    %s393 = scalar_lea.vmem %s1, %s392
    %v394 = vld [vmem:[%s393] ss:$8 sm:$0xf]
    %s395 = scalar_lea.vmem [#allocation2], 98
    %396 = vst.msk [vmem:[%s395] ss:$8 sm:$0xf] %vm57, %v394
    %397 = vst.msk [vmem:[%s395] ss:$8 sm:$0x0] %vm57, %v394
    %s398 = sld [smem:[#allocation4 + $0x1b]]
    %s399 = sshra.s32 %s398, 3
    %s400 = sand.u32 %s398, 7
    %s401 = sshra.s32 %s398, 3
    %s402 = sand.u32 %s398, 7
    %s403 = smul.u32 %s399, 4
    %s404 = smul.u32 %s403, 8
    %s405 = sadd.s32 %s404, %s402
    %s406 = scalar_lea.vmem %s1, %s405
    %v407 = vld [vmem:[%s406] ss:$8 sm:$0xf]
    %s408 = scalar_lea.vmem [#allocation2], 99
    %409 = vst.msk [vmem:[%s408] ss:$8 sm:$0xf] %vm57, %v407
    %410 = vst.msk [vmem:[%s408] ss:$8 sm:$0x0] %vm57, %v407
    %s411 = sld [smem:[#allocation4 + $0x1c]]
    %s412 = sshra.s32 %s411, 3
    %s413 = sand.u32 %s411, 7
    %s414 = sshra.s32 %s411, 3
    %s415 = sand.u32 %s411, 7
    %s416 = smul.u32 %s412, 4
    %s417 = smul.u32 %s416, 8
    %s418 = sadd.s32 %s417, %s415
    %s419 = scalar_lea.vmem %s1, %s418
    %v420 = vld [vmem:[%s419] ss:$8 sm:$0xf]
    %s421 = scalar_lea.vmem [#allocation2], 100
    %422 = vst.msk [vmem:[%s421] ss:$8 sm:$0xf] %vm57, %v420
    %423 = vst.msk [vmem:[%s421] ss:$8 sm:$0x0] %vm57, %v420
    %s424 = sld [smem:[#allocation4 + $0x1d]]
    %s425 = sshra.s32 %s424, 3
    %s426 = sand.u32 %s424, 7
    %s427 = sshra.s32 %s424, 3
    %s428 = sand.u32 %s424, 7
    %s429 = smul.u32 %s425, 4
    %s430 = smul.u32 %s429, 8
    %s431 = sadd.s32 %s430, %s428
    %s432 = scalar_lea.vmem %s1, %s431
    %v433 = vld [vmem:[%s432] ss:$8 sm:$0xf]
    %s434 = scalar_lea.vmem [#allocation2], 101
    %435 = vst.msk [vmem:[%s434] ss:$8 sm:$0xf] %vm57, %v433
    %436 = vst.msk [vmem:[%s434] ss:$8 sm:$0x0] %vm57, %v433
    %s437 = sld [smem:[#allocation4 + $0x1e]]
    %s438 = sshra.s32 %s437, 3
    %s439 = sand.u32 %s437, 7
    %s440 = sshra.s32 %s437, 3
    %s441 = sand.u32 %s437, 7
    %s442 = smul.u32 %s438, 4
    %s443 = smul.u32 %s442, 8
    %s444 = sadd.s32 %s443, %s441
    %s445 = scalar_lea.vmem %s1, %s444
    %v446 = vld [vmem:[%s445] ss:$8 sm:$0xf]
    %s447 = scalar_lea.vmem [#allocation2], 102
    %448 = vst.msk [vmem:[%s447] ss:$8 sm:$0xf] %vm57, %v446
    %449 = vst.msk [vmem:[%s447] ss:$8 sm:$0x0] %vm57, %v446
    %s450 = sld [smem:[#allocation4 + $0x1f]]
    %s451 = sshra.s32 %s450, 3
    %s452 = sand.u32 %s450, 7
    %s453 = sshra.s32 %s450, 3
    %s454 = sand.u32 %s450, 7
    %s455 = smul.u32 %s451, 4
    %s456 = smul.u32 %s455, 8
    %s457 = sadd.s32 %s456, %s454
    %s458 = scalar_lea.vmem %s1, %s457
    %v459 = vld [vmem:[%s458] ss:$8 sm:$0xf]
    %s460 = scalar_lea.vmem [#allocation2], 103
    %461 = vst.msk [vmem:[%s460] ss:$8 sm:$0xf] %vm57, %v459
    %462 = vst.msk [vmem:[%s460] ss:$8 sm:$0x0] %vm57, %v459
    %s463 = sld [smem:[#allocation4 + $0x20]]
    %s464 = sshra.s32 %s463, 3
    %s465 = sand.u32 %s463, 7
    %s466 = sshra.s32 %s463, 3
    %s467 = sand.u32 %s463, 7
    %s468 = smul.u32 %s464, 4
    %s469 = smul.u32 %s468, 8
    %s470 = sadd.s32 %s469, %s467
    %s471 = scalar_lea.vmem %s1, %s470
    %v472 = vld [vmem:[%s471] ss:$8 sm:$0xf]
    %s473 = scalar_lea.vmem [#allocation2], 128
    %474 = vst.msk [vmem:[%s473] ss:$8 sm:$0xf] %vm57, %v472
    %475 = vst.msk [vmem:[%s473] ss:$8 sm:$0x0] %vm57, %v472
    %s476 = sld [smem:[#allocation4 + $0x21]]
    %s477 = sshra.s32 %s476, 3
    %s478 = sand.u32 %s476, 7
    %s479 = sshra.s32 %s476, 3
    %s480 = sand.u32 %s476, 7
    %s481 = smul.u32 %s477, 4
    %s482 = smul.u32 %s481, 8
    %s483 = sadd.s32 %s482, %s480
    %s484 = scalar_lea.vmem %s1, %s483
    %v485 = vld [vmem:[%s484] ss:$8 sm:$0xf]
    %s486 = scalar_lea.vmem [#allocation2], 129
    %487 = vst.msk [vmem:[%s486] ss:$8 sm:$0xf] %vm57, %v485
    %488 = vst.msk [vmem:[%s486] ss:$8 sm:$0x0] %vm57, %v485
    %s489 = sld [smem:[#allocation4 + $0x22]]
    %s490 = sshra.s32 %s489, 3
    %s491 = sand.u32 %s489, 7
    %s492 = sshra.s32 %s489, 3
    %s493 = sand.u32 %s489, 7
    %s494 = smul.u32 %s490, 4
    %s495 = smul.u32 %s494, 8
    %s496 = sadd.s32 %s495, %s493
    %s497 = scalar_lea.vmem %s1, %s496
    %v498 = vld [vmem:[%s497] ss:$8 sm:$0xf]
    %s499 = scalar_lea.vmem [#allocation2], 130
    %500 = vst.msk [vmem:[%s499] ss:$8 sm:$0xf] %vm57, %v498
    %501 = vst.msk [vmem:[%s499] ss:$8 sm:$0x0] %vm57, %v498
    %s502 = sld [smem:[#allocation4 + $0x23]]
    %s503 = sshra.s32 %s502, 3
    %s504 = sand.u32 %s502, 7
    %s505 = sshra.s32 %s502, 3
    %s506 = sand.u32 %s502, 7
    %s507 = smul.u32 %s503, 4
    %s508 = smul.u32 %s507, 8
    %s509 = sadd.s32 %s508, %s506
    %s510 = scalar_lea.vmem %s1, %s509
    %v511 = vld [vmem:[%s510] ss:$8 sm:$0xf]
    %s512 = scalar_lea.vmem [#allocation2], 131
    %513 = vst.msk [vmem:[%s512] ss:$8 sm:$0xf] %vm57, %v511
    %514 = vst.msk [vmem:[%s512] ss:$8 sm:$0x0] %vm57, %v511
    %s515 = sld [smem:[#allocation4 + $0x24]]
    %s516 = sshra.s32 %s515, 3
    %s517 = sand.u32 %s515, 7
    %s518 = sshra.s32 %s515, 3
    %s519 = sand.u32 %s515, 7
    %s520 = smul.u32 %s516, 4
    %s521 = smul.u32 %s520, 8
    %s522 = sadd.s32 %s521, %s519
    %s523 = scalar_lea.vmem %s1, %s522
    %v524 = vld [vmem:[%s523] ss:$8 sm:$0xf]
    %s525 = scalar_lea.vmem [#allocation2], 132
    %526 = vst.msk [vmem:[%s525] ss:$8 sm:$0xf] %vm57, %v524
    %527 = vst.msk [vmem:[%s525] ss:$8 sm:$0x0] %vm57, %v524
    %s528 = sld [smem:[#allocation4 + $0x25]]
    %s529 = sshra.s32 %s528, 3
    %s530 = sand.u32 %s528, 7
    %s531 = sshra.s32 %s528, 3
    %s532 = sand.u32 %s528, 7
    %s533 = smul.u32 %s529, 4
    %s534 = smul.u32 %s533, 8
    %s535 = sadd.s32 %s534, %s532
    %s536 = scalar_lea.vmem %s1, %s535
    %v537 = vld [vmem:[%s536] ss:$8 sm:$0xf]
    %s538 = scalar_lea.vmem [#allocation2], 133
    %539 = vst.msk [vmem:[%s538] ss:$8 sm:$0xf] %vm57, %v537
    %540 = vst.msk [vmem:[%s538] ss:$8 sm:$0x0] %vm57, %v537
    %s541 = sld [smem:[#allocation4 + $0x26]]
    %s542 = sshra.s32 %s541, 3
    %s543 = sand.u32 %s541, 7
    %s544 = sshra.s32 %s541, 3
    %s545 = sand.u32 %s541, 7
    %s546 = smul.u32 %s542, 4
    %s547 = smul.u32 %s546, 8
    %s548 = sadd.s32 %s547, %s545
    %s549 = scalar_lea.vmem %s1, %s548
    %v550 = vld [vmem:[%s549] ss:$8 sm:$0xf]
    %s551 = scalar_lea.vmem [#allocation2], 134
    %552 = vst.msk [vmem:[%s551] ss:$8 sm:$0xf] %vm57, %v550
    %553 = vst.msk [vmem:[%s551] ss:$8 sm:$0x0] %vm57, %v550
    %s554 = sld [smem:[#allocation4 + $0x27]]
    %s555 = sshra.s32 %s554, 3
    %s556 = sand.u32 %s554, 7
    %s557 = sshra.s32 %s554, 3
    %s558 = sand.u32 %s554, 7
    %s559 = smul.u32 %s555, 4
    %s560 = smul.u32 %s559, 8
    %s561 = sadd.s32 %s560, %s558
    %s562 = scalar_lea.vmem %s1, %s561
    %v563 = vld [vmem:[%s562] ss:$8 sm:$0xf]
    %s564 = scalar_lea.vmem [#allocation2], 135
    %565 = vst.msk [vmem:[%s564] ss:$8 sm:$0xf] %vm57, %v563
    %566 = vst.msk [vmem:[%s564] ss:$8 sm:$0x0] %vm57, %v563
    %s567 = sld [smem:[#allocation4 + $0x28]]
    %s568 = sshra.s32 %s567, 3
    %s569 = sand.u32 %s567, 7
    %s570 = sshra.s32 %s567, 3
    %s571 = sand.u32 %s567, 7
    %s572 = smul.u32 %s568, 4
    %s573 = smul.u32 %s572, 8
    %s574 = sadd.s32 %s573, %s571
    %s575 = scalar_lea.vmem %s1, %s574
    %v576 = vld [vmem:[%s575] ss:$8 sm:$0xf]
    %s577 = scalar_lea.vmem [#allocation2], 160
    %578 = vst.msk [vmem:[%s577] ss:$8 sm:$0xf] %vm57, %v576
    %579 = vst.msk [vmem:[%s577] ss:$8 sm:$0x0] %vm57, %v576
    %s580 = sld [smem:[#allocation4 + $0x29]]
    %s581 = sshra.s32 %s580, 3
    %s582 = sand.u32 %s580, 7
    %s583 = sshra.s32 %s580, 3
    %s584 = sand.u32 %s580, 7
    %s585 = smul.u32 %s581, 4
    %s586 = smul.u32 %s585, 8
    %s587 = sadd.s32 %s586, %s584
    %s588 = scalar_lea.vmem %s1, %s587
    %v589 = vld [vmem:[%s588] ss:$8 sm:$0xf]
    %s590 = scalar_lea.vmem [#allocation2], 161
    %591 = vst.msk [vmem:[%s590] ss:$8 sm:$0xf] %vm57, %v589
    %592 = vst.msk [vmem:[%s590] ss:$8 sm:$0x0] %vm57, %v589
    %s593 = sld [smem:[#allocation4 + $0x2a]]
    %s594 = sshra.s32 %s593, 3
    %s595 = sand.u32 %s593, 7
    %s596 = sshra.s32 %s593, 3
    %s597 = sand.u32 %s593, 7
    %s598 = smul.u32 %s594, 4
    %s599 = smul.u32 %s598, 8
    %s600 = sadd.s32 %s599, %s597
    %s601 = scalar_lea.vmem %s1, %s600
    %v602 = vld [vmem:[%s601] ss:$8 sm:$0xf]
    %s603 = scalar_lea.vmem [#allocation2], 162
    %604 = vst.msk [vmem:[%s603] ss:$8 sm:$0xf] %vm57, %v602
    %605 = vst.msk [vmem:[%s603] ss:$8 sm:$0x0] %vm57, %v602
    %s606 = sld [smem:[#allocation4 + $0x2b]]
    %s607 = sshra.s32 %s606, 3
    %s608 = sand.u32 %s606, 7
    %s609 = sshra.s32 %s606, 3
    %s610 = sand.u32 %s606, 7
    %s611 = smul.u32 %s607, 4
    %s612 = smul.u32 %s611, 8
    %s613 = sadd.s32 %s612, %s610
    %s614 = scalar_lea.vmem %s1, %s613
    %v615 = vld [vmem:[%s614] ss:$8 sm:$0xf]
    %s616 = scalar_lea.vmem [#allocation2], 163
    %617 = vst.msk [vmem:[%s616] ss:$8 sm:$0xf] %vm57, %v615
    %618 = vst.msk [vmem:[%s616] ss:$8 sm:$0x0] %vm57, %v615
    %s619 = sld [smem:[#allocation4 + $0x2c]]
    %s620 = sshra.s32 %s619, 3
    %s621 = sand.u32 %s619, 7
    %s622 = sshra.s32 %s619, 3
    %s623 = sand.u32 %s619, 7
    %s624 = smul.u32 %s620, 4
    %s625 = smul.u32 %s624, 8
    %s626 = sadd.s32 %s625, %s623
    %s627 = scalar_lea.vmem %s1, %s626
    %v628 = vld [vmem:[%s627] ss:$8 sm:$0xf]
    %s629 = scalar_lea.vmem [#allocation2], 164
    %630 = vst.msk [vmem:[%s629] ss:$8 sm:$0xf] %vm57, %v628
    %631 = vst.msk [vmem:[%s629] ss:$8 sm:$0x0] %vm57, %v628
    %s632 = sld [smem:[#allocation4 + $0x2d]]
    %s633 = sshra.s32 %s632, 3
    %s634 = sand.u32 %s632, 7
    %s635 = sshra.s32 %s632, 3
    %s636 = sand.u32 %s632, 7
    %s637 = smul.u32 %s633, 4
    %s638 = smul.u32 %s637, 8
    %s639 = sadd.s32 %s638, %s636
    %s640 = scalar_lea.vmem %s1, %s639
    %v641 = vld [vmem:[%s640] ss:$8 sm:$0xf]
    %s642 = scalar_lea.vmem [#allocation2], 165
    %643 = vst.msk [vmem:[%s642] ss:$8 sm:$0xf] %vm57, %v641
    %644 = vst.msk [vmem:[%s642] ss:$8 sm:$0x0] %vm57, %v641
    %s645 = sld [smem:[#allocation4 + $0x2e]]
    %s646 = sshra.s32 %s645, 3
    %s647 = sand.u32 %s645, 7
    %s648 = sshra.s32 %s645, 3
    %s649 = sand.u32 %s645, 7
    %s650 = smul.u32 %s646, 4
    %s651 = smul.u32 %s650, 8
    %s652 = sadd.s32 %s651, %s649
    %s653 = scalar_lea.vmem %s1, %s652
    %v654 = vld [vmem:[%s653] ss:$8 sm:$0xf]
    %s655 = scalar_lea.vmem [#allocation2], 166
    %656 = vst.msk [vmem:[%s655] ss:$8 sm:$0xf] %vm57, %v654
    %657 = vst.msk [vmem:[%s655] ss:$8 sm:$0x0] %vm57, %v654
    %s658 = sld [smem:[#allocation4 + $0x2f]]
    %s659 = sshra.s32 %s658, 3
    %s660 = sand.u32 %s658, 7
    %s661 = sshra.s32 %s658, 3
    %s662 = sand.u32 %s658, 7
    %s663 = smul.u32 %s659, 4
    %s664 = smul.u32 %s663, 8
    %s665 = sadd.s32 %s664, %s662
    %s666 = scalar_lea.vmem %s1, %s665
    %v667 = vld [vmem:[%s666] ss:$8 sm:$0xf]
    %s668 = scalar_lea.vmem [#allocation2], 167
    %669 = vst.msk [vmem:[%s668] ss:$8 sm:$0xf] %vm57, %v667
    %670 = vst.msk [vmem:[%s668] ss:$8 sm:$0x0] %vm57, %v667
    %s671 = sld [smem:[#allocation4 + $0x30]]
    %s672 = sshra.s32 %s671, 3
    %s673 = sand.u32 %s671, 7
    %s674 = sshra.s32 %s671, 3
    %s675 = sand.u32 %s671, 7
    %s676 = smul.u32 %s672, 4
    %s677 = smul.u32 %s676, 8
    %s678 = sadd.s32 %s677, %s675
    %s679 = scalar_lea.vmem %s1, %s678
    %v680 = vld [vmem:[%s679] ss:$8 sm:$0xf]
    %s681 = scalar_lea.vmem [#allocation2], 192
    %682 = vst.msk [vmem:[%s681] ss:$8 sm:$0xf] %vm57, %v680
    %683 = vst.msk [vmem:[%s681] ss:$8 sm:$0x0] %vm57, %v680
    %s684 = sld [smem:[#allocation4 + $0x31]]
    %s685 = sshra.s32 %s684, 3
    %s686 = sand.u32 %s684, 7
    %s687 = sshra.s32 %s684, 3
    %s688 = sand.u32 %s684, 7
    %s689 = smul.u32 %s685, 4
    %s690 = smul.u32 %s689, 8
    %s691 = sadd.s32 %s690, %s688
    %s692 = scalar_lea.vmem %s1, %s691
    %v693 = vld [vmem:[%s692] ss:$8 sm:$0xf]
    %s694 = scalar_lea.vmem [#allocation2], 193
    %695 = vst.msk [vmem:[%s694] ss:$8 sm:$0xf] %vm57, %v693
    %696 = vst.msk [vmem:[%s694] ss:$8 sm:$0x0] %vm57, %v693
    %s697 = sld [smem:[#allocation4 + $0x32]]
    %s698 = sshra.s32 %s697, 3
    %s699 = sand.u32 %s697, 7
    %s700 = sshra.s32 %s697, 3
    %s701 = sand.u32 %s697, 7
    %s702 = smul.u32 %s698, 4
    %s703 = smul.u32 %s702, 8
    %s704 = sadd.s32 %s703, %s701
    %s705 = scalar_lea.vmem %s1, %s704
    %v706 = vld [vmem:[%s705] ss:$8 sm:$0xf]
    %s707 = scalar_lea.vmem [#allocation2], 194
    %708 = vst.msk [vmem:[%s707] ss:$8 sm:$0xf] %vm57, %v706
    %709 = vst.msk [vmem:[%s707] ss:$8 sm:$0x0] %vm57, %v706
    %s710 = sld [smem:[#allocation4 + $0x33]]
    %s711 = sshra.s32 %s710, 3
    %s712 = sand.u32 %s710, 7
    %s713 = sshra.s32 %s710, 3
    %s714 = sand.u32 %s710, 7
    %s715 = smul.u32 %s711, 4
    %s716 = smul.u32 %s715, 8
    %s717 = sadd.s32 %s716, %s714
    %s718 = scalar_lea.vmem %s1, %s717
    %v719 = vld [vmem:[%s718] ss:$8 sm:$0xf]
    %s720 = scalar_lea.vmem [#allocation2], 195
    %721 = vst.msk [vmem:[%s720] ss:$8 sm:$0xf] %vm57, %v719
    %722 = vst.msk [vmem:[%s720] ss:$8 sm:$0x0] %vm57, %v719
    %s723 = sld [smem:[#allocation4 + $0x34]]
    %s724 = sshra.s32 %s723, 3
    %s725 = sand.u32 %s723, 7
    %s726 = sshra.s32 %s723, 3
    %s727 = sand.u32 %s723, 7
    %s728 = smul.u32 %s724, 4
    %s729 = smul.u32 %s728, 8
    %s730 = sadd.s32 %s729, %s727
    %s731 = scalar_lea.vmem %s1, %s730
    %v732 = vld [vmem:[%s731] ss:$8 sm:$0xf]
    %s733 = scalar_lea.vmem [#allocation2], 196
    %734 = vst.msk [vmem:[%s733] ss:$8 sm:$0xf] %vm57, %v732
    %735 = vst.msk [vmem:[%s733] ss:$8 sm:$0x0] %vm57, %v732
    %s736 = sld [smem:[#allocation4 + $0x35]]
    %s737 = sshra.s32 %s736, 3
    %s738 = sand.u32 %s736, 7
    %s739 = sshra.s32 %s736, 3
    %s740 = sand.u32 %s736, 7
    %s741 = smul.u32 %s737, 4
    %s742 = smul.u32 %s741, 8
    %s743 = sadd.s32 %s742, %s740
    %s744 = scalar_lea.vmem %s1, %s743
    %v745 = vld [vmem:[%s744] ss:$8 sm:$0xf]
    %s746 = scalar_lea.vmem [#allocation2], 197
    %747 = vst.msk [vmem:[%s746] ss:$8 sm:$0xf] %vm57, %v745
    %748 = vst.msk [vmem:[%s746] ss:$8 sm:$0x0] %vm57, %v745
    %s749 = sld [smem:[#allocation4 + $0x36]]
    %s750 = sshra.s32 %s749, 3
    %s751 = sand.u32 %s749, 7
    %s752 = sshra.s32 %s749, 3
    %s753 = sand.u32 %s749, 7
    %s754 = smul.u32 %s750, 4
    %s755 = smul.u32 %s754, 8
    %s756 = sadd.s32 %s755, %s753
    %s757 = scalar_lea.vmem %s1, %s756
    %v758 = vld [vmem:[%s757] ss:$8 sm:$0xf]
    %s759 = scalar_lea.vmem [#allocation2], 198
    %760 = vst.msk [vmem:[%s759] ss:$8 sm:$0xf] %vm57, %v758
    %761 = vst.msk [vmem:[%s759] ss:$8 sm:$0x0] %vm57, %v758
    %s762 = sld [smem:[#allocation4 + $0x37]]
    %s763 = sshra.s32 %s762, 3
    %s764 = sand.u32 %s762, 7
    %s765 = sshra.s32 %s762, 3
    %s766 = sand.u32 %s762, 7
    %s767 = smul.u32 %s763, 4
    %s768 = smul.u32 %s767, 8
    %s769 = sadd.s32 %s768, %s766
    %s770 = scalar_lea.vmem %s1, %s769
    %v771 = vld [vmem:[%s770] ss:$8 sm:$0xf]
    %s772 = scalar_lea.vmem [#allocation2], 199
    %773 = vst.msk [vmem:[%s772] ss:$8 sm:$0xf] %vm57, %v771
    %774 = vst.msk [vmem:[%s772] ss:$8 sm:$0x0] %vm57, %v771
    %s775 = sld [smem:[#allocation4 + $0x38]]
    %s776 = sshra.s32 %s775, 3
    %s777 = sand.u32 %s775, 7
    %s778 = sshra.s32 %s775, 3
    %s779 = sand.u32 %s775, 7
    %s780 = smul.u32 %s776, 4
    %s781 = smul.u32 %s780, 8
    %s782 = sadd.s32 %s781, %s779
    %s783 = scalar_lea.vmem %s1, %s782
    %v784 = vld [vmem:[%s783] ss:$8 sm:$0xf]
    %s785 = scalar_lea.vmem [#allocation2], 224
    %786 = vst.msk [vmem:[%s785] ss:$8 sm:$0xf] %vm57, %v784
    %787 = vst.msk [vmem:[%s785] ss:$8 sm:$0x0] %vm57, %v784
    %s788 = sld [smem:[#allocation4 + $0x39]]
    %s789 = sshra.s32 %s788, 3
    %s790 = sand.u32 %s788, 7
    %s791 = sshra.s32 %s788, 3
    %s792 = sand.u32 %s788, 7
    %s793 = smul.u32 %s789, 4
    %s794 = smul.u32 %s793, 8
    %s795 = sadd.s32 %s794, %s792
    %s796 = scalar_lea.vmem %s1, %s795
    %v797 = vld [vmem:[%s796] ss:$8 sm:$0xf]
    %s798 = scalar_lea.vmem [#allocation2], 225
    %799 = vst.msk [vmem:[%s798] ss:$8 sm:$0xf] %vm57, %v797
    %800 = vst.msk [vmem:[%s798] ss:$8 sm:$0x0] %vm57, %v797
    %s801 = sld [smem:[#allocation4 + $0x3a]]
    %s802 = sshra.s32 %s801, 3
    %s803 = sand.u32 %s801, 7
    %s804 = sshra.s32 %s801, 3
    %s805 = sand.u32 %s801, 7
    %s806 = smul.u32 %s802, 4
    %s807 = smul.u32 %s806, 8
    %s808 = sadd.s32 %s807, %s805
    %s809 = scalar_lea.vmem %s1, %s808
    %v810 = vld [vmem:[%s809] ss:$8 sm:$0xf]
    %s811 = scalar_lea.vmem [#allocation2], 226
    %812 = vst.msk [vmem:[%s811] ss:$8 sm:$0xf] %vm57, %v810
    %813 = vst.msk [vmem:[%s811] ss:$8 sm:$0x0] %vm57, %v810
    %s814 = sld [smem:[#allocation4 + $0x3b]]
    %s815 = sshra.s32 %s814, 3
    %s816 = sand.u32 %s814, 7
    %s817 = sshra.s32 %s814, 3
    %s818 = sand.u32 %s814, 7
    %s819 = smul.u32 %s815, 4
    %s820 = smul.u32 %s819, 8
    %s821 = sadd.s32 %s820, %s818
    %s822 = scalar_lea.vmem %s1, %s821
    %v823 = vld [vmem:[%s822] ss:$8 sm:$0xf]
    %s824 = scalar_lea.vmem [#allocation2], 227
    %825 = vst.msk [vmem:[%s824] ss:$8 sm:$0xf] %vm57, %v823
    %826 = vst.msk [vmem:[%s824] ss:$8 sm:$0x0] %vm57, %v823
    %s827 = sld [smem:[#allocation4 + $0x3c]]
    %s828 = sshra.s32 %s827, 3
    %s829 = sand.u32 %s827, 7
    %s830 = sshra.s32 %s827, 3
    %s831 = sand.u32 %s827, 7
    %s832 = smul.u32 %s828, 4
    %s833 = smul.u32 %s832, 8
    %s834 = sadd.s32 %s833, %s831
    %s835 = scalar_lea.vmem %s1, %s834
    %v836 = vld [vmem:[%s835] ss:$8 sm:$0xf]
    %s837 = scalar_lea.vmem [#allocation2], 228
    %838 = vst.msk [vmem:[%s837] ss:$8 sm:$0xf] %vm57, %v836
    %839 = vst.msk [vmem:[%s837] ss:$8 sm:$0x0] %vm57, %v836
    %s840 = sld [smem:[#allocation4 + $0x3d]]
    %s841 = sshra.s32 %s840, 3
    %s842 = sand.u32 %s840, 7
    %s843 = sshra.s32 %s840, 3
    %s844 = sand.u32 %s840, 7
    %s845 = smul.u32 %s841, 4
    %s846 = smul.u32 %s845, 8
    %s847 = sadd.s32 %s846, %s844
    %s848 = scalar_lea.vmem %s1, %s847
    %v849 = vld [vmem:[%s848] ss:$8 sm:$0xf]
    %s850 = scalar_lea.vmem [#allocation2], 229
    %851 = vst.msk [vmem:[%s850] ss:$8 sm:$0xf] %vm57, %v849
    %852 = vst.msk [vmem:[%s850] ss:$8 sm:$0x0] %vm57, %v849
    %s853 = sld [smem:[#allocation4 + $0x3e]]
    %s854 = sshra.s32 %s853, 3
    %s855 = sand.u32 %s853, 7
    %s856 = sshra.s32 %s853, 3
    %s857 = sand.u32 %s853, 7
    %s858 = smul.u32 %s854, 4
    %s859 = smul.u32 %s858, 8
    %s860 = sadd.s32 %s859, %s857
    %s861 = scalar_lea.vmem %s1, %s860
    %v862 = vld [vmem:[%s861] ss:$8 sm:$0xf]
    %s863 = scalar_lea.vmem [#allocation2], 230
    %864 = vst.msk [vmem:[%s863] ss:$8 sm:$0xf] %vm57, %v862
    %865 = vst.msk [vmem:[%s863] ss:$8 sm:$0x0] %vm57, %v862
    %s866 = sld [smem:[#allocation4 + $0x3f]]
    %s867 = sshra.s32 %s866, 3
    %s868 = sand.u32 %s866, 7
    %s869 = sshra.s32 %s866, 3
    %s870 = sand.u32 %s866, 7
    %s871 = smul.u32 %s867, 4
    %s872 = smul.u32 %s871, 8
    %s873 = sadd.s32 %s872, %s870
    %s874 = scalar_lea.vmem %s1, %s873
    %v875 = vld [vmem:[%s874] ss:$8 sm:$0xf]
    %s876 = scalar_lea.vmem [#allocation2], 231
    %877 = vst.msk [vmem:[%s876] ss:$8 sm:$0xf] %vm57, %v875
    %878 = vst.msk [vmem:[%s876] ss:$8 sm:$0x0] %vm57, %v875
    %v879 = vld [vmem:[%s5] sm:$0xff]
    %v880 = vld [vmem:[%s6] sm:$0xff]
    %s881 = smul.u32 0, 4
    %s882 = smul.addr %s881, 8
    %s883 = scalar_lea.vmem [#allocation2], %s882
    %v884 = vld [vmem:[%s883] sm:$0xff]
    %v885 = vld [vmem:[%s883 + $0x8] sm:$0xff]
    %v886 = vld [vmem:[%s883 + $0x10] sm:$0xff]
    %v887 = vld [vmem:[%s883 + $0x18] sm:$0xff]
    %v888 = vpack.c.bf16 %v879, %v879
    %v889 = vld [vmem:[%s2] sm:$0xff]
    %v890 = vld [vmem:[%s2 + $0x8] sm:$0xff]
    %v891 = vld [vmem:[%s2 + $0x10] sm:$0xff]
    %v892 = vld [vmem:[%s2 + $0x18] sm:$0xff]
    %v893 = vld [vmem:[%s2 + $0x20] sm:$0xff]
    %v894 = vld [vmem:[%s2 + $0x28] sm:$0xff]
    %v895 = vld [vmem:[%s2 + $0x30] sm:$0xff]
    %v896 = vld [vmem:[%s2 + $0x38] sm:$0xff]
    %v897 = vld [vmem:[%s2 + $0x40] sm:$0xff]
    %v898 = vld [vmem:[%s2 + $0x48] sm:$0xff]
    %v899 = vld [vmem:[%s2 + $0x50] sm:$0xff]
    %v900 = vld [vmem:[%s2 + $0x58] sm:$0xff]
    %v901 = vld [vmem:[%s2 + $0x60] sm:$0xff]
    %v902 = vld [vmem:[%s2 + $0x68] sm:$0xff]
    %v903 = vld [vmem:[%s2 + $0x70] sm:$0xff]
    %v904 = vld [vmem:[%s2 + $0x78] sm:$0xff]
    %v905 = vld [vmem:[%s2 + $0x80] sm:$0xff]
    %v906 = vld [vmem:[%s2 + $0x88] sm:$0xff]
    %v907 = vld [vmem:[%s2 + $0x90] sm:$0xff]
    %v908 = vld [vmem:[%s2 + $0x98] sm:$0xff]
    %v909 = vld [vmem:[%s2 + $0xa0] sm:$0xff]
    %v910 = vld [vmem:[%s2 + $0xa8] sm:$0xff]
    %v911 = vld [vmem:[%s2 + $0xb0] sm:$0xff]
    %v912 = vld [vmem:[%s2 + $0xb8] sm:$0xff]
    %v913 = vld [vmem:[%s2 + $0xc0] sm:$0xff]
    %v914 = vld [vmem:[%s2 + $0xc8] sm:$0xff]
    %v915 = vld [vmem:[%s2 + $0xd0] sm:$0xff]
    %v916 = vld [vmem:[%s2 + $0xd8] sm:$0xff]
    %v917 = vld [vmem:[%s2 + $0xe0] sm:$0xff]
    %v918 = vld [vmem:[%s2 + $0xe8] sm:$0xff]
    %v919 = vld [vmem:[%s2 + $0xf0] sm:$0xff]
    %v920 = vld [vmem:[%s2 + $0xf8] sm:$0xff]
    %v953 = vunpack.c.l.b16 %v889
    %v954 = vunpack.c.h.b16 %v889
    %v955 = vunpack.c.l.b16 %v890
    %v956 = vunpack.c.h.b16 %v890
    %v957 = vunpack.c.l.b16 %v891
    %v958 = vunpack.c.h.b16 %v891
    %v959 = vunpack.c.l.b16 %v892
    %v960 = vunpack.c.h.b16 %v892
    %v961 = vunpack.c.l.b16 %v893
    %v962 = vunpack.c.h.b16 %v893
    %v963 = vunpack.c.l.b16 %v894
    %v964 = vunpack.c.h.b16 %v894
    %v965 = vunpack.c.l.b16 %v895
    %v966 = vunpack.c.h.b16 %v895
    %v967 = vunpack.c.l.b16 %v896
    %v968 = vunpack.c.h.b16 %v896
    %v969 = vunpack.c.l.b16 %v897
    %v970 = vunpack.c.h.b16 %v897
    %v971 = vunpack.c.l.b16 %v898
    %v972 = vunpack.c.h.b16 %v898
    %v973 = vunpack.c.l.b16 %v899
    %v974 = vunpack.c.h.b16 %v899
    %v975 = vunpack.c.l.b16 %v900
    %v976 = vunpack.c.h.b16 %v900
    %v977 = vunpack.c.l.b16 %v901
    %v978 = vunpack.c.h.b16 %v901
    %v979 = vunpack.c.l.b16 %v902
    %v980 = vunpack.c.h.b16 %v902
    %v981 = vunpack.c.l.b16 %v903
    %v982 = vunpack.c.h.b16 %v903
    %v983 = vunpack.c.l.b16 %v904
    %v984 = vunpack.c.h.b16 %v904
    %v985 = vunpack.c.l.b16 %v905
    %v986 = vunpack.c.h.b16 %v905
    %v987 = vunpack.c.l.b16 %v906
    %v988 = vunpack.c.h.b16 %v906
    %v989 = vunpack.c.l.b16 %v907
    %v990 = vunpack.c.h.b16 %v907
    %v991 = vunpack.c.l.b16 %v908
    %v992 = vunpack.c.h.b16 %v908
    %v993 = vunpack.c.l.b16 %v909
    %v994 = vunpack.c.h.b16 %v909
    %v995 = vunpack.c.l.b16 %v910
    %v996 = vunpack.c.h.b16 %v910
    %v997 = vunpack.c.l.b16 %v911
    %v998 = vunpack.c.h.b16 %v911
    %v999 = vunpack.c.l.b16 %v912
    %v1000 = vunpack.c.h.b16 %v912
    %v1001 = vunpack.c.l.b16 %v913
    %v1002 = vunpack.c.h.b16 %v913
    %v1003 = vunpack.c.l.b16 %v914
    %v1004 = vunpack.c.h.b16 %v914
    %v1005 = vunpack.c.l.b16 %v915
    %v1006 = vunpack.c.h.b16 %v915
    %v1007 = vunpack.c.l.b16 %v916
    %v1008 = vunpack.c.h.b16 %v916
    %v1009 = vunpack.c.l.b16 %v917
    %v1010 = vunpack.c.h.b16 %v917
    %v1011 = vunpack.c.l.b16 %v918
    %v1012 = vunpack.c.h.b16 %v918
    %v1013 = vunpack.c.l.b16 %v919
    %v1014 = vunpack.c.h.b16 %v919
    %v1015 = vunpack.c.l.b16 %v920
    %v1016 = vunpack.c.h.b16 %v920
    %v1017 = vpack.c.b16 %v957, %v953
    %v1018 = vpack.c.b16 %v958, %v954
    %v1019 = vpack.c.b16 %v959, %v955
    %v1020 = vpack.c.b16 %v960, %v956
    %v1021 = vpack.c.b16 %v965, %v961
    %v1022 = vpack.c.b16 %v966, %v962
    %v1023 = vpack.c.b16 %v967, %v963
    %v1024 = vpack.c.b16 %v968, %v964
    %v1025 = vpack.c.b16 %v973, %v969
    %v1026 = vpack.c.b16 %v974, %v970
    %v1027 = vpack.c.b16 %v975, %v971
    %v1028 = vpack.c.b16 %v976, %v972
    %v1029 = vpack.c.b16 %v981, %v977
    %v1030 = vpack.c.b16 %v982, %v978
    %v1031 = vpack.c.b16 %v983, %v979
    %v1032 = vpack.c.b16 %v984, %v980
    %v1033 = vpack.c.b16 %v989, %v985
    %v1034 = vpack.c.b16 %v990, %v986
    %v1035 = vpack.c.b16 %v991, %v987
    %v1036 = vpack.c.b16 %v992, %v988
    %v1037 = vpack.c.b16 %v997, %v993
    %v1038 = vpack.c.b16 %v998, %v994
    %v1039 = vpack.c.b16 %v999, %v995
    %v1040 = vpack.c.b16 %v1000, %v996
    %v1041 = vpack.c.b16 %v1005, %v1001
    %v1042 = vpack.c.b16 %v1006, %v1002
    %v1043 = vpack.c.b16 %v1007, %v1003
    %v1044 = vpack.c.b16 %v1008, %v1004
    %v1045 = vpack.c.b16 %v1013, %v1009
    %v1046 = vpack.c.b16 %v1014, %v1010
    %v1047 = vpack.c.b16 %v1015, %v1011
    %v1048 = vpack.c.b16 %v1016, %v1012
    %1081 = vmatprep.subr.bf16.mxu0 %v1046
    %1082 = vmatpush1.bf16.msra.mxu0 %v1045
    %1083 = vmatprep.subr.bf16.mxu0 %v1042
    %1084 = vmatpush1.bf16.msra.mxu0 %v1041
    %1085 = vmatprep.subr.bf16.mxu0 %v1038
    %1086 = vmatpush1.bf16.msra.mxu0 %v1037
    %1087 = vmatprep.subr.bf16.mxu0 %v1034
    %1088 = vmatpush1.bf16.msra.mxu0 %v1033
    %1089 = vmatprep.subr.bf16.mxu0 %v1030
    %1090 = vmatpush1.bf16.msra.mxu0 %v1029
    %1091 = vmatprep.subr.bf16.mxu0 %v1026
    %1092 = vmatpush1.bf16.msra.mxu0 %v1025
    %1093 = vmatprep.subr.bf16.mxu0 %v1022
    %1094 = vmatpush1.bf16.msra.mxu0 %v1021
    %1095 = vmatprep.subr.bf16.mxu0 %v1018
    %1096 = vmatpush1.bf16.msra.mxu0 %v1017
    %1097 = vmatprep.subr.bf16.mxu0 0
    %1098 = vmatpush2.bf16.msra.mxu0 0
    %1099 = vmatprep.subr.bf16.mxu0 0
    %1100 = vmatpush2.bf16.msra.mxu0 0
    %1101 = vmatprep.subr.bf16.mxu0 0
    %1102 = vmatpush2.bf16.msra.mxu0 0
    %1103 = vmatprep.subr.bf16.mxu0 0
    %1104 = vmatpush2.bf16.msra.mxu0 0
    %1105 = vmatprep.subr.bf16.mxu0 0
    %1106 = vmatpush2.bf16.msra.mxu0 0
    %1107 = vmatprep.subr.bf16.mxu0 0
    %1108 = vmatpush2.bf16.msra.mxu0 0
    %1109 = vmatprep.subr.bf16.mxu0 0
    %1110 = vmatpush2.bf16.msra.mxu0 0
    %1111 = vmatprep.subr.bf16.mxu0 0
    %1112 = vmatpush2.bf16.msra.mxu0 0
    %1113 = vmatprep.mubr.bf16.mxu0 0
    %1114 = vmatmul.mubr.bf16.gmra.mxu0 %v888
    %v1115 = vpop.f32.mrf.mxu0
    %v1116 = vadd.f32 0.0, %v1115
    %v1117 = vpop.f32.mrf.mxu0
    %v1118 = vadd.f32 0.0, %v1117
    %v1119 = vpop.f32.mrf.mxu0
    %v1120 = vpop.f32.mrf.mxu0
    %1121 = vdwg.mxu0
    %1122 = vmatprep.subr.bf16.mxu0 %v1048
    %1123 = vmatpush1.bf16.msra.mxu0 %v1047
    %1124 = vmatprep.subr.bf16.mxu0 %v1044
    %1125 = vmatpush1.bf16.msra.mxu0 %v1043
    %1126 = vmatprep.subr.bf16.mxu0 %v1040
    %1127 = vmatpush1.bf16.msra.mxu0 %v1039
    %1128 = vmatprep.subr.bf16.mxu0 %v1036
    %1129 = vmatpush1.bf16.msra.mxu0 %v1035
    %1130 = vmatprep.subr.bf16.mxu0 %v1032
    %1131 = vmatpush1.bf16.msra.mxu0 %v1031
    %1132 = vmatprep.subr.bf16.mxu0 %v1028
    %1133 = vmatpush1.bf16.msra.mxu0 %v1027
    %1134 = vmatprep.subr.bf16.mxu0 %v1024
    %1135 = vmatpush1.bf16.msra.mxu0 %v1023
    %1136 = vmatprep.subr.bf16.mxu0 %v1020
    %1137 = vmatpush1.bf16.msra.mxu0 %v1019
    %1138 = vmatprep.subr.bf16.mxu0 0
    %1139 = vmatpush2.bf16.msra.mxu0 0
    %1140 = vmatprep.subr.bf16.mxu0 0
    %1141 = vmatpush2.bf16.msra.mxu0 0
    %1142 = vmatprep.subr.bf16.mxu0 0
    %1143 = vmatpush2.bf16.msra.mxu0 0
    %1144 = vmatprep.subr.bf16.mxu0 0
    %1145 = vmatpush2.bf16.msra.mxu0 0
    %1146 = vmatprep.subr.bf16.mxu0 0
    %1147 = vmatpush2.bf16.msra.mxu0 0
    %1148 = vmatprep.subr.bf16.mxu0 0
    %1149 = vmatpush2.bf16.msra.mxu0 0
    %1150 = vmatprep.subr.bf16.mxu0 0
    %1151 = vmatpush2.bf16.msra.mxu0 0
    %1152 = vmatprep.subr.bf16.mxu0 0
    %1153 = vmatpush2.bf16.msra.mxu0 0
    %1154 = vmatprep.mubr.bf16.mxu0 0
    %1155 = vmatmul.mubr.bf16.gmra.mxu0 %v888
    %v1156 = vpop.f32.mrf.mxu0
    %v1157 = vadd.f32 0.0, %v1156
    %v1158 = vpop.f32.mrf.mxu0
    %v1159 = vadd.f32 0.0, %v1158
    %v1160 = vpop.f32.mrf.mxu0
    %v1161 = vpop.f32.mrf.mxu0
    %1162 = vdwg.mxu0
    %v1163 = vadd.f32 %v884, %v1116
    %v1164 = vadd.f32 %v885, %v1118
    %v1165 = vadd.f32 %v886, %v1157
    %v1166 = vadd.f32 %v887, %v1159
    %v1167 = vxor.u32 %v1163, 2147483648
    %v1168 = vmul.f32 %v1167, 1.442695
    %v1169 = vpow.pop %v1168
    %v1170 = vadd.f32 %v1169, 1.0
    %v1171 = vrcp.pop %v1170
    %v1172 = vmul.f32 1.0, %v1171
    %v1173 = vxor.u32 %v1164, 2147483648
    %v1174 = vmul.f32 %v1173, 1.442695
    %v1175 = vpow.pop %v1174
    %v1176 = vadd.f32 %v1175, 1.0
    %v1177 = vrcp.pop %v1176
    %v1178 = vmul.f32 1.0, %v1177
    %v1179 = vtanh.pop %v1165
    %v1180 = vxor.u32 %v1166, 2147483648
    %v1181 = vmul.f32 %v1180, 1.442695
    %v1182 = vpow.pop %v1181
    %v1183 = vadd.f32 %v1182, 1.0
    %v1184 = vrcp.pop %v1183
    %v1185 = vmul.f32 1.0, %v1184
    %v1186 = vmul.f32 %v1178, %v880
    %v1187 = vmul.f32 %v1172, %v1179
    %v1188 = vadd.f32 %v1186, %v1187
    %v1189 = vtanh.pop %v1188
    %v1190 = vmul.f32 %v1185, %v1189
    %1191 = vst [vmem:[#allocation3] sm:$0xff] %v1190
    %s1192 = smul.u32 1, 4
    %s1193 = smul.addr %s1192, 8
    %s1194 = scalar_lea.vmem [#allocation2], %s1193
    %v1195 = vld [vmem:[%s1194] sm:$0xff]
    %v1196 = vld [vmem:[%s1194 + $0x8] sm:$0xff]
    %v1197 = vld [vmem:[%s1194 + $0x10] sm:$0xff]
    %v1198 = vld [vmem:[%s1194 + $0x18] sm:$0xff]
    %v1199 = vpack.c.bf16 %v1190, %v1190
    %v1200 = vld [vmem:[%s2] sm:$0xff]
    %v1201 = vld [vmem:[%s2 + $0x8] sm:$0xff]
    %v1202 = vld [vmem:[%s2 + $0x10] sm:$0xff]
    %v1203 = vld [vmem:[%s2 + $0x18] sm:$0xff]
    %v1204 = vld [vmem:[%s2 + $0x20] sm:$0xff]
    %v1205 = vld [vmem:[%s2 + $0x28] sm:$0xff]
    %v1206 = vld [vmem:[%s2 + $0x30] sm:$0xff]
    %v1207 = vld [vmem:[%s2 + $0x38] sm:$0xff]
    %v1208 = vld [vmem:[%s2 + $0x40] sm:$0xff]
    %v1209 = vld [vmem:[%s2 + $0x48] sm:$0xff]
    %v1210 = vld [vmem:[%s2 + $0x50] sm:$0xff]
    %v1211 = vld [vmem:[%s2 + $0x58] sm:$0xff]
    %v1212 = vld [vmem:[%s2 + $0x60] sm:$0xff]
    %v1213 = vld [vmem:[%s2 + $0x68] sm:$0xff]
    %v1214 = vld [vmem:[%s2 + $0x70] sm:$0xff]
    %v1215 = vld [vmem:[%s2 + $0x78] sm:$0xff]
    %v1216 = vld [vmem:[%s2 + $0x80] sm:$0xff]
    %v1217 = vld [vmem:[%s2 + $0x88] sm:$0xff]
    %v1218 = vld [vmem:[%s2 + $0x90] sm:$0xff]
    %v1219 = vld [vmem:[%s2 + $0x98] sm:$0xff]
    %v1220 = vld [vmem:[%s2 + $0xa0] sm:$0xff]
    %v1221 = vld [vmem:[%s2 + $0xa8] sm:$0xff]
    %v1222 = vld [vmem:[%s2 + $0xb0] sm:$0xff]
    %v1223 = vld [vmem:[%s2 + $0xb8] sm:$0xff]
    %v1224 = vld [vmem:[%s2 + $0xc0] sm:$0xff]
    %v1225 = vld [vmem:[%s2 + $0xc8] sm:$0xff]
    %v1226 = vld [vmem:[%s2 + $0xd0] sm:$0xff]
    %v1227 = vld [vmem:[%s2 + $0xd8] sm:$0xff]
    %v1228 = vld [vmem:[%s2 + $0xe0] sm:$0xff]
    %v1229 = vld [vmem:[%s2 + $0xe8] sm:$0xff]
    %v1230 = vld [vmem:[%s2 + $0xf0] sm:$0xff]
    %v1231 = vld [vmem:[%s2 + $0xf8] sm:$0xff]
    %v1264 = vunpack.c.l.b16 %v1200
    %v1265 = vunpack.c.h.b16 %v1200
    %v1266 = vunpack.c.l.b16 %v1201
    %v1267 = vunpack.c.h.b16 %v1201
    %v1268 = vunpack.c.l.b16 %v1202
    %v1269 = vunpack.c.h.b16 %v1202
    %v1270 = vunpack.c.l.b16 %v1203
    %v1271 = vunpack.c.h.b16 %v1203
    %v1272 = vunpack.c.l.b16 %v1204
    %v1273 = vunpack.c.h.b16 %v1204
    %v1274 = vunpack.c.l.b16 %v1205
    %v1275 = vunpack.c.h.b16 %v1205
    %v1276 = vunpack.c.l.b16 %v1206
    %v1277 = vunpack.c.h.b16 %v1206
    %v1278 = vunpack.c.l.b16 %v1207
    %v1279 = vunpack.c.h.b16 %v1207
    %v1280 = vunpack.c.l.b16 %v1208
    %v1281 = vunpack.c.h.b16 %v1208
    %v1282 = vunpack.c.l.b16 %v1209
    %v1283 = vunpack.c.h.b16 %v1209
    %v1284 = vunpack.c.l.b16 %v1210
    %v1285 = vunpack.c.h.b16 %v1210
    %v1286 = vunpack.c.l.b16 %v1211
    %v1287 = vunpack.c.h.b16 %v1211
    %v1288 = vunpack.c.l.b16 %v1212
    %v1289 = vunpack.c.h.b16 %v1212
    %v1290 = vunpack.c.l.b16 %v1213
    %v1291 = vunpack.c.h.b16 %v1213
    %v1292 = vunpack.c.l.b16 %v1214
    %v1293 = vunpack.c.h.b16 %v1214
    %v1294 = vunpack.c.l.b16 %v1215
    %v1295 = vunpack.c.h.b16 %v1215
    %v1296 = vunpack.c.l.b16 %v1216
    %v1297 = vunpack.c.h.b16 %v1216
    %v1298 = vunpack.c.l.b16 %v1217
    %v1299 = vunpack.c.h.b16 %v1217
    %v1300 = vunpack.c.l.b16 %v1218
    %v1301 = vunpack.c.h.b16 %v1218
    %v1302 = vunpack.c.l.b16 %v1219
    %v1303 = vunpack.c.h.b16 %v1219
    %v1304 = vunpack.c.l.b16 %v1220
    %v1305 = vunpack.c.h.b16 %v1220
    %v1306 = vunpack.c.l.b16 %v1221
    %v1307 = vunpack.c.h.b16 %v1221
    %v1308 = vunpack.c.l.b16 %v1222
    %v1309 = vunpack.c.h.b16 %v1222
    %v1310 = vunpack.c.l.b16 %v1223
    %v1311 = vunpack.c.h.b16 %v1223
    %v1312 = vunpack.c.l.b16 %v1224
    %v1313 = vunpack.c.h.b16 %v1224
    %v1314 = vunpack.c.l.b16 %v1225
    %v1315 = vunpack.c.h.b16 %v1225
    %v1316 = vunpack.c.l.b16 %v1226
    %v1317 = vunpack.c.h.b16 %v1226
    %v1318 = vunpack.c.l.b16 %v1227
    %v1319 = vunpack.c.h.b16 %v1227
    %v1320 = vunpack.c.l.b16 %v1228
    %v1321 = vunpack.c.h.b16 %v1228
    %v1322 = vunpack.c.l.b16 %v1229
    %v1323 = vunpack.c.h.b16 %v1229
    %v1324 = vunpack.c.l.b16 %v1230
    %v1325 = vunpack.c.h.b16 %v1230
    %v1326 = vunpack.c.l.b16 %v1231
    %v1327 = vunpack.c.h.b16 %v1231
    %v1328 = vpack.c.b16 %v1268, %v1264
    %v1329 = vpack.c.b16 %v1269, %v1265
    %v1330 = vpack.c.b16 %v1270, %v1266
    %v1331 = vpack.c.b16 %v1271, %v1267
    %v1332 = vpack.c.b16 %v1276, %v1272
    %v1333 = vpack.c.b16 %v1277, %v1273
    %v1334 = vpack.c.b16 %v1278, %v1274
    %v1335 = vpack.c.b16 %v1279, %v1275
    %v1336 = vpack.c.b16 %v1284, %v1280
    %v1337 = vpack.c.b16 %v1285, %v1281
    %v1338 = vpack.c.b16 %v1286, %v1282
    %v1339 = vpack.c.b16 %v1287, %v1283
    %v1340 = vpack.c.b16 %v1292, %v1288
    %v1341 = vpack.c.b16 %v1293, %v1289
    %v1342 = vpack.c.b16 %v1294, %v1290
    %v1343 = vpack.c.b16 %v1295, %v1291
    %v1344 = vpack.c.b16 %v1300, %v1296
    %v1345 = vpack.c.b16 %v1301, %v1297
    %v1346 = vpack.c.b16 %v1302, %v1298
    %v1347 = vpack.c.b16 %v1303, %v1299
    %v1348 = vpack.c.b16 %v1308, %v1304
    %v1349 = vpack.c.b16 %v1309, %v1305
    %v1350 = vpack.c.b16 %v1310, %v1306
    %v1351 = vpack.c.b16 %v1311, %v1307
    %v1352 = vpack.c.b16 %v1316, %v1312
    %v1353 = vpack.c.b16 %v1317, %v1313
    %v1354 = vpack.c.b16 %v1318, %v1314
    %v1355 = vpack.c.b16 %v1319, %v1315
    %v1356 = vpack.c.b16 %v1324, %v1320
    %v1357 = vpack.c.b16 %v1325, %v1321
    %v1358 = vpack.c.b16 %v1326, %v1322
    %v1359 = vpack.c.b16 %v1327, %v1323
    %1392 = vmatprep.subr.bf16.mxu0 %v1357
    %1393 = vmatpush1.bf16.msra.mxu0 %v1356
    %1394 = vmatprep.subr.bf16.mxu0 %v1353
    %1395 = vmatpush1.bf16.msra.mxu0 %v1352
    %1396 = vmatprep.subr.bf16.mxu0 %v1349
    %1397 = vmatpush1.bf16.msra.mxu0 %v1348
    %1398 = vmatprep.subr.bf16.mxu0 %v1345
    %1399 = vmatpush1.bf16.msra.mxu0 %v1344
    %1400 = vmatprep.subr.bf16.mxu0 %v1341
    %1401 = vmatpush1.bf16.msra.mxu0 %v1340
    %1402 = vmatprep.subr.bf16.mxu0 %v1337
    %1403 = vmatpush1.bf16.msra.mxu0 %v1336
    %1404 = vmatprep.subr.bf16.mxu0 %v1333
    %1405 = vmatpush1.bf16.msra.mxu0 %v1332
    %1406 = vmatprep.subr.bf16.mxu0 %v1329
    %1407 = vmatpush1.bf16.msra.mxu0 %v1328
    %1408 = vmatprep.subr.bf16.mxu0 0
    %1409 = vmatpush2.bf16.msra.mxu0 0
    %1410 = vmatprep.subr.bf16.mxu0 0
    %1411 = vmatpush2.bf16.msra.mxu0 0
    %1412 = vmatprep.subr.bf16.mxu0 0
    %1413 = vmatpush2.bf16.msra.mxu0 0
    %1414 = vmatprep.subr.bf16.mxu0 0
    %1415 = vmatpush2.bf16.msra.mxu0 0
    %1416 = vmatprep.subr.bf16.mxu0 0
    %1417 = vmatpush2.bf16.msra.mxu0 0
    %1418 = vmatprep.subr.bf16.mxu0 0
    %1419 = vmatpush2.bf16.msra.mxu0 0
    %1420 = vmatprep.subr.bf16.mxu0 0
    %1421 = vmatpush2.bf16.msra.mxu0 0
    %1422 = vmatprep.subr.bf16.mxu0 0
    %1423 = vmatpush2.bf16.msra.mxu0 0
    %1424 = vmatprep.mubr.bf16.mxu0 0
    %1425 = vmatmul.mubr.bf16.gmra.mxu0 %v1199
    %v1426 = vpop.f32.mrf.mxu0
    %v1427 = vadd.f32 0.0, %v1426
    %v1428 = vpop.f32.mrf.mxu0
    %v1429 = vadd.f32 0.0, %v1428
    %v1430 = vpop.f32.mrf.mxu0
    %v1431 = vpop.f32.mrf.mxu0
    %1432 = vdwg.mxu0
    %1433 = vmatprep.subr.bf16.mxu0 %v1359
    %1434 = vmatpush1.bf16.msra.mxu0 %v1358
    %1435 = vmatprep.subr.bf16.mxu0 %v1355
    %1436 = vmatpush1.bf16.msra.mxu0 %v1354
    %1437 = vmatprep.subr.bf16.mxu0 %v1351
    %1438 = vmatpush1.bf16.msra.mxu0 %v1350
    %1439 = vmatprep.subr.bf16.mxu0 %v1347
    %1440 = vmatpush1.bf16.msra.mxu0 %v1346
    %1441 = vmatprep.subr.bf16.mxu0 %v1343
    %1442 = vmatpush1.bf16.msra.mxu0 %v1342
    %1443 = vmatprep.subr.bf16.mxu0 %v1339
    %1444 = vmatpush1.bf16.msra.mxu0 %v1338
    %1445 = vmatprep.subr.bf16.mxu0 %v1335
    %1446 = vmatpush1.bf16.msra.mxu0 %v1334
    %1447 = vmatprep.subr.bf16.mxu0 %v1331
    %1448 = vmatpush1.bf16.msra.mxu0 %v1330
    %1449 = vmatprep.subr.bf16.mxu0 0
    %1450 = vmatpush2.bf16.msra.mxu0 0
    %1451 = vmatprep.subr.bf16.mxu0 0
    %1452 = vmatpush2.bf16.msra.mxu0 0
    %1453 = vmatprep.subr.bf16.mxu0 0
    %1454 = vmatpush2.bf16.msra.mxu0 0
    %1455 = vmatprep.subr.bf16.mxu0 0
    %1456 = vmatpush2.bf16.msra.mxu0 0
    %1457 = vmatprep.subr.bf16.mxu0 0
    %1458 = vmatpush2.bf16.msra.mxu0 0
    %1459 = vmatprep.subr.bf16.mxu0 0
    %1460 = vmatpush2.bf16.msra.mxu0 0
    %1461 = vmatprep.subr.bf16.mxu0 0
    %1462 = vmatpush2.bf16.msra.mxu0 0
    %1463 = vmatprep.subr.bf16.mxu0 0
    %1464 = vmatpush2.bf16.msra.mxu0 0
    %1465 = vmatprep.mubr.bf16.mxu0 0
    %1466 = vmatmul.mubr.bf16.gmra.mxu0 %v1199
    %v1467 = vpop.f32.mrf.mxu0
    %v1468 = vadd.f32 0.0, %v1467
    %v1469 = vpop.f32.mrf.mxu0
    %v1470 = vadd.f32 0.0, %v1469
    %v1471 = vpop.f32.mrf.mxu0
    %v1472 = vpop.f32.mrf.mxu0
    %1473 = vdwg.mxu0
    %v1474 = vadd.f32 %v1195, %v1427
    %v1475 = vadd.f32 %v1196, %v1429
    %v1476 = vadd.f32 %v1197, %v1468
    %v1477 = vadd.f32 %v1198, %v1470
    %v1478 = vxor.u32 %v1474, 2147483648
    %v1479 = vmul.f32 %v1478, 1.442695
    %v1480 = vpow.pop %v1479
    %v1481 = vadd.f32 %v1480, 1.0
    %v1482 = vrcp.pop %v1481
    %v1483 = vmul.f32 1.0, %v1482
    %v1484 = vxor.u32 %v1475, 2147483648
    %v1485 = vmul.f32 %v1484, 1.442695
    %v1486 = vpow.pop %v1485
    %v1487 = vadd.f32 %v1486, 1.0
    %v1488 = vrcp.pop %v1487
    %v1489 = vmul.f32 1.0, %v1488
    %v1490 = vtanh.pop %v1476
    %v1491 = vxor.u32 %v1477, 2147483648
    %v1492 = vmul.f32 %v1491, 1.442695
    %v1493 = vpow.pop %v1492
    %v1494 = vadd.f32 %v1493, 1.0
    %v1495 = vrcp.pop %v1494
    %v1496 = vmul.f32 1.0, %v1495
    %v1497 = vmul.f32 %v1489, %v1188
    %v1498 = vmul.f32 %v1483, %v1490
    %v1499 = vadd.f32 %v1497, %v1498
    %v1500 = vtanh.pop %v1499
    %v1501 = vmul.f32 %v1496, %v1500
    %s1502 = scalar_lea.vmem [#allocation3], 8
    %1503 = vst [vmem:[%s1502] sm:$0xff] %v1501
    %s1504 = smul.u32 2, 4
    %s1505 = smul.addr %s1504, 8
    %s1506 = scalar_lea.vmem [#allocation2], %s1505
    %v1507 = vld [vmem:[%s1506] sm:$0xff]
    %v1508 = vld [vmem:[%s1506 + $0x8] sm:$0xff]
    %v1509 = vld [vmem:[%s1506 + $0x10] sm:$0xff]
    %v1510 = vld [vmem:[%s1506 + $0x18] sm:$0xff]
    %v1511 = vpack.c.bf16 %v1501, %v1501
    %v1512 = vld [vmem:[%s2] sm:$0xff]
    %v1513 = vld [vmem:[%s2 + $0x8] sm:$0xff]
    %v1514 = vld [vmem:[%s2 + $0x10] sm:$0xff]
    %v1515 = vld [vmem:[%s2 + $0x18] sm:$0xff]
    %v1516 = vld [vmem:[%s2 + $0x20] sm:$0xff]
    %v1517 = vld [vmem:[%s2 + $0x28] sm:$0xff]
    %v1518 = vld [vmem:[%s2 + $0x30] sm:$0xff]
    %v1519 = vld [vmem:[%s2 + $0x38] sm:$0xff]
    %v1520 = vld [vmem:[%s2 + $0x40] sm:$0xff]
    %v1521 = vld [vmem:[%s2 + $0x48] sm:$0xff]
    %v1522 = vld [vmem:[%s2 + $0x50] sm:$0xff]
    %v1523 = vld [vmem:[%s2 + $0x58] sm:$0xff]
    %v1524 = vld [vmem:[%s2 + $0x60] sm:$0xff]
    %v1525 = vld [vmem:[%s2 + $0x68] sm:$0xff]
    %v1526 = vld [vmem:[%s2 + $0x70] sm:$0xff]
    %v1527 = vld [vmem:[%s2 + $0x78] sm:$0xff]
    %v1528 = vld [vmem:[%s2 + $0x80] sm:$0xff]
    %v1529 = vld [vmem:[%s2 + $0x88] sm:$0xff]
    %v1530 = vld [vmem:[%s2 + $0x90] sm:$0xff]
    %v1531 = vld [vmem:[%s2 + $0x98] sm:$0xff]
    %v1532 = vld [vmem:[%s2 + $0xa0] sm:$0xff]
    %v1533 = vld [vmem:[%s2 + $0xa8] sm:$0xff]
    %v1534 = vld [vmem:[%s2 + $0xb0] sm:$0xff]
    %v1535 = vld [vmem:[%s2 + $0xb8] sm:$0xff]
    %v1536 = vld [vmem:[%s2 + $0xc0] sm:$0xff]
    %v1537 = vld [vmem:[%s2 + $0xc8] sm:$0xff]
    %v1538 = vld [vmem:[%s2 + $0xd0] sm:$0xff]
    %v1539 = vld [vmem:[%s2 + $0xd8] sm:$0xff]
    %v1540 = vld [vmem:[%s2 + $0xe0] sm:$0xff]
    %v1541 = vld [vmem:[%s2 + $0xe8] sm:$0xff]
    %v1542 = vld [vmem:[%s2 + $0xf0] sm:$0xff]
    %v1543 = vld [vmem:[%s2 + $0xf8] sm:$0xff]
    %v1576 = vunpack.c.l.b16 %v1512
    %v1577 = vunpack.c.h.b16 %v1512
    %v1578 = vunpack.c.l.b16 %v1513
    %v1579 = vunpack.c.h.b16 %v1513
    %v1580 = vunpack.c.l.b16 %v1514
    %v1581 = vunpack.c.h.b16 %v1514
    %v1582 = vunpack.c.l.b16 %v1515
    %v1583 = vunpack.c.h.b16 %v1515
    %v1584 = vunpack.c.l.b16 %v1516
    %v1585 = vunpack.c.h.b16 %v1516
    %v1586 = vunpack.c.l.b16 %v1517
    %v1587 = vunpack.c.h.b16 %v1517
    %v1588 = vunpack.c.l.b16 %v1518
    %v1589 = vunpack.c.h.b16 %v1518
    %v1590 = vunpack.c.l.b16 %v1519
    %v1591 = vunpack.c.h.b16 %v1519
    %v1592 = vunpack.c.l.b16 %v1520
    %v1593 = vunpack.c.h.b16 %v1520
    %v1594 = vunpack.c.l.b16 %v1521
    %v1595 = vunpack.c.h.b16 %v1521
    %v1596 = vunpack.c.l.b16 %v1522
    %v1597 = vunpack.c.h.b16 %v1522
    %v1598 = vunpack.c.l.b16 %v1523
    %v1599 = vunpack.c.h.b16 %v1523
    %v1600 = vunpack.c.l.b16 %v1524
    %v1601 = vunpack.c.h.b16 %v1524
    %v1602 = vunpack.c.l.b16 %v1525
    %v1603 = vunpack.c.h.b16 %v1525
    %v1604 = vunpack.c.l.b16 %v1526
    %v1605 = vunpack.c.h.b16 %v1526
    %v1606 = vunpack.c.l.b16 %v1527
    %v1607 = vunpack.c.h.b16 %v1527
    %v1608 = vunpack.c.l.b16 %v1528
    %v1609 = vunpack.c.h.b16 %v1528
    %v1610 = vunpack.c.l.b16 %v1529
    %v1611 = vunpack.c.h.b16 %v1529
    %v1612 = vunpack.c.l.b16 %v1530
    %v1613 = vunpack.c.h.b16 %v1530
    %v1614 = vunpack.c.l.b16 %v1531
    %v1615 = vunpack.c.h.b16 %v1531
    %v1616 = vunpack.c.l.b16 %v1532
    %v1617 = vunpack.c.h.b16 %v1532
    %v1618 = vunpack.c.l.b16 %v1533
    %v1619 = vunpack.c.h.b16 %v1533
    %v1620 = vunpack.c.l.b16 %v1534
    %v1621 = vunpack.c.h.b16 %v1534
    %v1622 = vunpack.c.l.b16 %v1535
    %v1623 = vunpack.c.h.b16 %v1535
    %v1624 = vunpack.c.l.b16 %v1536
    %v1625 = vunpack.c.h.b16 %v1536
    %v1626 = vunpack.c.l.b16 %v1537
    %v1627 = vunpack.c.h.b16 %v1537
    %v1628 = vunpack.c.l.b16 %v1538
    %v1629 = vunpack.c.h.b16 %v1538
    %v1630 = vunpack.c.l.b16 %v1539
    %v1631 = vunpack.c.h.b16 %v1539
    %v1632 = vunpack.c.l.b16 %v1540
    %v1633 = vunpack.c.h.b16 %v1540
    %v1634 = vunpack.c.l.b16 %v1541
    %v1635 = vunpack.c.h.b16 %v1541
    %v1636 = vunpack.c.l.b16 %v1542
    %v1637 = vunpack.c.h.b16 %v1542
    %v1638 = vunpack.c.l.b16 %v1543
    %v1639 = vunpack.c.h.b16 %v1543
    %v1640 = vpack.c.b16 %v1580, %v1576
    %v1641 = vpack.c.b16 %v1581, %v1577
    %v1642 = vpack.c.b16 %v1582, %v1578
    %v1643 = vpack.c.b16 %v1583, %v1579
    %v1644 = vpack.c.b16 %v1588, %v1584
    %v1645 = vpack.c.b16 %v1589, %v1585
    %v1646 = vpack.c.b16 %v1590, %v1586
    %v1647 = vpack.c.b16 %v1591, %v1587
    %v1648 = vpack.c.b16 %v1596, %v1592
    %v1649 = vpack.c.b16 %v1597, %v1593
    %v1650 = vpack.c.b16 %v1598, %v1594
    %v1651 = vpack.c.b16 %v1599, %v1595
    %v1652 = vpack.c.b16 %v1604, %v1600
    %v1653 = vpack.c.b16 %v1605, %v1601
    %v1654 = vpack.c.b16 %v1606, %v1602
    %v1655 = vpack.c.b16 %v1607, %v1603
    %v1656 = vpack.c.b16 %v1612, %v1608
    %v1657 = vpack.c.b16 %v1613, %v1609
    %v1658 = vpack.c.b16 %v1614, %v1610
    %v1659 = vpack.c.b16 %v1615, %v1611
    %v1660 = vpack.c.b16 %v1620, %v1616
    %v1661 = vpack.c.b16 %v1621, %v1617
    %v1662 = vpack.c.b16 %v1622, %v1618
    %v1663 = vpack.c.b16 %v1623, %v1619
    %v1664 = vpack.c.b16 %v1628, %v1624
    %v1665 = vpack.c.b16 %v1629, %v1625
    %v1666 = vpack.c.b16 %v1630, %v1626
    %v1667 = vpack.c.b16 %v1631, %v1627
    %v1668 = vpack.c.b16 %v1636, %v1632
    %v1669 = vpack.c.b16 %v1637, %v1633
    %v1670 = vpack.c.b16 %v1638, %v1634
    %v1671 = vpack.c.b16 %v1639, %v1635
    %1704 = vmatprep.subr.bf16.mxu0 %v1669
    %1705 = vmatpush1.bf16.msra.mxu0 %v1668
    %1706 = vmatprep.subr.bf16.mxu0 %v1665
    %1707 = vmatpush1.bf16.msra.mxu0 %v1664
    %1708 = vmatprep.subr.bf16.mxu0 %v1661
    %1709 = vmatpush1.bf16.msra.mxu0 %v1660
    %1710 = vmatprep.subr.bf16.mxu0 %v1657
    %1711 = vmatpush1.bf16.msra.mxu0 %v1656
    %1712 = vmatprep.subr.bf16.mxu0 %v1653
    %1713 = vmatpush1.bf16.msra.mxu0 %v1652
    %1714 = vmatprep.subr.bf16.mxu0 %v1649
    %1715 = vmatpush1.bf16.msra.mxu0 %v1648
    %1716 = vmatprep.subr.bf16.mxu0 %v1645
    %1717 = vmatpush1.bf16.msra.mxu0 %v1644
    %1718 = vmatprep.subr.bf16.mxu0 %v1641
    %1719 = vmatpush1.bf16.msra.mxu0 %v1640
    %1720 = vmatprep.subr.bf16.mxu0 0
    %1721 = vmatpush2.bf16.msra.mxu0 0
    %1722 = vmatprep.subr.bf16.mxu0 0
    %1723 = vmatpush2.bf16.msra.mxu0 0
    %1724 = vmatprep.subr.bf16.mxu0 0
    %1725 = vmatpush2.bf16.msra.mxu0 0
    %1726 = vmatprep.subr.bf16.mxu0 0
    %1727 = vmatpush2.bf16.msra.mxu0 0
    %1728 = vmatprep.subr.bf16.mxu0 0
    %1729 = vmatpush2.bf16.msra.mxu0 0
    %1730 = vmatprep.subr.bf16.mxu0 0
    %1731 = vmatpush2.bf16.msra.mxu0 0
    %1732 = vmatprep.subr.bf16.mxu0 0
    %1733 = vmatpush2.bf16.msra.mxu0 0
    %1734 = vmatprep.subr.bf16.mxu0 0
    %1735 = vmatpush2.bf16.msra.mxu0 0
    %1736 = vmatprep.mubr.bf16.mxu0 0
    %1737 = vmatmul.mubr.bf16.gmra.mxu0 %v1511
    %v1738 = vpop.f32.mrf.mxu0
    %v1739 = vadd.f32 0.0, %v1738
    %v1740 = vpop.f32.mrf.mxu0
    %v1741 = vadd.f32 0.0, %v1740
    %v1742 = vpop.f32.mrf.mxu0
    %v1743 = vpop.f32.mrf.mxu0
    %1744 = vdwg.mxu0
    %1745 = vmatprep.subr.bf16.mxu0 %v1671
    %1746 = vmatpush1.bf16.msra.mxu0 %v1670
    %1747 = vmatprep.subr.bf16.mxu0 %v1667
    %1748 = vmatpush1.bf16.msra.mxu0 %v1666
    %1749 = vmatprep.subr.bf16.mxu0 %v1663
    %1750 = vmatpush1.bf16.msra.mxu0 %v1662
    %1751 = vmatprep.subr.bf16.mxu0 %v1659
    %1752 = vmatpush1.bf16.msra.mxu0 %v1658
    %1753 = vmatprep.subr.bf16.mxu0 %v1655
    %1754 = vmatpush1.bf16.msra.mxu0 %v1654
    %1755 = vmatprep.subr.bf16.mxu0 %v1651
    %1756 = vmatpush1.bf16.msra.mxu0 %v1650
    %1757 = vmatprep.subr.bf16.mxu0 %v1647
    %1758 = vmatpush1.bf16.msra.mxu0 %v1646
    %1759 = vmatprep.subr.bf16.mxu0 %v1643
    %1760 = vmatpush1.bf16.msra.mxu0 %v1642
    %1761 = vmatprep.subr.bf16.mxu0 0
    %1762 = vmatpush2.bf16.msra.mxu0 0
    %1763 = vmatprep.subr.bf16.mxu0 0
    %1764 = vmatpush2.bf16.msra.mxu0 0
    %1765 = vmatprep.subr.bf16.mxu0 0
    %1766 = vmatpush2.bf16.msra.mxu0 0
    %1767 = vmatprep.subr.bf16.mxu0 0
    %1768 = vmatpush2.bf16.msra.mxu0 0
    %1769 = vmatprep.subr.bf16.mxu0 0
    %1770 = vmatpush2.bf16.msra.mxu0 0
    %1771 = vmatprep.subr.bf16.mxu0 0
    %1772 = vmatpush2.bf16.msra.mxu0 0
    %1773 = vmatprep.subr.bf16.mxu0 0
    %1774 = vmatpush2.bf16.msra.mxu0 0
    %1775 = vmatprep.subr.bf16.mxu0 0
    %1776 = vmatpush2.bf16.msra.mxu0 0
    %1777 = vmatprep.mubr.bf16.mxu0 0
    %1778 = vmatmul.mubr.bf16.gmra.mxu0 %v1511
    %v1779 = vpop.f32.mrf.mxu0
    %v1780 = vadd.f32 0.0, %v1779
    %v1781 = vpop.f32.mrf.mxu0
    %v1782 = vadd.f32 0.0, %v1781
    %v1783 = vpop.f32.mrf.mxu0
    %v1784 = vpop.f32.mrf.mxu0
    %1785 = vdwg.mxu0
    %v1786 = vadd.f32 %v1507, %v1739
    %v1787 = vadd.f32 %v1508, %v1741
    %v1788 = vadd.f32 %v1509, %v1780
    %v1789 = vadd.f32 %v1510, %v1782
    %v1790 = vxor.u32 %v1786, 2147483648
    %v1791 = vmul.f32 %v1790, 1.442695
    %v1792 = vpow.pop %v1791
    %v1793 = vadd.f32 %v1792, 1.0
    %v1794 = vrcp.pop %v1793
    %v1795 = vmul.f32 1.0, %v1794
    %v1796 = vxor.u32 %v1787, 2147483648
    %v1797 = vmul.f32 %v1796, 1.442695
    %v1798 = vpow.pop %v1797
    %v1799 = vadd.f32 %v1798, 1.0
    %v1800 = vrcp.pop %v1799
    %v1801 = vmul.f32 1.0, %v1800
    %v1802 = vtanh.pop %v1788
    %v1803 = vxor.u32 %v1789, 2147483648
    %v1804 = vmul.f32 %v1803, 1.442695
    %v1805 = vpow.pop %v1804
    %v1806 = vadd.f32 %v1805, 1.0
    %v1807 = vrcp.pop %v1806
    %v1808 = vmul.f32 1.0, %v1807
    %v1809 = vmul.f32 %v1801, %v1499
    %v1810 = vmul.f32 %v1795, %v1802
    %v1811 = vadd.f32 %v1809, %v1810
    %v1812 = vtanh.pop %v1811
    %v1813 = vmul.f32 %v1808, %v1812
    %s1814 = scalar_lea.vmem [#allocation3], 16
    %1815 = vst [vmem:[%s1814] sm:$0xff] %v1813
    %s1816 = smul.u32 3, 4
    %s1817 = smul.addr %s1816, 8
    %s1818 = scalar_lea.vmem [#allocation2], %s1817
    %v1819 = vld [vmem:[%s1818] sm:$0xff]
    %v1820 = vld [vmem:[%s1818 + $0x8] sm:$0xff]
    %v1821 = vld [vmem:[%s1818 + $0x10] sm:$0xff]
    %v1822 = vld [vmem:[%s1818 + $0x18] sm:$0xff]
    %v1823 = vpack.c.bf16 %v1813, %v1813
    %v1824 = vld [vmem:[%s2] sm:$0xff]
    %v1825 = vld [vmem:[%s2 + $0x8] sm:$0xff]
    %v1826 = vld [vmem:[%s2 + $0x10] sm:$0xff]
    %v1827 = vld [vmem:[%s2 + $0x18] sm:$0xff]
    %v1828 = vld [vmem:[%s2 + $0x20] sm:$0xff]
    %v1829 = vld [vmem:[%s2 + $0x28] sm:$0xff]
    %v1830 = vld [vmem:[%s2 + $0x30] sm:$0xff]
    %v1831 = vld [vmem:[%s2 + $0x38] sm:$0xff]
    %v1832 = vld [vmem:[%s2 + $0x40] sm:$0xff]
    %v1833 = vld [vmem:[%s2 + $0x48] sm:$0xff]
    %v1834 = vld [vmem:[%s2 + $0x50] sm:$0xff]
    %v1835 = vld [vmem:[%s2 + $0x58] sm:$0xff]
    %v1836 = vld [vmem:[%s2 + $0x60] sm:$0xff]
    %v1837 = vld [vmem:[%s2 + $0x68] sm:$0xff]
    %v1838 = vld [vmem:[%s2 + $0x70] sm:$0xff]
    %v1839 = vld [vmem:[%s2 + $0x78] sm:$0xff]
    %v1840 = vld [vmem:[%s2 + $0x80] sm:$0xff]
    %v1841 = vld [vmem:[%s2 + $0x88] sm:$0xff]
    %v1842 = vld [vmem:[%s2 + $0x90] sm:$0xff]
    %v1843 = vld [vmem:[%s2 + $0x98] sm:$0xff]
    %v1844 = vld [vmem:[%s2 + $0xa0] sm:$0xff]
    %v1845 = vld [vmem:[%s2 + $0xa8] sm:$0xff]
    %v1846 = vld [vmem:[%s2 + $0xb0] sm:$0xff]
    %v1847 = vld [vmem:[%s2 + $0xb8] sm:$0xff]
    %v1848 = vld [vmem:[%s2 + $0xc0] sm:$0xff]
    %v1849 = vld [vmem:[%s2 + $0xc8] sm:$0xff]
    %v1850 = vld [vmem:[%s2 + $0xd0] sm:$0xff]
    %v1851 = vld [vmem:[%s2 + $0xd8] sm:$0xff]
    %v1852 = vld [vmem:[%s2 + $0xe0] sm:$0xff]
    %v1853 = vld [vmem:[%s2 + $0xe8] sm:$0xff]
    %v1854 = vld [vmem:[%s2 + $0xf0] sm:$0xff]
    %v1855 = vld [vmem:[%s2 + $0xf8] sm:$0xff]
    %v1888 = vunpack.c.l.b16 %v1824
    %v1889 = vunpack.c.h.b16 %v1824
    %v1890 = vunpack.c.l.b16 %v1825
    %v1891 = vunpack.c.h.b16 %v1825
    %v1892 = vunpack.c.l.b16 %v1826
    %v1893 = vunpack.c.h.b16 %v1826
    %v1894 = vunpack.c.l.b16 %v1827
    %v1895 = vunpack.c.h.b16 %v1827
    %v1896 = vunpack.c.l.b16 %v1828
    %v1897 = vunpack.c.h.b16 %v1828
    %v1898 = vunpack.c.l.b16 %v1829
    %v1899 = vunpack.c.h.b16 %v1829
    %v1900 = vunpack.c.l.b16 %v1830
    %v1901 = vunpack.c.h.b16 %v1830
    %v1902 = vunpack.c.l.b16 %v1831
    %v1903 = vunpack.c.h.b16 %v1831
    %v1904 = vunpack.c.l.b16 %v1832
    %v1905 = vunpack.c.h.b16 %v1832
    %v1906 = vunpack.c.l.b16 %v1833
    %v1907 = vunpack.c.h.b16 %v1833
    %v1908 = vunpack.c.l.b16 %v1834
    %v1909 = vunpack.c.h.b16 %v1834
    %v1910 = vunpack.c.l.b16 %v1835
    %v1911 = vunpack.c.h.b16 %v1835
    %v1912 = vunpack.c.l.b16 %v1836
    %v1913 = vunpack.c.h.b16 %v1836
    %v1914 = vunpack.c.l.b16 %v1837
    %v1915 = vunpack.c.h.b16 %v1837
    %v1916 = vunpack.c.l.b16 %v1838
    %v1917 = vunpack.c.h.b16 %v1838
    %v1918 = vunpack.c.l.b16 %v1839
    %v1919 = vunpack.c.h.b16 %v1839
    %v1920 = vunpack.c.l.b16 %v1840
    %v1921 = vunpack.c.h.b16 %v1840
    %v1922 = vunpack.c.l.b16 %v1841
    %v1923 = vunpack.c.h.b16 %v1841
    %v1924 = vunpack.c.l.b16 %v1842
    %v1925 = vunpack.c.h.b16 %v1842
    %v1926 = vunpack.c.l.b16 %v1843
    %v1927 = vunpack.c.h.b16 %v1843
    %v1928 = vunpack.c.l.b16 %v1844
    %v1929 = vunpack.c.h.b16 %v1844
    %v1930 = vunpack.c.l.b16 %v1845
    %v1931 = vunpack.c.h.b16 %v1845
    %v1932 = vunpack.c.l.b16 %v1846
    %v1933 = vunpack.c.h.b16 %v1846
    %v1934 = vunpack.c.l.b16 %v1847
    %v1935 = vunpack.c.h.b16 %v1847
    %v1936 = vunpack.c.l.b16 %v1848
    %v1937 = vunpack.c.h.b16 %v1848
    %v1938 = vunpack.c.l.b16 %v1849
    %v1939 = vunpack.c.h.b16 %v1849
    %v1940 = vunpack.c.l.b16 %v1850
    %v1941 = vunpack.c.h.b16 %v1850
    %v1942 = vunpack.c.l.b16 %v1851
    %v1943 = vunpack.c.h.b16 %v1851
    %v1944 = vunpack.c.l.b16 %v1852
    %v1945 = vunpack.c.h.b16 %v1852
    %v1946 = vunpack.c.l.b16 %v1853
    %v1947 = vunpack.c.h.b16 %v1853
    %v1948 = vunpack.c.l.b16 %v1854
    %v1949 = vunpack.c.h.b16 %v1854
    %v1950 = vunpack.c.l.b16 %v1855
    %v1951 = vunpack.c.h.b16 %v1855
    %v1952 = vpack.c.b16 %v1892, %v1888
    %v1953 = vpack.c.b16 %v1893, %v1889
    %v1954 = vpack.c.b16 %v1894, %v1890
    %v1955 = vpack.c.b16 %v1895, %v1891
    %v1956 = vpack.c.b16 %v1900, %v1896
    %v1957 = vpack.c.b16 %v1901, %v1897
    %v1958 = vpack.c.b16 %v1902, %v1898
    %v1959 = vpack.c.b16 %v1903, %v1899
    %v1960 = vpack.c.b16 %v1908, %v1904
    %v1961 = vpack.c.b16 %v1909, %v1905
    %v1962 = vpack.c.b16 %v1910, %v1906
    %v1963 = vpack.c.b16 %v1911, %v1907
    %v1964 = vpack.c.b16 %v1916, %v1912
    %v1965 = vpack.c.b16 %v1917, %v1913
    %v1966 = vpack.c.b16 %v1918, %v1914
    %v1967 = vpack.c.b16 %v1919, %v1915
    %v1968 = vpack.c.b16 %v1924, %v1920
    %v1969 = vpack.c.b16 %v1925, %v1921
    %v1970 = vpack.c.b16 %v1926, %v1922
    %v1971 = vpack.c.b16 %v1927, %v1923
    %v1972 = vpack.c.b16 %v1932, %v1928
    %v1973 = vpack.c.b16 %v1933, %v1929
    %v1974 = vpack.c.b16 %v1934, %v1930
    %v1975 = vpack.c.b16 %v1935, %v1931
    %v1976 = vpack.c.b16 %v1940, %v1936
    %v1977 = vpack.c.b16 %v1941, %v1937
    %v1978 = vpack.c.b16 %v1942, %v1938
    %v1979 = vpack.c.b16 %v1943, %v1939
    %v1980 = vpack.c.b16 %v1948, %v1944
    %v1981 = vpack.c.b16 %v1949, %v1945
    %v1982 = vpack.c.b16 %v1950, %v1946
    %v1983 = vpack.c.b16 %v1951, %v1947
    %2016 = vmatprep.subr.bf16.mxu0 %v1981
    %2017 = vmatpush1.bf16.msra.mxu0 %v1980
    %2018 = vmatprep.subr.bf16.mxu0 %v1977
    %2019 = vmatpush1.bf16.msra.mxu0 %v1976
    %2020 = vmatprep.subr.bf16.mxu0 %v1973
    %2021 = vmatpush1.bf16.msra.mxu0 %v1972
    %2022 = vmatprep.subr.bf16.mxu0 %v1969
    %2023 = vmatpush1.bf16.msra.mxu0 %v1968
    %2024 = vmatprep.subr.bf16.mxu0 %v1965
    %2025 = vmatpush1.bf16.msra.mxu0 %v1964
    %2026 = vmatprep.subr.bf16.mxu0 %v1961
    %2027 = vmatpush1.bf16.msra.mxu0 %v1960
    %2028 = vmatprep.subr.bf16.mxu0 %v1957
    %2029 = vmatpush1.bf16.msra.mxu0 %v1956
    %2030 = vmatprep.subr.bf16.mxu0 %v1953
    %2031 = vmatpush1.bf16.msra.mxu0 %v1952
    %2032 = vmatprep.subr.bf16.mxu0 0
    %2033 = vmatpush2.bf16.msra.mxu0 0
    %2034 = vmatprep.subr.bf16.mxu0 0
    %2035 = vmatpush2.bf16.msra.mxu0 0
    %2036 = vmatprep.subr.bf16.mxu0 0
    %2037 = vmatpush2.bf16.msra.mxu0 0
    %2038 = vmatprep.subr.bf16.mxu0 0
    %2039 = vmatpush2.bf16.msra.mxu0 0
    %2040 = vmatprep.subr.bf16.mxu0 0
    %2041 = vmatpush2.bf16.msra.mxu0 0
    %2042 = vmatprep.subr.bf16.mxu0 0
    %2043 = vmatpush2.bf16.msra.mxu0 0
    %2044 = vmatprep.subr.bf16.mxu0 0
    %2045 = vmatpush2.bf16.msra.mxu0 0
    %2046 = vmatprep.subr.bf16.mxu0 0
    %2047 = vmatpush2.bf16.msra.mxu0 0
    %2048 = vmatprep.mubr.bf16.mxu0 0
    %2049 = vmatmul.mubr.bf16.gmra.mxu0 %v1823
    %v2050 = vpop.f32.mrf.mxu0
    %v2051 = vadd.f32 0.0, %v2050
    %v2052 = vpop.f32.mrf.mxu0
    %v2053 = vadd.f32 0.0, %v2052
    %v2054 = vpop.f32.mrf.mxu0
    %v2055 = vpop.f32.mrf.mxu0
    %2056 = vdwg.mxu0
    %2057 = vmatprep.subr.bf16.mxu0 %v1983
    %2058 = vmatpush1.bf16.msra.mxu0 %v1982
    %2059 = vmatprep.subr.bf16.mxu0 %v1979
    %2060 = vmatpush1.bf16.msra.mxu0 %v1978
    %2061 = vmatprep.subr.bf16.mxu0 %v1975
    %2062 = vmatpush1.bf16.msra.mxu0 %v1974
    %2063 = vmatprep.subr.bf16.mxu0 %v1971
    %2064 = vmatpush1.bf16.msra.mxu0 %v1970
    %2065 = vmatprep.subr.bf16.mxu0 %v1967
    %2066 = vmatpush1.bf16.msra.mxu0 %v1966
    %2067 = vmatprep.subr.bf16.mxu0 %v1963
    %2068 = vmatpush1.bf16.msra.mxu0 %v1962
    %2069 = vmatprep.subr.bf16.mxu0 %v1959
    %2070 = vmatpush1.bf16.msra.mxu0 %v1958
    %2071 = vmatprep.subr.bf16.mxu0 %v1955
    %2072 = vmatpush1.bf16.msra.mxu0 %v1954
    %2073 = vmatprep.subr.bf16.mxu0 0
    %2074 = vmatpush2.bf16.msra.mxu0 0
    %2075 = vmatprep.subr.bf16.mxu0 0
    %2076 = vmatpush2.bf16.msra.mxu0 0
    %2077 = vmatprep.subr.bf16.mxu0 0
    %2078 = vmatpush2.bf16.msra.mxu0 0
    %2079 = vmatprep.subr.bf16.mxu0 0
    %2080 = vmatpush2.bf16.msra.mxu0 0
    %2081 = vmatprep.subr.bf16.mxu0 0
    %2082 = vmatpush2.bf16.msra.mxu0 0
    %2083 = vmatprep.subr.bf16.mxu0 0
    %2084 = vmatpush2.bf16.msra.mxu0 0
    %2085 = vmatprep.subr.bf16.mxu0 0
    %2086 = vmatpush2.bf16.msra.mxu0 0
    %2087 = vmatprep.subr.bf16.mxu0 0
    %2088 = vmatpush2.bf16.msra.mxu0 0
    %2089 = vmatprep.mubr.bf16.mxu0 0
    %2090 = vmatmul.mubr.bf16.gmra.mxu0 %v1823
    %v2091 = vpop.f32.mrf.mxu0
    %v2092 = vadd.f32 0.0, %v2091
    %v2093 = vpop.f32.mrf.mxu0
    %v2094 = vadd.f32 0.0, %v2093
    %v2095 = vpop.f32.mrf.mxu0
    %v2096 = vpop.f32.mrf.mxu0
    %2097 = vdwg.mxu0
    %v2098 = vadd.f32 %v1819, %v2051
    %v2099 = vadd.f32 %v1820, %v2053
    %v2100 = vadd.f32 %v1821, %v2092
    %v2101 = vadd.f32 %v1822, %v2094
    %v2102 = vxor.u32 %v2098, 2147483648
    %v2103 = vmul.f32 %v2102, 1.442695
    %v2104 = vpow.pop %v2103
    %v2105 = vadd.f32 %v2104, 1.0
    %v2106 = vrcp.pop %v2105
    %v2107 = vmul.f32 1.0, %v2106
    %v2108 = vxor.u32 %v2099, 2147483648
    %v2109 = vmul.f32 %v2108, 1.442695
    %v2110 = vpow.pop %v2109
    %v2111 = vadd.f32 %v2110, 1.0
    %v2112 = vrcp.pop %v2111
    %v2113 = vmul.f32 1.0, %v2112
    %v2114 = vtanh.pop %v2100
    %v2115 = vxor.u32 %v2101, 2147483648
    %v2116 = vmul.f32 %v2115, 1.442695
    %v2117 = vpow.pop %v2116
    %v2118 = vadd.f32 %v2117, 1.0
    %v2119 = vrcp.pop %v2118
    %v2120 = vmul.f32 1.0, %v2119
    %v2121 = vmul.f32 %v2113, %v1811
    %v2122 = vmul.f32 %v2107, %v2114
    %v2123 = vadd.f32 %v2121, %v2122
    %v2124 = vtanh.pop %v2123
    %v2125 = vmul.f32 %v2120, %v2124
    %s2126 = scalar_lea.vmem [#allocation3], 24
    %2127 = vst [vmem:[%s2126] sm:$0xff] %v2125
    %s2128 = smul.u32 4, 4
    %s2129 = smul.addr %s2128, 8
    %s2130 = scalar_lea.vmem [#allocation2], %s2129
    %v2131 = vld [vmem:[%s2130] sm:$0xff]
    %v2132 = vld [vmem:[%s2130 + $0x8] sm:$0xff]
    %v2133 = vld [vmem:[%s2130 + $0x10] sm:$0xff]
    %v2134 = vld [vmem:[%s2130 + $0x18] sm:$0xff]
    %v2135 = vpack.c.bf16 %v2125, %v2125
    %v2136 = vld [vmem:[%s2] sm:$0xff]
    %v2137 = vld [vmem:[%s2 + $0x8] sm:$0xff]
    %v2138 = vld [vmem:[%s2 + $0x10] sm:$0xff]
    %v2139 = vld [vmem:[%s2 + $0x18] sm:$0xff]
    %v2140 = vld [vmem:[%s2 + $0x20] sm:$0xff]
    %v2141 = vld [vmem:[%s2 + $0x28] sm:$0xff]
    %v2142 = vld [vmem:[%s2 + $0x30] sm:$0xff]
    %v2143 = vld [vmem:[%s2 + $0x38] sm:$0xff]
    %v2144 = vld [vmem:[%s2 + $0x40] sm:$0xff]
    %v2145 = vld [vmem:[%s2 + $0x48] sm:$0xff]
    %v2146 = vld [vmem:[%s2 + $0x50] sm:$0xff]
    %v2147 = vld [vmem:[%s2 + $0x58] sm:$0xff]
    %v2148 = vld [vmem:[%s2 + $0x60] sm:$0xff]
    %v2149 = vld [vmem:[%s2 + $0x68] sm:$0xff]
    %v2150 = vld [vmem:[%s2 + $0x70] sm:$0xff]
    %v2151 = vld [vmem:[%s2 + $0x78] sm:$0xff]
    %v2152 = vld [vmem:[%s2 + $0x80] sm:$0xff]
    %v2153 = vld [vmem:[%s2 + $0x88] sm:$0xff]
    %v2154 = vld [vmem:[%s2 + $0x90] sm:$0xff]
    %v2155 = vld [vmem:[%s2 + $0x98] sm:$0xff]
    %v2156 = vld [vmem:[%s2 + $0xa0] sm:$0xff]
    %v2157 = vld [vmem:[%s2 + $0xa8] sm:$0xff]
    %v2158 = vld [vmem:[%s2 + $0xb0] sm:$0xff]
    %v2159 = vld [vmem:[%s2 + $0xb8] sm:$0xff]
    %v2160 = vld [vmem:[%s2 + $0xc0] sm:$0xff]
    %v2161 = vld [vmem:[%s2 + $0xc8] sm:$0xff]
    %v2162 = vld [vmem:[%s2 + $0xd0] sm:$0xff]
    %v2163 = vld [vmem:[%s2 + $0xd8] sm:$0xff]
    %v2164 = vld [vmem:[%s2 + $0xe0] sm:$0xff]
    %v2165 = vld [vmem:[%s2 + $0xe8] sm:$0xff]
    %v2166 = vld [vmem:[%s2 + $0xf0] sm:$0xff]
    %v2167 = vld [vmem:[%s2 + $0xf8] sm:$0xff]
    %v2200 = vunpack.c.l.b16 %v2136
    %v2201 = vunpack.c.h.b16 %v2136
    %v2202 = vunpack.c.l.b16 %v2137
    %v2203 = vunpack.c.h.b16 %v2137
    %v2204 = vunpack.c.l.b16 %v2138
    %v2205 = vunpack.c.h.b16 %v2138
    %v2206 = vunpack.c.l.b16 %v2139
    %v2207 = vunpack.c.h.b16 %v2139
    %v2208 = vunpack.c.l.b16 %v2140
    %v2209 = vunpack.c.h.b16 %v2140
    %v2210 = vunpack.c.l.b16 %v2141
    %v2211 = vunpack.c.h.b16 %v2141
    %v2212 = vunpack.c.l.b16 %v2142
    %v2213 = vunpack.c.h.b16 %v2142
    %v2214 = vunpack.c.l.b16 %v2143
    %v2215 = vunpack.c.h.b16 %v2143
    %v2216 = vunpack.c.l.b16 %v2144
    %v2217 = vunpack.c.h.b16 %v2144
    %v2218 = vunpack.c.l.b16 %v2145
    %v2219 = vunpack.c.h.b16 %v2145
    %v2220 = vunpack.c.l.b16 %v2146
    %v2221 = vunpack.c.h.b16 %v2146
    %v2222 = vunpack.c.l.b16 %v2147
    %v2223 = vunpack.c.h.b16 %v2147
    %v2224 = vunpack.c.l.b16 %v2148
    %v2225 = vunpack.c.h.b16 %v2148
    %v2226 = vunpack.c.l.b16 %v2149
    %v2227 = vunpack.c.h.b16 %v2149
    %v2228 = vunpack.c.l.b16 %v2150
    %v2229 = vunpack.c.h.b16 %v2150
    %v2230 = vunpack.c.l.b16 %v2151
    %v2231 = vunpack.c.h.b16 %v2151
    %v2232 = vunpack.c.l.b16 %v2152
    %v2233 = vunpack.c.h.b16 %v2152
    %v2234 = vunpack.c.l.b16 %v2153
    %v2235 = vunpack.c.h.b16 %v2153
    %v2236 = vunpack.c.l.b16 %v2154
    %v2237 = vunpack.c.h.b16 %v2154
    %v2238 = vunpack.c.l.b16 %v2155
    %v2239 = vunpack.c.h.b16 %v2155
    %v2240 = vunpack.c.l.b16 %v2156
    %v2241 = vunpack.c.h.b16 %v2156
    %v2242 = vunpack.c.l.b16 %v2157
    %v2243 = vunpack.c.h.b16 %v2157
    %v2244 = vunpack.c.l.b16 %v2158
    %v2245 = vunpack.c.h.b16 %v2158
    %v2246 = vunpack.c.l.b16 %v2159
    %v2247 = vunpack.c.h.b16 %v2159
    %v2248 = vunpack.c.l.b16 %v2160
    %v2249 = vunpack.c.h.b16 %v2160
    %v2250 = vunpack.c.l.b16 %v2161
    %v2251 = vunpack.c.h.b16 %v2161
    %v2252 = vunpack.c.l.b16 %v2162
    %v2253 = vunpack.c.h.b16 %v2162
    %v2254 = vunpack.c.l.b16 %v2163
    %v2255 = vunpack.c.h.b16 %v2163
    %v2256 = vunpack.c.l.b16 %v2164
    %v2257 = vunpack.c.h.b16 %v2164
    %v2258 = vunpack.c.l.b16 %v2165
    %v2259 = vunpack.c.h.b16 %v2165
    %v2260 = vunpack.c.l.b16 %v2166
    %v2261 = vunpack.c.h.b16 %v2166
    %v2262 = vunpack.c.l.b16 %v2167
    %v2263 = vunpack.c.h.b16 %v2167
    %v2264 = vpack.c.b16 %v2204, %v2200
    %v2265 = vpack.c.b16 %v2205, %v2201
    %v2266 = vpack.c.b16 %v2206, %v2202
    %v2267 = vpack.c.b16 %v2207, %v2203
    %v2268 = vpack.c.b16 %v2212, %v2208
    %v2269 = vpack.c.b16 %v2213, %v2209
    %v2270 = vpack.c.b16 %v2214, %v2210
    %v2271 = vpack.c.b16 %v2215, %v2211
    %v2272 = vpack.c.b16 %v2220, %v2216
    %v2273 = vpack.c.b16 %v2221, %v2217
    %v2274 = vpack.c.b16 %v2222, %v2218
    %v2275 = vpack.c.b16 %v2223, %v2219
    %v2276 = vpack.c.b16 %v2228, %v2224
    %v2277 = vpack.c.b16 %v2229, %v2225
    %v2278 = vpack.c.b16 %v2230, %v2226
    %v2279 = vpack.c.b16 %v2231, %v2227
    %v2280 = vpack.c.b16 %v2236, %v2232
    %v2281 = vpack.c.b16 %v2237, %v2233
    %v2282 = vpack.c.b16 %v2238, %v2234
    %v2283 = vpack.c.b16 %v2239, %v2235
    %v2284 = vpack.c.b16 %v2244, %v2240
    %v2285 = vpack.c.b16 %v2245, %v2241
    %v2286 = vpack.c.b16 %v2246, %v2242
    %v2287 = vpack.c.b16 %v2247, %v2243
    %v2288 = vpack.c.b16 %v2252, %v2248
    %v2289 = vpack.c.b16 %v2253, %v2249
    %v2290 = vpack.c.b16 %v2254, %v2250
    %v2291 = vpack.c.b16 %v2255, %v2251
    %v2292 = vpack.c.b16 %v2260, %v2256
    %v2293 = vpack.c.b16 %v2261, %v2257
    %v2294 = vpack.c.b16 %v2262, %v2258
    %v2295 = vpack.c.b16 %v2263, %v2259
    %2328 = vmatprep.subr.bf16.mxu0 %v2293
    %2329 = vmatpush1.bf16.msra.mxu0 %v2292
    %2330 = vmatprep.subr.bf16.mxu0 %v2289
    %2331 = vmatpush1.bf16.msra.mxu0 %v2288
    %2332 = vmatprep.subr.bf16.mxu0 %v2285
    %2333 = vmatpush1.bf16.msra.mxu0 %v2284
    %2334 = vmatprep.subr.bf16.mxu0 %v2281
    %2335 = vmatpush1.bf16.msra.mxu0 %v2280
    %2336 = vmatprep.subr.bf16.mxu0 %v2277
    %2337 = vmatpush1.bf16.msra.mxu0 %v2276
    %2338 = vmatprep.subr.bf16.mxu0 %v2273
    %2339 = vmatpush1.bf16.msra.mxu0 %v2272
    %2340 = vmatprep.subr.bf16.mxu0 %v2269
    %2341 = vmatpush1.bf16.msra.mxu0 %v2268
    %2342 = vmatprep.subr.bf16.mxu0 %v2265
    %2343 = vmatpush1.bf16.msra.mxu0 %v2264
    %2344 = vmatprep.subr.bf16.mxu0 0
    %2345 = vmatpush2.bf16.msra.mxu0 0
    %2346 = vmatprep.subr.bf16.mxu0 0
    %2347 = vmatpush2.bf16.msra.mxu0 0
    %2348 = vmatprep.subr.bf16.mxu0 0
    %2349 = vmatpush2.bf16.msra.mxu0 0
    %2350 = vmatprep.subr.bf16.mxu0 0
    %2351 = vmatpush2.bf16.msra.mxu0 0
    %2352 = vmatprep.subr.bf16.mxu0 0
    %2353 = vmatpush2.bf16.msra.mxu0 0
    %2354 = vmatprep.subr.bf16.mxu0 0
    %2355 = vmatpush2.bf16.msra.mxu0 0
    %2356 = vmatprep.subr.bf16.mxu0 0
    %2357 = vmatpush2.bf16.msra.mxu0 0
    %2358 = vmatprep.subr.bf16.mxu0 0
    %2359 = vmatpush2.bf16.msra.mxu0 0
    %2360 = vmatprep.mubr.bf16.mxu0 0
    %2361 = vmatmul.mubr.bf16.gmra.mxu0 %v2135
    %v2362 = vpop.f32.mrf.mxu0
    %v2363 = vadd.f32 0.0, %v2362
    %v2364 = vpop.f32.mrf.mxu0
    %v2365 = vadd.f32 0.0, %v2364
    %v2366 = vpop.f32.mrf.mxu0
    %v2367 = vpop.f32.mrf.mxu0
    %2368 = vdwg.mxu0
    %2369 = vmatprep.subr.bf16.mxu0 %v2295
    %2370 = vmatpush1.bf16.msra.mxu0 %v2294
    %2371 = vmatprep.subr.bf16.mxu0 %v2291
    %2372 = vmatpush1.bf16.msra.mxu0 %v2290
    %2373 = vmatprep.subr.bf16.mxu0 %v2287
    %2374 = vmatpush1.bf16.msra.mxu0 %v2286
    %2375 = vmatprep.subr.bf16.mxu0 %v2283
    %2376 = vmatpush1.bf16.msra.mxu0 %v2282
    %2377 = vmatprep.subr.bf16.mxu0 %v2279
    %2378 = vmatpush1.bf16.msra.mxu0 %v2278
    %2379 = vmatprep.subr.bf16.mxu0 %v2275
    %2380 = vmatpush1.bf16.msra.mxu0 %v2274
    %2381 = vmatprep.subr.bf16.mxu0 %v2271
    %2382 = vmatpush1.bf16.msra.mxu0 %v2270
    %2383 = vmatprep.subr.bf16.mxu0 %v2267
    %2384 = vmatpush1.bf16.msra.mxu0 %v2266
    %2385 = vmatprep.subr.bf16.mxu0 0
    %2386 = vmatpush2.bf16.msra.mxu0 0
    %2387 = vmatprep.subr.bf16.mxu0 0
    %2388 = vmatpush2.bf16.msra.mxu0 0
    %2389 = vmatprep.subr.bf16.mxu0 0
    %2390 = vmatpush2.bf16.msra.mxu0 0
    %2391 = vmatprep.subr.bf16.mxu0 0
    %2392 = vmatpush2.bf16.msra.mxu0 0
    %2393 = vmatprep.subr.bf16.mxu0 0
    %2394 = vmatpush2.bf16.msra.mxu0 0
    %2395 = vmatprep.subr.bf16.mxu0 0
    %2396 = vmatpush2.bf16.msra.mxu0 0
    %2397 = vmatprep.subr.bf16.mxu0 0
    %2398 = vmatpush2.bf16.msra.mxu0 0
    %2399 = vmatprep.subr.bf16.mxu0 0
    %2400 = vmatpush2.bf16.msra.mxu0 0
    %2401 = vmatprep.mubr.bf16.mxu0 0
    %2402 = vmatmul.mubr.bf16.gmra.mxu0 %v2135
    %v2403 = vpop.f32.mrf.mxu0
    %v2404 = vadd.f32 0.0, %v2403
    %v2405 = vpop.f32.mrf.mxu0
    %v2406 = vadd.f32 0.0, %v2405
    %v2407 = vpop.f32.mrf.mxu0
    %v2408 = vpop.f32.mrf.mxu0
    %2409 = vdwg.mxu0
    %v2410 = vadd.f32 %v2131, %v2363
    %v2411 = vadd.f32 %v2132, %v2365
    %v2412 = vadd.f32 %v2133, %v2404
    %v2413 = vadd.f32 %v2134, %v2406
    %v2414 = vxor.u32 %v2410, 2147483648
    %v2415 = vmul.f32 %v2414, 1.442695
    %v2416 = vpow.pop %v2415
    %v2417 = vadd.f32 %v2416, 1.0
    %v2418 = vrcp.pop %v2417
    %v2419 = vmul.f32 1.0, %v2418
    %v2420 = vxor.u32 %v2411, 2147483648
    %v2421 = vmul.f32 %v2420, 1.442695
    %v2422 = vpow.pop %v2421
    %v2423 = vadd.f32 %v2422, 1.0
    %v2424 = vrcp.pop %v2423
    %v2425 = vmul.f32 1.0, %v2424
    %v2426 = vtanh.pop %v2412
    %v2427 = vxor.u32 %v2413, 2147483648
    %v2428 = vmul.f32 %v2427, 1.442695
    %v2429 = vpow.pop %v2428
    %v2430 = vadd.f32 %v2429, 1.0
    %v2431 = vrcp.pop %v2430
    %v2432 = vmul.f32 1.0, %v2431
    %v2433 = vmul.f32 %v2425, %v2123
    %v2434 = vmul.f32 %v2419, %v2426
    %v2435 = vadd.f32 %v2433, %v2434
    %v2436 = vtanh.pop %v2435
    %v2437 = vmul.f32 %v2432, %v2436
    %s2438 = scalar_lea.vmem [#allocation3], 32
    %2439 = vst [vmem:[%s2438] sm:$0xff] %v2437
    %s2440 = smul.u32 5, 4
    %s2441 = smul.addr %s2440, 8
    %s2442 = scalar_lea.vmem [#allocation2], %s2441
    %v2443 = vld [vmem:[%s2442] sm:$0xff]
    %v2444 = vld [vmem:[%s2442 + $0x8] sm:$0xff]
    %v2445 = vld [vmem:[%s2442 + $0x10] sm:$0xff]
    %v2446 = vld [vmem:[%s2442 + $0x18] sm:$0xff]
    %v2447 = vpack.c.bf16 %v2437, %v2437
    %v2448 = vld [vmem:[%s2] sm:$0xff]
    %v2449 = vld [vmem:[%s2 + $0x8] sm:$0xff]
    %v2450 = vld [vmem:[%s2 + $0x10] sm:$0xff]
    %v2451 = vld [vmem:[%s2 + $0x18] sm:$0xff]
    %v2452 = vld [vmem:[%s2 + $0x20] sm:$0xff]
    %v2453 = vld [vmem:[%s2 + $0x28] sm:$0xff]
    %v2454 = vld [vmem:[%s2 + $0x30] sm:$0xff]
    %v2455 = vld [vmem:[%s2 + $0x38] sm:$0xff]
    %v2456 = vld [vmem:[%s2 + $0x40] sm:$0xff]
    %v2457 = vld [vmem:[%s2 + $0x48] sm:$0xff]
    %v2458 = vld [vmem:[%s2 + $0x50] sm:$0xff]
    %v2459 = vld [vmem:[%s2 + $0x58] sm:$0xff]
    %v2460 = vld [vmem:[%s2 + $0x60] sm:$0xff]
    %v2461 = vld [vmem:[%s2 + $0x68] sm:$0xff]
    %v2462 = vld [vmem:[%s2 + $0x70] sm:$0xff]
    %v2463 = vld [vmem:[%s2 + $0x78] sm:$0xff]
    %v2464 = vld [vmem:[%s2 + $0x80] sm:$0xff]
    %v2465 = vld [vmem:[%s2 + $0x88] sm:$0xff]
    %v2466 = vld [vmem:[%s2 + $0x90] sm:$0xff]
    %v2467 = vld [vmem:[%s2 + $0x98] sm:$0xff]
    %v2468 = vld [vmem:[%s2 + $0xa0] sm:$0xff]
    %v2469 = vld [vmem:[%s2 + $0xa8] sm:$0xff]
    %v2470 = vld [vmem:[%s2 + $0xb0] sm:$0xff]
    %v2471 = vld [vmem:[%s2 + $0xb8] sm:$0xff]
    %v2472 = vld [vmem:[%s2 + $0xc0] sm:$0xff]
    %v2473 = vld [vmem:[%s2 + $0xc8] sm:$0xff]
    %v2474 = vld [vmem:[%s2 + $0xd0] sm:$0xff]
    %v2475 = vld [vmem:[%s2 + $0xd8] sm:$0xff]
    %v2476 = vld [vmem:[%s2 + $0xe0] sm:$0xff]
    %v2477 = vld [vmem:[%s2 + $0xe8] sm:$0xff]
    %v2478 = vld [vmem:[%s2 + $0xf0] sm:$0xff]
    %v2479 = vld [vmem:[%s2 + $0xf8] sm:$0xff]
    %v2512 = vunpack.c.l.b16 %v2448
    %v2513 = vunpack.c.h.b16 %v2448
    %v2514 = vunpack.c.l.b16 %v2449
    %v2515 = vunpack.c.h.b16 %v2449
    %v2516 = vunpack.c.l.b16 %v2450
    %v2517 = vunpack.c.h.b16 %v2450
    %v2518 = vunpack.c.l.b16 %v2451
    %v2519 = vunpack.c.h.b16 %v2451
    %v2520 = vunpack.c.l.b16 %v2452
    %v2521 = vunpack.c.h.b16 %v2452
    %v2522 = vunpack.c.l.b16 %v2453
    %v2523 = vunpack.c.h.b16 %v2453
    %v2524 = vunpack.c.l.b16 %v2454
    %v2525 = vunpack.c.h.b16 %v2454
    %v2526 = vunpack.c.l.b16 %v2455
    %v2527 = vunpack.c.h.b16 %v2455
    %v2528 = vunpack.c.l.b16 %v2456
    %v2529 = vunpack.c.h.b16 %v2456
    %v2530 = vunpack.c.l.b16 %v2457
    %v2531 = vunpack.c.h.b16 %v2457
    %v2532 = vunpack.c.l.b16 %v2458
    %v2533 = vunpack.c.h.b16 %v2458
    %v2534 = vunpack.c.l.b16 %v2459
    %v2535 = vunpack.c.h.b16 %v2459
    %v2536 = vunpack.c.l.b16 %v2460
    %v2537 = vunpack.c.h.b16 %v2460
    %v2538 = vunpack.c.l.b16 %v2461
    %v2539 = vunpack.c.h.b16 %v2461
    %v2540 = vunpack.c.l.b16 %v2462
    %v2541 = vunpack.c.h.b16 %v2462
    %v2542 = vunpack.c.l.b16 %v2463
    %v2543 = vunpack.c.h.b16 %v2463
    %v2544 = vunpack.c.l.b16 %v2464
    %v2545 = vunpack.c.h.b16 %v2464
    %v2546 = vunpack.c.l.b16 %v2465
    %v2547 = vunpack.c.h.b16 %v2465
    %v2548 = vunpack.c.l.b16 %v2466
    %v2549 = vunpack.c.h.b16 %v2466
    %v2550 = vunpack.c.l.b16 %v2467
    %v2551 = vunpack.c.h.b16 %v2467
    %v2552 = vunpack.c.l.b16 %v2468
    %v2553 = vunpack.c.h.b16 %v2468
    %v2554 = vunpack.c.l.b16 %v2469
    %v2555 = vunpack.c.h.b16 %v2469
    %v2556 = vunpack.c.l.b16 %v2470
    %v2557 = vunpack.c.h.b16 %v2470
    %v2558 = vunpack.c.l.b16 %v2471
    %v2559 = vunpack.c.h.b16 %v2471
    %v2560 = vunpack.c.l.b16 %v2472
    %v2561 = vunpack.c.h.b16 %v2472
    %v2562 = vunpack.c.l.b16 %v2473
    %v2563 = vunpack.c.h.b16 %v2473
    %v2564 = vunpack.c.l.b16 %v2474
    %v2565 = vunpack.c.h.b16 %v2474
    %v2566 = vunpack.c.l.b16 %v2475
    %v2567 = vunpack.c.h.b16 %v2475
    %v2568 = vunpack.c.l.b16 %v2476
    %v2569 = vunpack.c.h.b16 %v2476
    %v2570 = vunpack.c.l.b16 %v2477
    %v2571 = vunpack.c.h.b16 %v2477
    %v2572 = vunpack.c.l.b16 %v2478
    %v2573 = vunpack.c.h.b16 %v2478
    %v2574 = vunpack.c.l.b16 %v2479
    %v2575 = vunpack.c.h.b16 %v2479
    %v2576 = vpack.c.b16 %v2516, %v2512
    %v2577 = vpack.c.b16 %v2517, %v2513
    %v2578 = vpack.c.b16 %v2518, %v2514
    %v2579 = vpack.c.b16 %v2519, %v2515
    %v2580 = vpack.c.b16 %v2524, %v2520
    %v2581 = vpack.c.b16 %v2525, %v2521
    %v2582 = vpack.c.b16 %v2526, %v2522
    %v2583 = vpack.c.b16 %v2527, %v2523
    %v2584 = vpack.c.b16 %v2532, %v2528
    %v2585 = vpack.c.b16 %v2533, %v2529
    %v2586 = vpack.c.b16 %v2534, %v2530
    %v2587 = vpack.c.b16 %v2535, %v2531
    %v2588 = vpack.c.b16 %v2540, %v2536
    %v2589 = vpack.c.b16 %v2541, %v2537
    %v2590 = vpack.c.b16 %v2542, %v2538
    %v2591 = vpack.c.b16 %v2543, %v2539
    %v2592 = vpack.c.b16 %v2548, %v2544
    %v2593 = vpack.c.b16 %v2549, %v2545
    %v2594 = vpack.c.b16 %v2550, %v2546
    %v2595 = vpack.c.b16 %v2551, %v2547
    %v2596 = vpack.c.b16 %v2556, %v2552
    %v2597 = vpack.c.b16 %v2557, %v2553
    %v2598 = vpack.c.b16 %v2558, %v2554
    %v2599 = vpack.c.b16 %v2559, %v2555
    %v2600 = vpack.c.b16 %v2564, %v2560
    %v2601 = vpack.c.b16 %v2565, %v2561
    %v2602 = vpack.c.b16 %v2566, %v2562
    %v2603 = vpack.c.b16 %v2567, %v2563
    %v2604 = vpack.c.b16 %v2572, %v2568
    %v2605 = vpack.c.b16 %v2573, %v2569
    %v2606 = vpack.c.b16 %v2574, %v2570
    %v2607 = vpack.c.b16 %v2575, %v2571
    %2640 = vmatprep.subr.bf16.mxu0 %v2605
    %2641 = vmatpush1.bf16.msra.mxu0 %v2604
    %2642 = vmatprep.subr.bf16.mxu0 %v2601
    %2643 = vmatpush1.bf16.msra.mxu0 %v2600
    %2644 = vmatprep.subr.bf16.mxu0 %v2597
    %2645 = vmatpush1.bf16.msra.mxu0 %v2596
    %2646 = vmatprep.subr.bf16.mxu0 %v2593
    %2647 = vmatpush1.bf16.msra.mxu0 %v2592
    %2648 = vmatprep.subr.bf16.mxu0 %v2589
    %2649 = vmatpush1.bf16.msra.mxu0 %v2588
    %2650 = vmatprep.subr.bf16.mxu0 %v2585
    %2651 = vmatpush1.bf16.msra.mxu0 %v2584
    %2652 = vmatprep.subr.bf16.mxu0 %v2581
    %2653 = vmatpush1.bf16.msra.mxu0 %v2580
    %2654 = vmatprep.subr.bf16.mxu0 %v2577
    %2655 = vmatpush1.bf16.msra.mxu0 %v2576
    %2656 = vmatprep.subr.bf16.mxu0 0
    %2657 = vmatpush2.bf16.msra.mxu0 0
    %2658 = vmatprep.subr.bf16.mxu0 0
    %2659 = vmatpush2.bf16.msra.mxu0 0
    %2660 = vmatprep.subr.bf16.mxu0 0
    %2661 = vmatpush2.bf16.msra.mxu0 0
    %2662 = vmatprep.subr.bf16.mxu0 0
    %2663 = vmatpush2.bf16.msra.mxu0 0
    %2664 = vmatprep.subr.bf16.mxu0 0
    %2665 = vmatpush2.bf16.msra.mxu0 0
    %2666 = vmatprep.subr.bf16.mxu0 0
    %2667 = vmatpush2.bf16.msra.mxu0 0
    %2668 = vmatprep.subr.bf16.mxu0 0
    %2669 = vmatpush2.bf16.msra.mxu0 0
    %2670 = vmatprep.subr.bf16.mxu0 0
    %2671 = vmatpush2.bf16.msra.mxu0 0
    %2672 = vmatprep.mubr.bf16.mxu0 0
    %2673 = vmatmul.mubr.bf16.gmra.mxu0 %v2447
    %v2674 = vpop.f32.mrf.mxu0
    %v2675 = vadd.f32 0.0, %v2674
    %v2676 = vpop.f32.mrf.mxu0
    %v2677 = vadd.f32 0.0, %v2676
    %v2678 = vpop.f32.mrf.mxu0
    %v2679 = vpop.f32.mrf.mxu0
    %2680 = vdwg.mxu0
    %2681 = vmatprep.subr.bf16.mxu0 %v2607
    %2682 = vmatpush1.bf16.msra.mxu0 %v2606
    %2683 = vmatprep.subr.bf16.mxu0 %v2603
    %2684 = vmatpush1.bf16.msra.mxu0 %v2602
    %2685 = vmatprep.subr.bf16.mxu0 %v2599
    %2686 = vmatpush1.bf16.msra.mxu0 %v2598
    %2687 = vmatprep.subr.bf16.mxu0 %v2595
    %2688 = vmatpush1.bf16.msra.mxu0 %v2594
    %2689 = vmatprep.subr.bf16.mxu0 %v2591
    %2690 = vmatpush1.bf16.msra.mxu0 %v2590
    %2691 = vmatprep.subr.bf16.mxu0 %v2587
    %2692 = vmatpush1.bf16.msra.mxu0 %v2586
    %2693 = vmatprep.subr.bf16.mxu0 %v2583
    %2694 = vmatpush1.bf16.msra.mxu0 %v2582
    %2695 = vmatprep.subr.bf16.mxu0 %v2579
    %2696 = vmatpush1.bf16.msra.mxu0 %v2578
    %2697 = vmatprep.subr.bf16.mxu0 0
    %2698 = vmatpush2.bf16.msra.mxu0 0
    %2699 = vmatprep.subr.bf16.mxu0 0
    %2700 = vmatpush2.bf16.msra.mxu0 0
    %2701 = vmatprep.subr.bf16.mxu0 0
    %2702 = vmatpush2.bf16.msra.mxu0 0
    %2703 = vmatprep.subr.bf16.mxu0 0
    %2704 = vmatpush2.bf16.msra.mxu0 0
    %2705 = vmatprep.subr.bf16.mxu0 0
    %2706 = vmatpush2.bf16.msra.mxu0 0
    %2707 = vmatprep.subr.bf16.mxu0 0
    %2708 = vmatpush2.bf16.msra.mxu0 0
    %2709 = vmatprep.subr.bf16.mxu0 0
    %2710 = vmatpush2.bf16.msra.mxu0 0
    %2711 = vmatprep.subr.bf16.mxu0 0
    %2712 = vmatpush2.bf16.msra.mxu0 0
    %2713 = vmatprep.mubr.bf16.mxu0 0
    %2714 = vmatmul.mubr.bf16.gmra.mxu0 %v2447
    %v2715 = vpop.f32.mrf.mxu0
    %v2716 = vadd.f32 0.0, %v2715
    %v2717 = vpop.f32.mrf.mxu0
    %v2718 = vadd.f32 0.0, %v2717
    %v2719 = vpop.f32.mrf.mxu0
    %v2720 = vpop.f32.mrf.mxu0
    %2721 = vdwg.mxu0
    %v2722 = vadd.f32 %v2443, %v2675
    %v2723 = vadd.f32 %v2444, %v2677
    %v2724 = vadd.f32 %v2445, %v2716
    %v2725 = vadd.f32 %v2446, %v2718
    %v2726 = vxor.u32 %v2722, 2147483648
    %v2727 = vmul.f32 %v2726, 1.442695
    %v2728 = vpow.pop %v2727
    %v2729 = vadd.f32 %v2728, 1.0
    %v2730 = vrcp.pop %v2729
    %v2731 = vmul.f32 1.0, %v2730
    %v2732 = vxor.u32 %v2723, 2147483648
    %v2733 = vmul.f32 %v2732, 1.442695
    %v2734 = vpow.pop %v2733
    %v2735 = vadd.f32 %v2734, 1.0
    %v2736 = vrcp.pop %v2735
    %v2737 = vmul.f32 1.0, %v2736
    %v2738 = vtanh.pop %v2724
    %v2739 = vxor.u32 %v2725, 2147483648
    %v2740 = vmul.f32 %v2739, 1.442695
    %v2741 = vpow.pop %v2740
    %v2742 = vadd.f32 %v2741, 1.0
    %v2743 = vrcp.pop %v2742
    %v2744 = vmul.f32 1.0, %v2743
    %v2745 = vmul.f32 %v2737, %v2435
    %v2746 = vmul.f32 %v2731, %v2738
    %v2747 = vadd.f32 %v2745, %v2746
    %v2748 = vtanh.pop %v2747
    %v2749 = vmul.f32 %v2744, %v2748
    %s2750 = scalar_lea.vmem [#allocation3], 40
    %2751 = vst [vmem:[%s2750] sm:$0xff] %v2749
    %s2752 = smul.u32 6, 4
    %s2753 = smul.addr %s2752, 8
    %s2754 = scalar_lea.vmem [#allocation2], %s2753
    %v2755 = vld [vmem:[%s2754] sm:$0xff]
    %v2756 = vld [vmem:[%s2754 + $0x8] sm:$0xff]
    %v2757 = vld [vmem:[%s2754 + $0x10] sm:$0xff]
    %v2758 = vld [vmem:[%s2754 + $0x18] sm:$0xff]
    %v2759 = vpack.c.bf16 %v2749, %v2749
    %v2760 = vld [vmem:[%s2] sm:$0xff]
    %v2761 = vld [vmem:[%s2 + $0x8] sm:$0xff]
    %v2762 = vld [vmem:[%s2 + $0x10] sm:$0xff]
    %v2763 = vld [vmem:[%s2 + $0x18] sm:$0xff]
    %v2764 = vld [vmem:[%s2 + $0x20] sm:$0xff]
    %v2765 = vld [vmem:[%s2 + $0x28] sm:$0xff]
    %v2766 = vld [vmem:[%s2 + $0x30] sm:$0xff]
    %v2767 = vld [vmem:[%s2 + $0x38] sm:$0xff]
    %v2768 = vld [vmem:[%s2 + $0x40] sm:$0xff]
    %v2769 = vld [vmem:[%s2 + $0x48] sm:$0xff]
    %v2770 = vld [vmem:[%s2 + $0x50] sm:$0xff]
    %v2771 = vld [vmem:[%s2 + $0x58] sm:$0xff]
    %v2772 = vld [vmem:[%s2 + $0x60] sm:$0xff]
    %v2773 = vld [vmem:[%s2 + $0x68] sm:$0xff]
    %v2774 = vld [vmem:[%s2 + $0x70] sm:$0xff]
    %v2775 = vld [vmem:[%s2 + $0x78] sm:$0xff]
    %v2776 = vld [vmem:[%s2 + $0x80] sm:$0xff]
    %v2777 = vld [vmem:[%s2 + $0x88] sm:$0xff]
    %v2778 = vld [vmem:[%s2 + $0x90] sm:$0xff]
    %v2779 = vld [vmem:[%s2 + $0x98] sm:$0xff]
    %v2780 = vld [vmem:[%s2 + $0xa0] sm:$0xff]
    %v2781 = vld [vmem:[%s2 + $0xa8] sm:$0xff]
    %v2782 = vld [vmem:[%s2 + $0xb0] sm:$0xff]
    %v2783 = vld [vmem:[%s2 + $0xb8] sm:$0xff]
    %v2784 = vld [vmem:[%s2 + $0xc0] sm:$0xff]
    %v2785 = vld [vmem:[%s2 + $0xc8] sm:$0xff]
    %v2786 = vld [vmem:[%s2 + $0xd0] sm:$0xff]
    %v2787 = vld [vmem:[%s2 + $0xd8] sm:$0xff]
    %v2788 = vld [vmem:[%s2 + $0xe0] sm:$0xff]
    %v2789 = vld [vmem:[%s2 + $0xe8] sm:$0xff]
    %v2790 = vld [vmem:[%s2 + $0xf0] sm:$0xff]
    %v2791 = vld [vmem:[%s2 + $0xf8] sm:$0xff]
    %v2824 = vunpack.c.l.b16 %v2760
    %v2825 = vunpack.c.h.b16 %v2760
    %v2826 = vunpack.c.l.b16 %v2761
    %v2827 = vunpack.c.h.b16 %v2761
    %v2828 = vunpack.c.l.b16 %v2762
    %v2829 = vunpack.c.h.b16 %v2762
    %v2830 = vunpack.c.l.b16 %v2763
    %v2831 = vunpack.c.h.b16 %v2763
    %v2832 = vunpack.c.l.b16 %v2764
    %v2833 = vunpack.c.h.b16 %v2764
    %v2834 = vunpack.c.l.b16 %v2765
    %v2835 = vunpack.c.h.b16 %v2765
    %v2836 = vunpack.c.l.b16 %v2766
    %v2837 = vunpack.c.h.b16 %v2766
    %v2838 = vunpack.c.l.b16 %v2767
    %v2839 = vunpack.c.h.b16 %v2767
    %v2840 = vunpack.c.l.b16 %v2768
    %v2841 = vunpack.c.h.b16 %v2768
    %v2842 = vunpack.c.l.b16 %v2769
    %v2843 = vunpack.c.h.b16 %v2769
    %v2844 = vunpack.c.l.b16 %v2770
    %v2845 = vunpack.c.h.b16 %v2770
    %v2846 = vunpack.c.l.b16 %v2771
    %v2847 = vunpack.c.h.b16 %v2771
    %v2848 = vunpack.c.l.b16 %v2772
    %v2849 = vunpack.c.h.b16 %v2772
    %v2850 = vunpack.c.l.b16 %v2773
    %v2851 = vunpack.c.h.b16 %v2773
    %v2852 = vunpack.c.l.b16 %v2774
    %v2853 = vunpack.c.h.b16 %v2774
    %v2854 = vunpack.c.l.b16 %v2775
    %v2855 = vunpack.c.h.b16 %v2775
    %v2856 = vunpack.c.l.b16 %v2776
    %v2857 = vunpack.c.h.b16 %v2776
    %v2858 = vunpack.c.l.b16 %v2777
    %v2859 = vunpack.c.h.b16 %v2777
    %v2860 = vunpack.c.l.b16 %v2778
    %v2861 = vunpack.c.h.b16 %v2778
    %v2862 = vunpack.c.l.b16 %v2779
    %v2863 = vunpack.c.h.b16 %v2779
    %v2864 = vunpack.c.l.b16 %v2780
    %v2865 = vunpack.c.h.b16 %v2780
    %v2866 = vunpack.c.l.b16 %v2781
    %v2867 = vunpack.c.h.b16 %v2781
    %v2868 = vunpack.c.l.b16 %v2782
    %v2869 = vunpack.c.h.b16 %v2782
    %v2870 = vunpack.c.l.b16 %v2783
    %v2871 = vunpack.c.h.b16 %v2783
    %v2872 = vunpack.c.l.b16 %v2784
    %v2873 = vunpack.c.h.b16 %v2784
    %v2874 = vunpack.c.l.b16 %v2785
    %v2875 = vunpack.c.h.b16 %v2785
    %v2876 = vunpack.c.l.b16 %v2786
    %v2877 = vunpack.c.h.b16 %v2786
    %v2878 = vunpack.c.l.b16 %v2787
    %v2879 = vunpack.c.h.b16 %v2787
    %v2880 = vunpack.c.l.b16 %v2788
    %v2881 = vunpack.c.h.b16 %v2788
    %v2882 = vunpack.c.l.b16 %v2789
    %v2883 = vunpack.c.h.b16 %v2789
    %v2884 = vunpack.c.l.b16 %v2790
    %v2885 = vunpack.c.h.b16 %v2790
    %v2886 = vunpack.c.l.b16 %v2791
    %v2887 = vunpack.c.h.b16 %v2791
    %v2888 = vpack.c.b16 %v2828, %v2824
    %v2889 = vpack.c.b16 %v2829, %v2825
    %v2890 = vpack.c.b16 %v2830, %v2826
    %v2891 = vpack.c.b16 %v2831, %v2827
    %v2892 = vpack.c.b16 %v2836, %v2832
    %v2893 = vpack.c.b16 %v2837, %v2833
    %v2894 = vpack.c.b16 %v2838, %v2834
    %v2895 = vpack.c.b16 %v2839, %v2835
    %v2896 = vpack.c.b16 %v2844, %v2840
    %v2897 = vpack.c.b16 %v2845, %v2841
    %v2898 = vpack.c.b16 %v2846, %v2842
    %v2899 = vpack.c.b16 %v2847, %v2843
    %v2900 = vpack.c.b16 %v2852, %v2848
    %v2901 = vpack.c.b16 %v2853, %v2849
    %v2902 = vpack.c.b16 %v2854, %v2850
    %v2903 = vpack.c.b16 %v2855, %v2851
    %v2904 = vpack.c.b16 %v2860, %v2856
    %v2905 = vpack.c.b16 %v2861, %v2857
    %v2906 = vpack.c.b16 %v2862, %v2858
    %v2907 = vpack.c.b16 %v2863, %v2859
    %v2908 = vpack.c.b16 %v2868, %v2864
    %v2909 = vpack.c.b16 %v2869, %v2865
    %v2910 = vpack.c.b16 %v2870, %v2866
    %v2911 = vpack.c.b16 %v2871, %v2867
    %v2912 = vpack.c.b16 %v2876, %v2872
    %v2913 = vpack.c.b16 %v2877, %v2873
    %v2914 = vpack.c.b16 %v2878, %v2874
    %v2915 = vpack.c.b16 %v2879, %v2875
    %v2916 = vpack.c.b16 %v2884, %v2880
    %v2917 = vpack.c.b16 %v2885, %v2881
    %v2918 = vpack.c.b16 %v2886, %v2882
    %v2919 = vpack.c.b16 %v2887, %v2883
    %2952 = vmatprep.subr.bf16.mxu0 %v2917
    %2953 = vmatpush1.bf16.msra.mxu0 %v2916
    %2954 = vmatprep.subr.bf16.mxu0 %v2913
    %2955 = vmatpush1.bf16.msra.mxu0 %v2912
    %2956 = vmatprep.subr.bf16.mxu0 %v2909
    %2957 = vmatpush1.bf16.msra.mxu0 %v2908
    %2958 = vmatprep.subr.bf16.mxu0 %v2905
    %2959 = vmatpush1.bf16.msra.mxu0 %v2904
    %2960 = vmatprep.subr.bf16.mxu0 %v2901
    %2961 = vmatpush1.bf16.msra.mxu0 %v2900
    %2962 = vmatprep.subr.bf16.mxu0 %v2897
    %2963 = vmatpush1.bf16.msra.mxu0 %v2896
    %2964 = vmatprep.subr.bf16.mxu0 %v2893
    %2965 = vmatpush1.bf16.msra.mxu0 %v2892
    %2966 = vmatprep.subr.bf16.mxu0 %v2889
    %2967 = vmatpush1.bf16.msra.mxu0 %v2888
    %2968 = vmatprep.subr.bf16.mxu0 0
    %2969 = vmatpush2.bf16.msra.mxu0 0
    %2970 = vmatprep.subr.bf16.mxu0 0
    %2971 = vmatpush2.bf16.msra.mxu0 0
    %2972 = vmatprep.subr.bf16.mxu0 0
    %2973 = vmatpush2.bf16.msra.mxu0 0
    %2974 = vmatprep.subr.bf16.mxu0 0
    %2975 = vmatpush2.bf16.msra.mxu0 0
    %2976 = vmatprep.subr.bf16.mxu0 0
    %2977 = vmatpush2.bf16.msra.mxu0 0
    %2978 = vmatprep.subr.bf16.mxu0 0
    %2979 = vmatpush2.bf16.msra.mxu0 0
    %2980 = vmatprep.subr.bf16.mxu0 0
    %2981 = vmatpush2.bf16.msra.mxu0 0
    %2982 = vmatprep.subr.bf16.mxu0 0
    %2983 = vmatpush2.bf16.msra.mxu0 0
    %2984 = vmatprep.mubr.bf16.mxu0 0
    %2985 = vmatmul.mubr.bf16.gmra.mxu0 %v2759
    %v2986 = vpop.f32.mrf.mxu0
    %v2987 = vadd.f32 0.0, %v2986
    %v2988 = vpop.f32.mrf.mxu0
    %v2989 = vadd.f32 0.0, %v2988
    %v2990 = vpop.f32.mrf.mxu0
    %v2991 = vpop.f32.mrf.mxu0
    %2992 = vdwg.mxu0
    %2993 = vmatprep.subr.bf16.mxu0 %v2919
    %2994 = vmatpush1.bf16.msra.mxu0 %v2918
    %2995 = vmatprep.subr.bf16.mxu0 %v2915
    %2996 = vmatpush1.bf16.msra.mxu0 %v2914
    %2997 = vmatprep.subr.bf16.mxu0 %v2911
    %2998 = vmatpush1.bf16.msra.mxu0 %v2910
    %2999 = vmatprep.subr.bf16.mxu0 %v2907
    %3000 = vmatpush1.bf16.msra.mxu0 %v2906
    %3001 = vmatprep.subr.bf16.mxu0 %v2903
    %3002 = vmatpush1.bf16.msra.mxu0 %v2902
    %3003 = vmatprep.subr.bf16.mxu0 %v2899
    %3004 = vmatpush1.bf16.msra.mxu0 %v2898
    %3005 = vmatprep.subr.bf16.mxu0 %v2895
    %3006 = vmatpush1.bf16.msra.mxu0 %v2894
    %3007 = vmatprep.subr.bf16.mxu0 %v2891
    %3008 = vmatpush1.bf16.msra.mxu0 %v2890
    %3009 = vmatprep.subr.bf16.mxu0 0
    %3010 = vmatpush2.bf16.msra.mxu0 0
    %3011 = vmatprep.subr.bf16.mxu0 0
    %3012 = vmatpush2.bf16.msra.mxu0 0
    %3013 = vmatprep.subr.bf16.mxu0 0
    %3014 = vmatpush2.bf16.msra.mxu0 0
    %3015 = vmatprep.subr.bf16.mxu0 0
    %3016 = vmatpush2.bf16.msra.mxu0 0
    %3017 = vmatprep.subr.bf16.mxu0 0
    %3018 = vmatpush2.bf16.msra.mxu0 0
    %3019 = vmatprep.subr.bf16.mxu0 0
    %3020 = vmatpush2.bf16.msra.mxu0 0
    %3021 = vmatprep.subr.bf16.mxu0 0
    %3022 = vmatpush2.bf16.msra.mxu0 0
    %3023 = vmatprep.subr.bf16.mxu0 0
    %3024 = vmatpush2.bf16.msra.mxu0 0
    %3025 = vmatprep.mubr.bf16.mxu0 0
    %3026 = vmatmul.mubr.bf16.gmra.mxu0 %v2759
    %v3027 = vpop.f32.mrf.mxu0
    %v3028 = vadd.f32 0.0, %v3027
    %v3029 = vpop.f32.mrf.mxu0
    %v3030 = vadd.f32 0.0, %v3029
    %v3031 = vpop.f32.mrf.mxu0
    %v3032 = vpop.f32.mrf.mxu0
    %3033 = vdwg.mxu0
    %v3034 = vadd.f32 %v2755, %v2987
    %v3035 = vadd.f32 %v2756, %v2989
    %v3036 = vadd.f32 %v2757, %v3028
    %v3037 = vadd.f32 %v2758, %v3030
    %v3038 = vxor.u32 %v3034, 2147483648
    %v3039 = vmul.f32 %v3038, 1.442695
    %v3040 = vpow.pop %v3039
    %v3041 = vadd.f32 %v3040, 1.0
    %v3042 = vrcp.pop %v3041
    %v3043 = vmul.f32 1.0, %v3042
    %v3044 = vxor.u32 %v3035, 2147483648
    %v3045 = vmul.f32 %v3044, 1.442695
    %v3046 = vpow.pop %v3045
    %v3047 = vadd.f32 %v3046, 1.0
    %v3048 = vrcp.pop %v3047
    %v3049 = vmul.f32 1.0, %v3048
    %v3050 = vtanh.pop %v3036
    %v3051 = vxor.u32 %v3037, 2147483648
    %v3052 = vmul.f32 %v3051, 1.442695
    %v3053 = vpow.pop %v3052
    %v3054 = vadd.f32 %v3053, 1.0
    %v3055 = vrcp.pop %v3054
    %v3056 = vmul.f32 1.0, %v3055
    %v3057 = vmul.f32 %v3049, %v2747
    %v3058 = vmul.f32 %v3043, %v3050
    %v3059 = vadd.f32 %v3057, %v3058
    %v3060 = vtanh.pop %v3059
    %v3061 = vmul.f32 %v3056, %v3060
    %s3062 = scalar_lea.vmem [#allocation3], 48
    %3063 = vst [vmem:[%s3062] sm:$0xff] %v3061
    %s3064 = smul.u32 7, 4
    %s3065 = smul.addr %s3064, 8
    %s3066 = scalar_lea.vmem [#allocation2], %s3065
    %v3067 = vld [vmem:[%s3066] sm:$0xff]
    %v3068 = vld [vmem:[%s3066 + $0x8] sm:$0xff]
    %v3069 = vld [vmem:[%s3066 + $0x10] sm:$0xff]
    %v3070 = vld [vmem:[%s3066 + $0x18] sm:$0xff]
    %v3071 = vpack.c.bf16 %v3061, %v3061
    %v3072 = vld [vmem:[%s2] sm:$0xff]
    %v3073 = vld [vmem:[%s2 + $0x8] sm:$0xff]
    %v3074 = vld [vmem:[%s2 + $0x10] sm:$0xff]
    %v3075 = vld [vmem:[%s2 + $0x18] sm:$0xff]
    %v3076 = vld [vmem:[%s2 + $0x20] sm:$0xff]
    %v3077 = vld [vmem:[%s2 + $0x28] sm:$0xff]
    %v3078 = vld [vmem:[%s2 + $0x30] sm:$0xff]
    %v3079 = vld [vmem:[%s2 + $0x38] sm:$0xff]
    %v3080 = vld [vmem:[%s2 + $0x40] sm:$0xff]
    %v3081 = vld [vmem:[%s2 + $0x48] sm:$0xff]
    %v3082 = vld [vmem:[%s2 + $0x50] sm:$0xff]
    %v3083 = vld [vmem:[%s2 + $0x58] sm:$0xff]
    %v3084 = vld [vmem:[%s2 + $0x60] sm:$0xff]
    %v3085 = vld [vmem:[%s2 + $0x68] sm:$0xff]
    %v3086 = vld [vmem:[%s2 + $0x70] sm:$0xff]
    %v3087 = vld [vmem:[%s2 + $0x78] sm:$0xff]
    %v3088 = vld [vmem:[%s2 + $0x80] sm:$0xff]
    %v3089 = vld [vmem:[%s2 + $0x88] sm:$0xff]
    %v3090 = vld [vmem:[%s2 + $0x90] sm:$0xff]
    %v3091 = vld [vmem:[%s2 + $0x98] sm:$0xff]
    %v3092 = vld [vmem:[%s2 + $0xa0] sm:$0xff]
    %v3093 = vld [vmem:[%s2 + $0xa8] sm:$0xff]
    %v3094 = vld [vmem:[%s2 + $0xb0] sm:$0xff]
    %v3095 = vld [vmem:[%s2 + $0xb8] sm:$0xff]
    %v3096 = vld [vmem:[%s2 + $0xc0] sm:$0xff]
    %v3097 = vld [vmem:[%s2 + $0xc8] sm:$0xff]
    %v3098 = vld [vmem:[%s2 + $0xd0] sm:$0xff]
    %v3099 = vld [vmem:[%s2 + $0xd8] sm:$0xff]
    %v3100 = vld [vmem:[%s2 + $0xe0] sm:$0xff]
    %v3101 = vld [vmem:[%s2 + $0xe8] sm:$0xff]
    %v3102 = vld [vmem:[%s2 + $0xf0] sm:$0xff]
    %v3103 = vld [vmem:[%s2 + $0xf8] sm:$0xff]
    %v3136 = vunpack.c.l.b16 %v3072
    %v3137 = vunpack.c.h.b16 %v3072
    %v3138 = vunpack.c.l.b16 %v3073
    %v3139 = vunpack.c.h.b16 %v3073
    %v3140 = vunpack.c.l.b16 %v3074
    %v3141 = vunpack.c.h.b16 %v3074
    %v3142 = vunpack.c.l.b16 %v3075
    %v3143 = vunpack.c.h.b16 %v3075
    %v3144 = vunpack.c.l.b16 %v3076
    %v3145 = vunpack.c.h.b16 %v3076
    %v3146 = vunpack.c.l.b16 %v3077
    %v3147 = vunpack.c.h.b16 %v3077
    %v3148 = vunpack.c.l.b16 %v3078
    %v3149 = vunpack.c.h.b16 %v3078
    %v3150 = vunpack.c.l.b16 %v3079
    %v3151 = vunpack.c.h.b16 %v3079
    %v3152 = vunpack.c.l.b16 %v3080
    %v3153 = vunpack.c.h.b16 %v3080
    %v3154 = vunpack.c.l.b16 %v3081
    %v3155 = vunpack.c.h.b16 %v3081
    %v3156 = vunpack.c.l.b16 %v3082
    %v3157 = vunpack.c.h.b16 %v3082
    %v3158 = vunpack.c.l.b16 %v3083
    %v3159 = vunpack.c.h.b16 %v3083
    %v3160 = vunpack.c.l.b16 %v3084
    %v3161 = vunpack.c.h.b16 %v3084
    %v3162 = vunpack.c.l.b16 %v3085
    %v3163 = vunpack.c.h.b16 %v3085
    %v3164 = vunpack.c.l.b16 %v3086
    %v3165 = vunpack.c.h.b16 %v3086
    %v3166 = vunpack.c.l.b16 %v3087
    %v3167 = vunpack.c.h.b16 %v3087
    %v3168 = vunpack.c.l.b16 %v3088
    %v3169 = vunpack.c.h.b16 %v3088
    %v3170 = vunpack.c.l.b16 %v3089
    %v3171 = vunpack.c.h.b16 %v3089
    %v3172 = vunpack.c.l.b16 %v3090
    %v3173 = vunpack.c.h.b16 %v3090
    %v3174 = vunpack.c.l.b16 %v3091
    %v3175 = vunpack.c.h.b16 %v3091
    %v3176 = vunpack.c.l.b16 %v3092
    %v3177 = vunpack.c.h.b16 %v3092
    %v3178 = vunpack.c.l.b16 %v3093
    %v3179 = vunpack.c.h.b16 %v3093
    %v3180 = vunpack.c.l.b16 %v3094
    %v3181 = vunpack.c.h.b16 %v3094
    %v3182 = vunpack.c.l.b16 %v3095
    %v3183 = vunpack.c.h.b16 %v3095
    %v3184 = vunpack.c.l.b16 %v3096
    %v3185 = vunpack.c.h.b16 %v3096
    %v3186 = vunpack.c.l.b16 %v3097
    %v3187 = vunpack.c.h.b16 %v3097
    %v3188 = vunpack.c.l.b16 %v3098
    %v3189 = vunpack.c.h.b16 %v3098
    %v3190 = vunpack.c.l.b16 %v3099
    %v3191 = vunpack.c.h.b16 %v3099
    %v3192 = vunpack.c.l.b16 %v3100
    %v3193 = vunpack.c.h.b16 %v3100
    %v3194 = vunpack.c.l.b16 %v3101
    %v3195 = vunpack.c.h.b16 %v3101
    %v3196 = vunpack.c.l.b16 %v3102
    %v3197 = vunpack.c.h.b16 %v3102
    %v3198 = vunpack.c.l.b16 %v3103
    %v3199 = vunpack.c.h.b16 %v3103
    %v3200 = vpack.c.b16 %v3140, %v3136
    %v3201 = vpack.c.b16 %v3141, %v3137
    %v3202 = vpack.c.b16 %v3142, %v3138
    %v3203 = vpack.c.b16 %v3143, %v3139
    %v3204 = vpack.c.b16 %v3148, %v3144
    %v3205 = vpack.c.b16 %v3149, %v3145
    %v3206 = vpack.c.b16 %v3150, %v3146
    %v3207 = vpack.c.b16 %v3151, %v3147
    %v3208 = vpack.c.b16 %v3156, %v3152
    %v3209 = vpack.c.b16 %v3157, %v3153
    %v3210 = vpack.c.b16 %v3158, %v3154
    %v3211 = vpack.c.b16 %v3159, %v3155
    %v3212 = vpack.c.b16 %v3164, %v3160
    %v3213 = vpack.c.b16 %v3165, %v3161
    %v3214 = vpack.c.b16 %v3166, %v3162
    %v3215 = vpack.c.b16 %v3167, %v3163
    %v3216 = vpack.c.b16 %v3172, %v3168
    %v3217 = vpack.c.b16 %v3173, %v3169
    %v3218 = vpack.c.b16 %v3174, %v3170
    %v3219 = vpack.c.b16 %v3175, %v3171
    %v3220 = vpack.c.b16 %v3180, %v3176
    %v3221 = vpack.c.b16 %v3181, %v3177
    %v3222 = vpack.c.b16 %v3182, %v3178
    %v3223 = vpack.c.b16 %v3183, %v3179
    %v3224 = vpack.c.b16 %v3188, %v3184
    %v3225 = vpack.c.b16 %v3189, %v3185
    %v3226 = vpack.c.b16 %v3190, %v3186
    %v3227 = vpack.c.b16 %v3191, %v3187
    %v3228 = vpack.c.b16 %v3196, %v3192
    %v3229 = vpack.c.b16 %v3197, %v3193
    %v3230 = vpack.c.b16 %v3198, %v3194
    %v3231 = vpack.c.b16 %v3199, %v3195
    %3264 = vmatprep.subr.bf16.mxu0 %v3229
    %3265 = vmatpush1.bf16.msra.mxu0 %v3228
    %3266 = vmatprep.subr.bf16.mxu0 %v3225
    %3267 = vmatpush1.bf16.msra.mxu0 %v3224
    %3268 = vmatprep.subr.bf16.mxu0 %v3221
    %3269 = vmatpush1.bf16.msra.mxu0 %v3220
    %3270 = vmatprep.subr.bf16.mxu0 %v3217
    %3271 = vmatpush1.bf16.msra.mxu0 %v3216
    %3272 = vmatprep.subr.bf16.mxu0 %v3213
    %3273 = vmatpush1.bf16.msra.mxu0 %v3212
    %3274 = vmatprep.subr.bf16.mxu0 %v3209
    %3275 = vmatpush1.bf16.msra.mxu0 %v3208
    %3276 = vmatprep.subr.bf16.mxu0 %v3205
    %3277 = vmatpush1.bf16.msra.mxu0 %v3204
    %3278 = vmatprep.subr.bf16.mxu0 %v3201
    %3279 = vmatpush1.bf16.msra.mxu0 %v3200
    %3280 = vmatprep.subr.bf16.mxu0 0
    %3281 = vmatpush2.bf16.msra.mxu0 0
    %3282 = vmatprep.subr.bf16.mxu0 0
    %3283 = vmatpush2.bf16.msra.mxu0 0
    %3284 = vmatprep.subr.bf16.mxu0 0
    %3285 = vmatpush2.bf16.msra.mxu0 0
    %3286 = vmatprep.subr.bf16.mxu0 0
    %3287 = vmatpush2.bf16.msra.mxu0 0
    %3288 = vmatprep.subr.bf16.mxu0 0
    %3289 = vmatpush2.bf16.msra.mxu0 0
    %3290 = vmatprep.subr.bf16.mxu0 0
    %3291 = vmatpush2.bf16.msra.mxu0 0
    %3292 = vmatprep.subr.bf16.mxu0 0
    %3293 = vmatpush2.bf16.msra.mxu0 0
    %3294 = vmatprep.subr.bf16.mxu0 0
    %3295 = vmatpush2.bf16.msra.mxu0 0
    %3296 = vmatprep.mubr.bf16.mxu0 0
    %3297 = vmatmul.mubr.bf16.gmra.mxu0 %v3071
    %v3298 = vpop.f32.mrf.mxu0
    %v3299 = vadd.f32 0.0, %v3298
    %v3300 = vpop.f32.mrf.mxu0
    %v3301 = vadd.f32 0.0, %v3300
    %v3302 = vpop.f32.mrf.mxu0
    %v3303 = vpop.f32.mrf.mxu0
    %3304 = vdwg.mxu0
    %3305 = vmatprep.subr.bf16.mxu0 %v3231
    %3306 = vmatpush1.bf16.msra.mxu0 %v3230
    %3307 = vmatprep.subr.bf16.mxu0 %v3227
    %3308 = vmatpush1.bf16.msra.mxu0 %v3226
    %3309 = vmatprep.subr.bf16.mxu0 %v3223
    %3310 = vmatpush1.bf16.msra.mxu0 %v3222
    %3311 = vmatprep.subr.bf16.mxu0 %v3219
    %3312 = vmatpush1.bf16.msra.mxu0 %v3218
    %3313 = vmatprep.subr.bf16.mxu0 %v3215
    %3314 = vmatpush1.bf16.msra.mxu0 %v3214
    %3315 = vmatprep.subr.bf16.mxu0 %v3211
    %3316 = vmatpush1.bf16.msra.mxu0 %v3210
    %3317 = vmatprep.subr.bf16.mxu0 %v3207
    %3318 = vmatpush1.bf16.msra.mxu0 %v3206
    %3319 = vmatprep.subr.bf16.mxu0 %v3203
    %3320 = vmatpush1.bf16.msra.mxu0 %v3202
    %3321 = vmatprep.subr.bf16.mxu0 0
    %3322 = vmatpush2.bf16.msra.mxu0 0
    %3323 = vmatprep.subr.bf16.mxu0 0
    %3324 = vmatpush2.bf16.msra.mxu0 0
    %3325 = vmatprep.subr.bf16.mxu0 0
    %3326 = vmatpush2.bf16.msra.mxu0 0
    %3327 = vmatprep.subr.bf16.mxu0 0
    %3328 = vmatpush2.bf16.msra.mxu0 0
    %3329 = vmatprep.subr.bf16.mxu0 0
    %3330 = vmatpush2.bf16.msra.mxu0 0
    %3331 = vmatprep.subr.bf16.mxu0 0
    %3332 = vmatpush2.bf16.msra.mxu0 0
    %3333 = vmatprep.subr.bf16.mxu0 0
    %3334 = vmatpush2.bf16.msra.mxu0 0
    %3335 = vmatprep.subr.bf16.mxu0 0
    %3336 = vmatpush2.bf16.msra.mxu0 0
    %3337 = vmatprep.mubr.bf16.mxu0 0
    %3338 = vmatmul.mubr.bf16.gmra.mxu0 %v3071
    %v3339 = vpop.f32.mrf.mxu0
    %v3340 = vadd.f32 0.0, %v3339
    %v3341 = vpop.f32.mrf.mxu0
    %v3342 = vadd.f32 0.0, %v3341
    %v3343 = vpop.f32.mrf.mxu0
    %v3344 = vpop.f32.mrf.mxu0
    %3345 = vdwg.mxu0
    %v3346 = vadd.f32 %v3067, %v3299
    %v3347 = vadd.f32 %v3068, %v3301
    %v3348 = vadd.f32 %v3069, %v3340
    %v3349 = vadd.f32 %v3070, %v3342
    %v3350 = vxor.u32 %v3346, 2147483648
    %v3351 = vmul.f32 %v3350, 1.442695
    %v3352 = vpow.pop %v3351
    %v3353 = vadd.f32 %v3352, 1.0
    %v3354 = vrcp.pop %v3353
    %v3355 = vmul.f32 1.0, %v3354
    %v3356 = vxor.u32 %v3347, 2147483648
    %v3357 = vmul.f32 %v3356, 1.442695
    %v3358 = vpow.pop %v3357
    %v3359 = vadd.f32 %v3358, 1.0
    %v3360 = vrcp.pop %v3359
    %v3361 = vmul.f32 1.0, %v3360
    %v3362 = vtanh.pop %v3348
    %v3363 = vxor.u32 %v3349, 2147483648
    %v3364 = vmul.f32 %v3363, 1.442695
    %v3365 = vpow.pop %v3364
    %v3366 = vadd.f32 %v3365, 1.0
    %v3367 = vrcp.pop %v3366
    %v3368 = vmul.f32 1.0, %v3367
    %v3369 = vmul.f32 %v3361, %v3059
    %v3370 = vmul.f32 %v3355, %v3362
    %v3371 = vadd.f32 %v3369, %v3370
    %v3372 = vtanh.pop %v3371
    %v3373 = vmul.f32 %v3368, %v3372
    %s3374 = scalar_lea.vmem [#allocation3], 56
    %3375 = vst [vmem:[%s3374] sm:$0xff] %v3373
    %3376 = vst [vmem:[%s8] sm:$0xff] %v3373
    %3377 = vst [vmem:[%s9] sm:$0xff] %v3371
    %v3378 = vld [vmem:[#allocation3] sm:$0xff]
    %v3379 = vld [vmem:[#allocation3 + $0x8] sm:$0xff]
    %v3380 = vld [vmem:[#allocation3 + $0x10] sm:$0xff]
    %v3381 = vld [vmem:[#allocation3 + $0x18] sm:$0xff]
    %v3382 = vld [vmem:[#allocation3 + $0x20] sm:$0xff]
    %v3383 = vld [vmem:[#allocation3 + $0x28] sm:$0xff]
    %v3384 = vld [vmem:[#allocation3 + $0x30] sm:$0xff]
    %v3385 = vld [vmem:[#allocation3 + $0x38] sm:$0xff]
    %v3386 = vpack.c.bf16 %v3379, %v3378
    %v3387 = vpack.c.bf16 %v3381, %v3380
    %v3388 = vpack.c.bf16 %v3383, %v3382
    %v3389 = vpack.c.bf16 %v3385, %v3384
    %v3390 = vld [vmem:[%s3] sm:$0xf]
    %v3391 = vld [vmem:[%s3 + $0x4] sm:$0xf]
    %v3392 = vld [vmem:[%s3 + $0x8] sm:$0xf]
    %v3393 = vld [vmem:[%s3 + $0xc] sm:$0xf]
    %v3394 = vld [vmem:[%s3 + $0x10] sm:$0xf]
    %v3395 = vld [vmem:[%s3 + $0x14] sm:$0xf]
    %v3396 = vld [vmem:[%s3 + $0x18] sm:$0xf]
    %v3397 = vld [vmem:[%s3 + $0x1c] sm:$0xf]
    %v3398 = vld [vmem:[%s3 + $0x20] sm:$0xf]
    %v3399 = vld [vmem:[%s3 + $0x24] sm:$0xf]
    %v3400 = vld [vmem:[%s3 + $0x28] sm:$0xf]
    %v3401 = vld [vmem:[%s3 + $0x2c] sm:$0xf]
    %v3402 = vld [vmem:[%s3 + $0x30] sm:$0xf]
    %v3403 = vld [vmem:[%s3 + $0x34] sm:$0xf]
    %v3404 = vld [vmem:[%s3 + $0x38] sm:$0xf]
    %v3405 = vld [vmem:[%s3 + $0x3c] sm:$0xf]
    %v3406 = vld [vmem:[%s4] sm:$0x1]
    %v3408 = vlaneseq
    %v3409 = vshrl.u32 %v3408, 7
    %v3410 = vsub.s32 0, %v3409
    %v3411 = vrot.slane %v3406, %v3410
    %v3429 = vunpack.c.l.b16 %v3390
    %v3430 = vunpack.c.l.b16 %v3391
    %v3431 = vunpack.c.l.b16 %v3392
    %v3432 = vunpack.c.l.b16 %v3393
    %v3433 = vunpack.c.l.b16 %v3394
    %v3434 = vunpack.c.l.b16 %v3395
    %v3435 = vunpack.c.l.b16 %v3396
    %v3436 = vunpack.c.l.b16 %v3397
    %v3437 = vunpack.c.l.b16 %v3398
    %v3438 = vunpack.c.l.b16 %v3399
    %v3439 = vunpack.c.l.b16 %v3400
    %v3440 = vunpack.c.l.b16 %v3401
    %v3441 = vunpack.c.l.b16 %v3402
    %v3442 = vunpack.c.l.b16 %v3403
    %v3443 = vunpack.c.l.b16 %v3404
    %v3444 = vunpack.c.l.b16 %v3405
    %v3445 = vpack.c.b16 %v3430, %v3429
    %v3446 = vpack.c.b16 %v3432, %v3431
    %v3447 = vpack.c.b16 %v3434, %v3433
    %v3448 = vpack.c.b16 %v3436, %v3435
    %v3449 = vpack.c.b16 %v3438, %v3437
    %v3450 = vpack.c.b16 %v3440, %v3439
    %v3451 = vpack.c.b16 %v3442, %v3441
    %v3452 = vpack.c.b16 %v3444, %v3443
    %3461 = vmatprep.subr.bf16.mxu0 0
    %3462 = vmatpush1.bf16.msra.mxu0 %v3452
    %3463 = vmatprep.subr.bf16.mxu0 0
    %3464 = vmatpush1.bf16.msra.mxu0 %v3451
    %3465 = vmatprep.subr.bf16.mxu0 0
    %3466 = vmatpush1.bf16.msra.mxu0 %v3450
    %3467 = vmatprep.subr.bf16.mxu0 0
    %3468 = vmatpush1.bf16.msra.mxu0 %v3449
    %3469 = vmatprep.subr.bf16.mxu0 0
    %3470 = vmatpush1.bf16.msra.mxu0 %v3448
    %3471 = vmatprep.subr.bf16.mxu0 0
    %3472 = vmatpush1.bf16.msra.mxu0 %v3447
    %3473 = vmatprep.subr.bf16.mxu0 0
    %3474 = vmatpush1.bf16.msra.mxu0 %v3446
    %3475 = vmatprep.subr.bf16.mxu0 0
    %3476 = vmatpush1.bf16.msra.mxu0 %v3445
    %3477 = vmatprep.subr.bf16.mxu0 0
    %3478 = vmatpush2.bf16.msra.mxu0 0
    %3479 = vmatprep.subr.bf16.mxu0 0
    %3480 = vmatpush2.bf16.msra.mxu0 0
    %3481 = vmatprep.subr.bf16.mxu0 0
    %3482 = vmatpush2.bf16.msra.mxu0 0
    %3483 = vmatprep.subr.bf16.mxu0 0
    %3484 = vmatpush2.bf16.msra.mxu0 0
    %3485 = vmatprep.subr.bf16.mxu0 0
    %3486 = vmatpush2.bf16.msra.mxu0 0
    %3487 = vmatprep.subr.bf16.mxu0 0
    %3488 = vmatpush2.bf16.msra.mxu0 0
    %3489 = vmatprep.subr.bf16.mxu0 0
    %3490 = vmatpush2.bf16.msra.mxu0 0
    %3491 = vmatprep.subr.bf16.mxu0 0
    %3492 = vmatpush2.bf16.msra.mxu0 0
    %3493 = vmatprep.mubr.bf16.mxu0 0
    %3494 = vmatmul.mubr.bf16.gmra.mxu0 %v3386
    %v3495 = vpop.f32.mrf.mxu0
    %v3496 = vadd.f32 %v3411, %v3495
    %v3497 = vpop.f32.mrf.mxu0
    %v3498 = vpop.f32.mrf.mxu0
    %v3499 = vadd.f32 %v3411, %v3498
    %v3500 = vpop.f32.mrf.mxu0
    %3501 = vmatprep.mubr.bf16.mxu0 0
    %3502 = vmatmul.mubr.bf16.gmra.mxu0 %v3387
    %v3503 = vpop.f32.mrf.mxu0
    %v3504 = vadd.f32 %v3411, %v3503
    %v3505 = vpop.f32.mrf.mxu0
    %v3506 = vpop.f32.mrf.mxu0
    %v3507 = vadd.f32 %v3411, %v3506
    %v3508 = vpop.f32.mrf.mxu0
    %3509 = vmatprep.mubr.bf16.mxu0 0
    %3510 = vmatmul.mubr.bf16.gmra.mxu0 %v3388
    %v3511 = vpop.f32.mrf.mxu0
    %v3512 = vadd.f32 %v3411, %v3511
    %v3513 = vpop.f32.mrf.mxu0
    %v3514 = vpop.f32.mrf.mxu0
    %v3515 = vadd.f32 %v3411, %v3514
    %v3516 = vpop.f32.mrf.mxu0
    %3517 = vmatprep.mubr.bf16.mxu0 0
    %3518 = vmatmul.mubr.bf16.gmra.mxu0 %v3389
    %v3519 = vpop.f32.mrf.mxu0
    %v3520 = vadd.f32 %v3411, %v3519
    %v3521 = vpop.f32.mrf.mxu0
    %v3522 = vpop.f32.mrf.mxu0
    %v3523 = vadd.f32 %v3411, %v3522
    %v3524 = vpop.f32.mrf.mxu0
    %3525 = vdwg.mxu0
    %v3526 = vxor.u32 %v3496, 2147483648
    %v3527 = vxor.u32 %v3499, 2147483648
    %v3528 = vxor.u32 %v3504, 2147483648
    %v3529 = vxor.u32 %v3507, 2147483648
    %v3530 = vxor.u32 %v3512, 2147483648
    %v3531 = vxor.u32 %v3515, 2147483648
    %v3532 = vxor.u32 %v3520, 2147483648
    %v3533 = vxor.u32 %v3523, 2147483648
    %v3534 = vmul.f32 %v3526, 1.442695
    %v3535 = vpow.pop %v3534
    %v3536 = vmul.f32 %v3527, 1.442695
    %v3537 = vpow.pop %v3536
    %v3538 = vmul.f32 %v3528, 1.442695
    %v3539 = vpow.pop %v3538
    %v3540 = vmul.f32 %v3529, 1.442695
    %v3541 = vpow.pop %v3540
    %v3542 = vmul.f32 %v3530, 1.442695
    %v3543 = vpow.pop %v3542
    %v3544 = vmul.f32 %v3531, 1.442695
    %v3545 = vpow.pop %v3544
    %v3546 = vmul.f32 %v3532, 1.442695
    %v3547 = vpow.pop %v3546
    %v3548 = vmul.f32 %v3533, 1.442695
    %v3549 = vpow.pop %v3548
    %v3550 = vadd.f32 %v3535, 1.0
    %v3551 = vadd.f32 %v3537, 1.0
    %v3552 = vadd.f32 %v3539, 1.0
    %v3553 = vadd.f32 %v3541, 1.0
    %v3554 = vadd.f32 %v3543, 1.0
    %v3555 = vadd.f32 %v3545, 1.0
    %v3556 = vadd.f32 %v3547, 1.0
    %v3557 = vadd.f32 %v3549, 1.0
    %v3558 = vrcp.pop %v3550
    %v3559 = vmul.f32 1.0, %v3558
    %v3560 = vrcp.pop %v3551
    %v3561 = vmul.f32 1.0, %v3560
    %v3562 = vrcp.pop %v3552
    %v3563 = vmul.f32 1.0, %v3562
    %v3564 = vrcp.pop %v3553
    %v3565 = vmul.f32 1.0, %v3564
    %v3566 = vrcp.pop %v3554
    %v3567 = vmul.f32 1.0, %v3566
    %v3568 = vrcp.pop %v3555
    %v3569 = vmul.f32 1.0, %v3568
    %v3570 = vrcp.pop %v3556
    %v3571 = vmul.f32 1.0, %v3570
    %v3572 = vrcp.pop %v3557
    %v3573 = vmul.f32 1.0, %v3572
    %3574 = vst [vmem:[#allocation7] sm:$0xff] %v3559
    %3575 = vst [vmem:[#allocation7 + $0x8] sm:$0xff] %v3561
    %3576 = vst [vmem:[#allocation7 + $0x10] sm:$0xff] %v3563
    %3577 = vst [vmem:[#allocation7 + $0x18] sm:$0xff] %v3565
    %3578 = vst [vmem:[#allocation7 + $0x20] sm:$0xff] %v3567
    %3579 = vst [vmem:[#allocation7 + $0x28] sm:$0xff] %v3569
    %3580 = vst [vmem:[#allocation7 + $0x30] sm:$0xff] %v3571
    %3581 = vst [vmem:[#allocation7 + $0x38] sm:$0xff] %v3573
    // Predicated region
    $region34: #{rnn_forward.1} parent=1 // pred_check
      _
    $region35: #{rnn_forward.1} parent=1 // pred_check_branch
      %3583 = sbr.rel (0) target = $region37
    $region36: #{rnn_forward.1} parent=1 // pred_region
      %s3585 = ssub.s32 1024, 1024
      %3586 = vsyncadd [#allocation5], %s3585
      %s3587 = sshll.u32 [#allocation7], 4
      %s3588 = int_to_ptr.vmem [resolvable:$true] %s3587
      %3593 = dma.vmem_to_hbm [thread:$0]  %s3588, 1024, %s7, [#allocation5], 128, 128, 8
    $region37: #{rnn_forward.1} parent=1 // pred_fallthru
      _
    // Predicated region
    $region38: #{rnn_forward.1} parent=1 // pred_check
      _
    $region39: #{rnn_forward.1} parent=1 // pred_check_branch
      %3595 = sbr.rel (0) target = $region41
    $region40: #{rnn_forward.1} parent=1 // pred_region
      _
    $region41: #{rnn_forward.1} parent=1 // pred_fallthru
      _
    // Predicated region
    $region42: #{rnn_forward.1} parent=1 // pred_check
      _
    $region43: #{rnn_forward.1} parent=1 // pred_check_branch
      %3597 = sbr.rel (0) target = $region45
    $region44: #{rnn_forward.1} parent=1 // pred_region
      _
    $region45: #{rnn_forward.1} parent=1 // pred_fallthru
      _
    // Predicated region
    $region46: #{rnn_forward.1} parent=1 // pred_check
      _
    $region47: #{rnn_forward.1} parent=1 // pred_check_branch
      %3599 = sbr.rel (0) target = $region49
    $region48: #{rnn_forward.1} parent=1 // pred_region
      %3600 = dma.done [#allocation5], 1024
    $region49: #{rnn_forward.1} parent=1 // pred_fallthru
      _
    // Predicated region
    $region50: #{rnn_forward.1} parent=1 // pred_check
      _
    $region51: #{rnn_forward.1} parent=1 // pred_check_branch
      %3602 = sbr.rel (0) target = $region53
    $region52: #{rnn_forward.1} parent=1 // pred_region
      _
    $region53: #{rnn_forward.1} parent=1 // pred_fallthru
      _
    // Predicated region
    $region54: #{rnn_forward.1} parent=1 // pred_check
      _
    $region55: #{rnn_forward.1} parent=1 // pred_check_branch
      %3604 = sbr.rel (0) target = $region57
    $region56: #{rnn_forward.1} parent=1 // pred_region
      _
    $region57: #{rnn_forward.1} parent=1 // pred_fallthru
      _
    %3605 = vsyncpa [#allocation5], 1
    %3606 = vsyncpa [#allocation6], 1

</llo_original>
